<compile_context>
chip_gen: v7x
topology: tpu7x:2x2x1
jax: 0.10.0
libtpu: 0.0.40
codegen_flags: <defaults>
</compile_context>

<pallas_src>
import functools

import numpy as np
import jax
import jax.numpy as jnp
from jax import lax
from jax.experimental import pallas as pl
from jax.experimental.pallas import tpu as pltpu

NEG_INF = -1e9
LN_EPS = 1e-5


# ----------------------------------------------------------------------------
# In-kernel building blocks (plain functions traced inside the Pallas kernel)
# ----------------------------------------------------------------------------
def _layer_norm(y, gamma, beta):
    mu = jnp.mean(y, axis=-1, keepdims=True)
    var = jnp.mean((y - mu) ** 2, axis=-1, keepdims=True)
    return (y - mu) * lax.rsqrt(var + LN_EPS) * gamma + beta


def _mha_block(x_q, x_kv, attn_bias,
               wq, bq, wk, bk, wv, bv, wo, bo, gamma, beta,
               *, n_head, d_k):
    """Multi-head attention + output projection + residual + LayerNorm.

    x_q  : (Lq, D) f32   (also the residual)
    x_kv : (Lk, D) f32
    attn_bias : broadcastable to (H, Lq, Lk) additive mask (0 / -1e9)
    wq/wk/wv/wo : (D, D) bf16 dense weights (wq, bq pre-scaled by 1/sqrt(d_k)).
    """
    H = n_head
    Lq, D = x_q.shape

    xq_b = x_q.astype(jnp.bfloat16)
    xkv_b = x_kv.astype(jnp.bfloat16)

    # Dense, lane-wide projections: (L, D) @ (D, D) feeds the MXU at full
    # output width; no H-fold broadcast of the activation.
    q2 = (jnp.dot(xq_b, wq, preferred_element_type=jnp.float32) + bq).astype(jnp.bfloat16)
    k2 = (jnp.dot(xkv_b, wk, preferred_element_type=jnp.float32) + bk).astype(jnp.bfloat16)
    v2 = (jnp.dot(xkv_b, wv, preferred_element_type=jnp.float32) + bv).astype(jnp.bfloat16)

    # Head split: O(L*D) static slices + leading-axis concat (cheap relative to
    # the O(L*D^2) matmuls; avoids unsupported in-kernel (1,0,2) transposes).
    def split_heads(t):                       # (L, H*d_k) -> (H, L, d_k)
        return jnp.concatenate(
            [t[None, :, h * d_k:(h + 1) * d_k] for h in range(H)], axis=0)

    q = split_heads(q2)
    k = split_heads(k2)
    v = split_heads(v2)

    # Scores: the 1/sqrt(d_k) scale is already folded into wq/bq.
    s = jnp.einsum('hqd,hkd->hqk', q, k,
                   preferred_element_type=jnp.float32) + attn_bias
    s = s - jnp.max(s, axis=-1, keepdims=True)
    p = jnp.exp(s)
    denom = jnp.sum(p, axis=-1, keepdims=True)            # (H, Lq, 1), >= 1

    o = jnp.einsum('hqk,hkd->hqd', p.astype(jnp.bfloat16), v,
                   preferred_element_type=jnp.float32)
    # Normalize AFTER the PV matmul: (H, Lq, d_v) multiplies, not (H, Lq, Lk).
    o = o * pl.reciprocal(denom, approx=True)

    # Merge heads (lane concat) and a single dense output projection.
    o_cat = jnp.concatenate([o[h] for h in range(H)], axis=-1)   # (Lq, D)
    out = jnp.dot(o_cat.astype(jnp.bfloat16), wo,
                  preferred_element_type=jnp.float32) + bo

    return _layer_norm(out + x_q, gamma, beta)


def _ffn_block(x, w1, b1, w2, b2, gamma, beta):
    """Position-wise FFN (Conv1d k=1 == matmul) + residual + LayerNorm."""
    h = jnp.dot(x.astype(jnp.bfloat16), w1,
                preferred_element_type=jnp.float32) + b1
    h = jnp.maximum(h, 0.0)
    y = jnp.dot(h.astype(jnp.bfloat16), w2,
                preferred_element_type=jnp.float32) + b2
    return _layer_norm(y + x, gamma, beta)


# ----------------------------------------------------------------------------
# Fused decoder-stack Pallas kernel: grid = (batch, layer)
# ----------------------------------------------------------------------------
def _decoder_stack_kernel(x_ref, enc_ref, tgt_valid_ref, src_valid_ref, npad_ref,
                          s_wq, s_bq, s_wk, s_bk, s_wv, s_bv, s_wo, s_bo, s_g, s_be,
                          c_wq, c_bq, c_wk, c_bk, c_wv, c_bv, c_wo, c_bo, c_g, c_be,
                          f_w1, f_b1, f_w2, f_b2, f_g, f_be,
                          out_ref, act_ref, *, n_head, d_k):
    layer = pl.program_id(1)
    n_layers = pl.num_programs(1)

    # Read the embedded input from HBM only once (layer 0); the activation
    # stays resident in VMEM scratch across layers.
    @pl.when(layer == 0)
    def _():
        act_ref[...] = x_ref[...]

    x = act_ref[...]                       # (Lt, D)  f32
    enc = enc_ref[...]                     # (Ls, D)  f32
    tgt_valid = tgt_valid_ref[...]         # (1, Lt)  f32 (1.0 where token != 0)
    src_valid = src_valid_ref[...]         # (1, Ls)  f32
    npad = npad_ref[...]                   # (Lt, 1)  f32 non-pad mask

    Lt = x.shape[0]

    # In-kernel mask generation (causal + key-pad) from iota + validity rows.
    row = lax.broadcasted_iota(jnp.int32, (Lt, Lt), 0)
    col = lax.broadcasted_iota(jnp.int32, (Lt, Lt), 1)
    slf_bias = jnp.where(jnp.logical_and(col <= row, tgt_valid > 0.5),
                         0.0, NEG_INF)                  # (Lt, Lt)
    enc_bias = jnp.where(src_valid > 0.5, 0.0, NEG_INF)   # (1, Ls)

    # --- self-attention (x used once for Q and K/V) ---
    h = _mha_block(x, x, slf_bias,
                   s_wq[...], s_bq[...], s_wk[...], s_bk[...], s_wv[...], s_bv[...],
                   s_wo[...], s_bo[...], s_g[...], s_be[...],
                   n_head=n_head, d_k=d_k) * npad
    # --- encoder-decoder attention ---
    h = _mha_block(h, enc, enc_bias,
                   c_wq[...], c_bq[...], c_wk[...], c_bk[...], c_wv[...], c_bv[...],
                   c_wo[...], c_bo[...], c_g[...], c_be[...],
                   n_head=n_head, d_k=d_k) * npad
    # --- position-wise FFN ---
    out = _ffn_block(h, f_w1[...], f_b1[...], f_w2[...], f_b2[...],
                     f_g[...], f_be[...]) * npad

    act_ref[...] = out                      # carry to the next layer

    @pl.when(layer == n_layers - 1)
    def _():
        out_ref[...] = out                  # single HBM write per batch element


def decoder_stack_pallas(x, enc_out, tgt_valid_r, src_valid_r, non_pad,
                         stacked_params, n_head, n_layers):
    B, Lt, D = x.shape
    d_k = D // n_head

    def batched(arr):                 # per-batch activation/mask (batch squeezed)
        nd = arr.ndim
        return pl.BlockSpec((None,) + arr.shape[1:],
                            lambda b, l, _nd=nd: (b,) + (0,) * (_nd - 1))

    def layered(arr):                 # per-layer stacked weight (layer squeezed)
        nd = arr.ndim
        return pl.BlockSpec((None,) + arr.shape[1:],
                            lambda b, l, _nd=nd: (l,) + (0,) * (_nd - 1))

    kernel = functools.partial(_decoder_stack_kernel, n_head=n_head, d_k=d_k)
    return pl.pallas_call(
        kernel,
        out_shape=jax.ShapeDtypeStruct((B, Lt, D), jnp.float32),
        grid=(B, n_layers),
        in_specs=[batched(x), batched(enc_out), batched(tgt_valid_r),
                  batched(src_valid_r), batched(non_pad)]
                 + [layered(p) for p in stacked_params],
        out_specs=pl.BlockSpec((None, Lt, D), lambda b, l: (b, 0, 0)),
        scratch_shapes=[pltpu.VMEM((Lt, D), jnp.float32)],   # resident activation
        compiler_params=pltpu.CompilerParams(
            dimension_semantics=("parallel", "arbitrary")),  # batch across TCs
    )(x, enc_out, tgt_valid_r, src_valid_r, non_pad, *stacked_params)


# ----------------------------------------------------------------------------
# Glue: embeddings, masks, parameter init / preparation (deterministic)
# ----------------------------------------------------------------------------
def get_sinusoid_encoding_table(n_position, d_hid, padding_idx=None):
    def cal_angle(position, hid_idx):
        return position / np.power(10000, 2 * (hid_idx // 2) / d_hid)

    table = np.array([[cal_angle(p, j) for j in range(d_hid)]
                      for p in range(n_position)])
    table[:, 0::2] = np.sin(table[:, 0::2])
    table[:, 1::2] = np.cos(table[:, 1::2])
    if padding_idx is not None:
        table[padding_idx] = 0.0
    return jnp.asarray(table, dtype=jnp.float32)


def init_decoder_params(key, n_vocab, max_len, d_model, n_layers, n_head, d_inner):
    """Synthetic params in PyTorch layout: Linear weights (fan_in, fan_out)."""
    keys = iter(jax.random.split(key, 2 + n_layers * 12))

    emb = 0.1 * jax.random.normal(next(keys), (n_vocab, d_model), jnp.float32)
    emb = emb.at[0].set(0.0)                        # padding_idx=0
    pos = get_sinusoid_encoding_table(max_len + 1, d_model, padding_idx=0)

    def linear(k, fan_in, fan_out):
        w = 0.1 * jax.random.normal(k, (fan_in, fan_out), jnp.float32)
        b = jnp.zeros((1, fan_out), jnp.float32)
        return w, b

    def mha_params():
        wq, bq = linear(next(keys), d_model, d_model)
        wk, bk = linear(next(keys), d_model, d_model)
        wv, bv = linear(next(keys), d_model, d_model)
        wo, bo = linear(next(keys), d_model, d_model)
        g = jnp.ones((1, d_model), jnp.float32)
        beta = jnp.zeros((1, d_model), jnp.float32)
        return (wq, bq, wk, bk, wv, bv, wo, bo, g, beta)

    layers = []
    for _ in range(n_layers):
        slf = mha_params()
        enc = mha_params()
        w1, b1 = linear(next(keys), d_model, d_inner)
        w2, b2 = linear(next(keys), d_inner, d_model)
        ffn = (w1, b1, w2, b2,
               jnp.ones((1, d_model), jnp.float32),
               jnp.zeros((1, d_model), jnp.float32))
        layers.append((slf, enc, ffn))
    return emb, pos, layers


def prepare_stacked_params(layers, n_head):
    """Cast matmul weights to bf16, fold 1/sqrt(d_k) into wq/bq, and stack all
    layers along a leading layer axis (weights keep their dense (D, D) layout)."""
    d_model = layers[0][0][0].shape[0]
    d_k = d_model // n_head
    inv_temp = 1.0 / float(np.sqrt(d_k))

    def prep_mha(p):
        wq, bq, wk, bk, wv, bv, wo, bo, g, beta = p
        return ((wq * inv_temp).astype(jnp.bfloat16), bq * inv_temp,
                wk.astype(jnp.bfloat16), bk,
                wv.astype(jnp.bfloat16), bv,
                wo.astype(jnp.bfloat16), bo, g, beta)

    def prep_ffn(p):
        w1, b1, w2, b2, g, beta = p
        return (w1.astype(jnp.bfloat16), b1, w2.astype(jnp.bfloat16), b2, g, beta)

    per_layer = [tuple(prep_mha(s)) + tuple(prep_mha(e)) + tuple(prep_ffn(f))
                 for (s, e, f) in layers]
    n_params = len(per_layer[0])                    # 26 arrays per layer
    return [jnp.stack([per_layer[l][i] for l in range(len(layers))], axis=0)
            for i in range(n_params)]


def decoder_forward(target_seq, target_pos, source_seq, encoder_output,
                    emb, pos_table, stacked_params, n_head, n_layers):
    # Thin validity vectors; full (B, Lq, Lk) masks are built inside the kernel.
    tgt_valid = (target_seq != 0).astype(jnp.float32)        # (B, Lt)
    src_valid = (source_seq != 0).astype(jnp.float32)        # (B, Ls)
    tgt_valid_r = tgt_valid[:, None, :]                      # (B, 1, Lt) key-pad
    src_valid_r = src_valid[:, None, :]                      # (B, 1, Ls)
    non_pad = tgt_valid[:, :, None]                          # (B, Lt, 1)

    # Embeddings (gather = glue).
    dec_in = emb[target_seq] + pos_table[target_pos]         # (B, Lt, D)

    dec_out = decoder_stack_pallas(dec_in, encoder_output, tgt_valid_r,
                                   src_valid_r, non_pad, stacked_params,
                                   n_head, n_layers)
    return (dec_out,)


# ----------------------------------------------------------------------------
if __name__ == "__main__":
    n_vocab, max_len = 16, 16
    d_word_vec, n_layers, n_head, d_inner = 32, 2, 4, 64
    B, Lt, Ls = 2, 8, 10

    key = jax.random.PRNGKey(0)
    k_tok, k_src, k_enc, k_par = jax.random.split(key, 4)

    # Target tokens with trailing padding (token id 0), positions 1..Lt (0 at pad).
    target_seq = jax.random.randint(k_tok, (B, Lt), 1, n_vocab)
    pad_tail = jnp.arange(Lt)[None, :] >= jnp.array([[Lt], [Lt - 2]])   # 2nd row: 2 pads
    target_seq = jnp.where(pad_tail, 0, target_seq).astype(jnp.int32)
    target_pos = jnp.where(target_seq != 0,
                           jnp.arange(1, Lt + 1)[None, :], 0).astype(jnp.int32)

    source_seq = jax.random.randint(k_src, (B, Ls), 1, n_vocab).astype(jnp.int32)
    encoder_output = jax.random.normal(k_enc, (B, Ls, d_word_vec), jnp.float32)

    emb, pos_table, layers = init_decoder_params(
        k_par, n_vocab, max_len, d_word_vec, n_layers, n_head, d_inner)
    stacked_params = prepare_stacked_params(layers, n_head)

    (dec_output,) = decoder_forward(target_seq, target_pos, source_seq,
                                    encoder_output, emb, pos_table,
                                    stacked_params, n_head, n_layers)
    dec_output = jax.block_until_ready(dec_output)
    assert dec_output.shape == (B, Lt, d_word_vec)
    assert bool(jnp.all(jnp.isfinite(dec_output)))
    print("KERNEL_OK")
</pallas_src>

<mosaic_0001>
module attributes {stable_mosaic.version = 11 : i64} {
  func.func @_decoder_stack_kernel(%arg0: i32, %arg1: i32, %arg2: memref<1x8x32xf32, #tpu.memory_space<vmem>>, %arg3: memref<1x10x32xf32, #tpu.memory_space<vmem>>, %arg4: memref<1x1x8xf32, #tpu.memory_space<vmem>>, %arg5: memref<1x1x10xf32, #tpu.memory_space<vmem>>, %arg6: memref<1x8x1xf32, #tpu.memory_space<vmem>>, %arg7: memref<1x32x32xbf16, #tpu.memory_space<vmem>>, %arg8: memref<1x1x32xf32, #tpu.memory_space<vmem>>, %arg9: memref<1x32x32xbf16, #tpu.memory_space<vmem>>, %arg10: memref<1x1x32xf32, #tpu.memory_space<vmem>>, %arg11: memref<1x32x32xbf16, #tpu.memory_space<vmem>>, %arg12: memref<1x1x32xf32, #tpu.memory_space<vmem>>, %arg13: memref<1x32x32xbf16, #tpu.memory_space<vmem>>, %arg14: memref<1x1x32xf32, #tpu.memory_space<vmem>>, %arg15: memref<1x1x32xf32, #tpu.memory_space<vmem>>, %arg16: memref<1x1x32xf32, #tpu.memory_space<vmem>>, %arg17: memref<1x32x32xbf16, #tpu.memory_space<vmem>>, %arg18: memref<1x1x32xf32, #tpu.memory_space<vmem>>, %arg19: memref<1x32x32xbf16, #tpu.memory_space<vmem>>, %arg20: memref<1x1x32xf32, #tpu.memory_space<vmem>>, %arg21: memref<1x32x32xbf16, #tpu.memory_space<vmem>>, %arg22: memref<1x1x32xf32, #tpu.memory_space<vmem>>, %arg23: memref<1x32x32xbf16, #tpu.memory_space<vmem>>, %arg24: memref<1x1x32xf32, #tpu.memory_space<vmem>>, %arg25: memref<1x1x32xf32, #tpu.memory_space<vmem>>, %arg26: memref<1x1x32xf32, #tpu.memory_space<vmem>>, %arg27: memref<1x32x64xbf16, #tpu.memory_space<vmem>>, %arg28: memref<1x1x64xf32, #tpu.memory_space<vmem>>, %arg29: memref<1x64x32xbf16, #tpu.memory_space<vmem>>, %arg30: memref<1x1x32xf32, #tpu.memory_space<vmem>>, %arg31: memref<1x1x32xf32, #tpu.memory_space<vmem>>, %arg32: memref<1x1x32xf32, #tpu.memory_space<vmem>>, %arg33: memref<1x8x32xf32, #tpu.memory_space<vmem>>, %arg34: memref<8x32xf32, #tpu.memory_space<vmem>>) attributes {dimension_semantics = [#tpu.dimension_semantics<parallel>, #tpu.dimension_semantics<arbitrary>], iteration_bounds = array<i64: 2, 2>, scalar_prefetch = 0 : i64, scratch_operands = 1 : i64, tpu.core_type = #tpu.core_type<tc>, window_params = [{transform_indices = @transform_0, window_bounds = array<i64: 1, 8, 32>}, {transform_indices = @transform_1, window_bounds = array<i64: 1, 10, 32>}, {transform_indices = @transform_2, window_bounds = array<i64: 1, 1, 8>}, {transform_indices = @transform_3, window_bounds = array<i64: 1, 1, 10>}, {transform_indices = @transform_4, window_bounds = array<i64: 1, 8, 1>}, {transform_indices = @transform_5, window_bounds = array<i64: 1, 32, 32>}, {transform_indices = @transform_6, window_bounds = array<i64: 1, 1, 32>}, {transform_indices = @transform_7, window_bounds = array<i64: 1, 32, 32>}, {transform_indices = @transform_8, window_bounds = array<i64: 1, 1, 32>}, {transform_indices = @transform_9, window_bounds = array<i64: 1, 32, 32>}, {transform_indices = @transform_10, window_bounds = array<i64: 1, 1, 32>}, {transform_indices = @transform_11, window_bounds = array<i64: 1, 32, 32>}, {transform_indices = @transform_12, window_bounds = array<i64: 1, 1, 32>}, {transform_indices = @transform_13, window_bounds = array<i64: 1, 1, 32>}, {transform_indices = @transform_14, window_bounds = array<i64: 1, 1, 32>}, {transform_indices = @transform_15, window_bounds = array<i64: 1, 32, 32>}, {transform_indices = @transform_16, window_bounds = array<i64: 1, 1, 32>}, {transform_indices = @transform_17, window_bounds = array<i64: 1, 32, 32>}, {transform_indices = @transform_18, window_bounds = array<i64: 1, 1, 32>}, {transform_indices = @transform_19, window_bounds = array<i64: 1, 32, 32>}, {transform_indices = @transform_20, window_bounds = array<i64: 1, 1, 32>}, {transform_indices = @transform_21, window_bounds = array<i64: 1, 32, 32>}, {transform_indices = @transform_22, window_bounds = array<i64: 1, 1, 32>}, {transform_indices = @transform_23, window_bounds = array<i64: 1, 1, 32>}, {transform_indices = @transform_24, window_bounds = array<i64: 1, 1, 32>}, {transform_indices = @transform_25, window_bounds = array<i64: 1, 32, 64>}, {transform_indices = @transform_26, window_bounds = array<i64: 1, 1, 64>}, {transform_indices = @transform_27, window_bounds = array<i64: 1, 64, 32>}, {transform_indices = @transform_28, window_bounds = array<i64: 1, 1, 32>}, {transform_indices = @transform_29, window_bounds = array<i64: 1, 1, 32>}, {transform_indices = @transform_30, window_bounds = array<i64: 1, 1, 32>}, {transform_indices = @transform_31, window_bounds = array<i64: 1, 8, 32>}]} {
    %c0_i32 = arith.constant 0 : i32
    %0 = arith.cmpi eq, %arg1, %c0_i32 : i32
    %1 = arith.extui %0 : i1 to i32
    %c0_i32_0 = arith.constant 0 : i32
    %2 = arith.cmpi ne, %1, %c0_i32_0 : i32
    scf.if %2 {
      %c0_134 = arith.constant 0 : index
      %c0_135 = arith.constant 0 : index
      %c0_136 = arith.constant 0 : index
      %308 = vector.load %arg2[%c0_134, %c0_135, %c0_136] : memref<1x8x32xf32, #tpu.memory_space<vmem>>, vector<1x8x32xf32>
      %309 = vector.shape_cast %308 : vector<1x8x32xf32> to vector<8x32xf32>
      %c0_137 = arith.constant 0 : index
      %c0_138 = arith.constant 0 : index
      %310 = vector.load %arg34[%c0_137, %c0_138] : memref<8x32xf32, #tpu.memory_space<vmem>>, vector<8x32xf32>
      tpu.vector_store %arg34[%c0_137, %c0_138], %309 {strides = array<i32>} : memref<8x32xf32, #tpu.memory_space<vmem>>, vector<8x32xf32>,
    } else {
    }
    %c0 = arith.constant 0 : index
    %c0_1 = arith.constant 0 : index
    %3 = vector.load %arg34[%c0, %c0_1] : memref<8x32xf32, #tpu.memory_space<vmem>>, vector<8x32xf32>
    %c0_2 = arith.constant 0 : index
    %c0_3 = arith.constant 0 : index
    %c0_4 = arith.constant 0 : index
    %4 = vector.load %arg3[%c0_2, %c0_3, %c0_4] : memref<1x10x32xf32, #tpu.memory_space<vmem>>, vector<1x10x32xf32>
    %5 = vector.shape_cast %4 : vector<1x10x32xf32> to vector<10x32xf32>
    %c0_5 = arith.constant 0 : index
    %c0_6 = arith.constant 0 : index
    %c0_7 = arith.constant 0 : index
    %6 = vector.load %arg4[%c0_5, %c0_6, %c0_7] : memref<1x1x8xf32, #tpu.memory_space<vmem>>, vector<1x1x8xf32>
    %7 = vector.shape_cast %6 : vector<1x1x8xf32> to vector<1x8xf32>
    %c0_8 = arith.constant 0 : index
    %c0_9 = arith.constant 0 : index
    %c0_10 = arith.constant 0 : index
    %8 = vector.load %arg5[%c0_8, %c0_9, %c0_10] : memref<1x1x10xf32, #tpu.memory_space<vmem>>, vector<1x1x10xf32>
    %9 = vector.shape_cast %8 : vector<1x1x10xf32> to vector<1x10xf32>
    %c0_11 = arith.constant 0 : index
    %c0_12 = arith.constant 0 : index
    %c0_13 = arith.constant 0 : index
    %10 = vector.load %arg6[%c0_11, %c0_12, %c0_13] : memref<1x8x1xf32, #tpu.memory_space<vmem>>, vector<1x8x1xf32>
    %11 = vector.shape_cast %10 : vector<1x8x1xf32> to vector<8x1xf32>
    %12 = tpu.iota {dimensions = array<i32: 0>} : vector<8x8xi32>
    %13 = tpu.iota {dimensions = array<i32: 1>} : vector<8x8xi32>
    %14 = arith.cmpi sle, %13, %12 : vector<8x8xi32>
    %cst = arith.constant 5.000000e-01 : f32
    %15 = vector.broadcast %cst : f32 to vector<1x8xf32>
    %16 = arith.cmpf ogt, %7, %15 : vector<1x8xf32>
    %17 = vector.broadcast %16 : vector<1x8xi1> to vector<8x8xi1>
    %18 = arith.andi %14, %17 : vector<8x8xi1>
    %cst_14 = arith.constant 0.000000e+00 : f32
    %cst_15 = arith.constant -1.000000e+09 : f32
    %19 = vector.broadcast %cst_14 : f32 to vector<8x8xf32>
    %20 = vector.broadcast %cst_15 : f32 to vector<8x8xf32>
    %21 = arith.select %18, %19, %20 : vector<8x8xi1>, vector<8x8xf32>
    %cst_16 = arith.constant 5.000000e-01 : f32
    %22 = vector.broadcast %cst_16 : f32 to vector<1x10xf32>
    %23 = arith.cmpf ogt, %9, %22 : vector<1x10xf32>
    %cst_17 = arith.constant 0.000000e+00 : f32
    %cst_18 = arith.constant -1.000000e+09 : f32
    %24 = vector.broadcast %cst_17 : f32 to vector<1x10xf32>
    %25 = vector.broadcast %cst_18 : f32 to vector<1x10xf32>
    %26 = arith.select %23, %24, %25 : vector<1x10xi1>, vector<1x10xf32>
    %c0_19 = arith.constant 0 : index
    %c0_20 = arith.constant 0 : index
    %c0_21 = arith.constant 0 : index
    %27 = vector.load %arg7[%c0_19, %c0_20, %c0_21] : memref<1x32x32xbf16, #tpu.memory_space<vmem>>, vector<1x32x32xbf16>
    %28 = vector.shape_cast %27 : vector<1x32x32xbf16> to vector<32x32xbf16>
    %c0_22 = arith.constant 0 : index
    %c0_23 = arith.constant 0 : index
    %c0_24 = arith.constant 0 : index
    %29 = vector.load %arg8[%c0_22, %c0_23, %c0_24] : memref<1x1x32xf32, #tpu.memory_space<vmem>>, vector<1x1x32xf32>
    %30 = vector.shape_cast %29 : vector<1x1x32xf32> to vector<1x32xf32>
    %c0_25 = arith.constant 0 : index
    %c0_26 = arith.constant 0 : index
    %c0_27 = arith.constant 0 : index
    %31 = vector.load %arg9[%c0_25, %c0_26, %c0_27] : memref<1x32x32xbf16, #tpu.memory_space<vmem>>, vector<1x32x32xbf16>
    %32 = vector.shape_cast %31 : vector<1x32x32xbf16> to vector<32x32xbf16>
    %c0_28 = arith.constant 0 : index
    %c0_29 = arith.constant 0 : index
    %c0_30 = arith.constant 0 : index
    %33 = vector.load %arg10[%c0_28, %c0_29, %c0_30] : memref<1x1x32xf32, #tpu.memory_space<vmem>>, vector<1x1x32xf32>
    %34 = vector.shape_cast %33 : vector<1x1x32xf32> to vector<1x32xf32>
    %c0_31 = arith.constant 0 : index
    %c0_32 = arith.constant 0 : index
    %c0_33 = arith.constant 0 : index
    %35 = vector.load %arg11[%c0_31, %c0_32, %c0_33] : memref<1x32x32xbf16, #tpu.memory_space<vmem>>, vector<1x32x32xbf16>
    %36 = vector.shape_cast %35 : vector<1x32x32xbf16> to vector<32x32xbf16>
    %c0_34 = arith.constant 0 : index
    %c0_35 = arith.constant 0 : index
    %c0_36 = arith.constant 0 : index
    %37 = vector.load %arg12[%c0_34, %c0_35, %c0_36] : memref<1x1x32xf32, #tpu.memory_space<vmem>>, vector<1x1x32xf32>
    %38 = vector.shape_cast %37 : vector<1x1x32xf32> to vector<1x32xf32>
    %c0_37 = arith.constant 0 : index
    %c0_38 = arith.constant 0 : index
    %c0_39 = arith.constant 0 : index
    %39 = vector.load %arg13[%c0_37, %c0_38, %c0_39] : memref<1x32x32xbf16, #tpu.memory_space<vmem>>, vector<1x32x32xbf16>
    %40 = vector.shape_cast %39 : vector<1x32x32xbf16> to vector<32x32xbf16>
    %c0_40 = arith.constant 0 : index
    %c0_41 = arith.constant 0 : index
    %c0_42 = arith.constant 0 : index
    %41 = vector.load %arg14[%c0_40, %c0_41, %c0_42] : memref<1x1x32xf32, #tpu.memory_space<vmem>>, vector<1x1x32xf32>
    %42 = vector.shape_cast %41 : vector<1x1x32xf32> to vector<1x32xf32>
    %c0_43 = arith.constant 0 : index
    %c0_44 = arith.constant 0 : index
    %c0_45 = arith.constant 0 : index
    %43 = vector.load %arg15[%c0_43, %c0_44, %c0_45] : memref<1x1x32xf32, #tpu.memory_space<vmem>>, vector<1x1x32xf32>
    %44 = vector.shape_cast %43 : vector<1x1x32xf32> to vector<1x32xf32>
    %c0_46 = arith.constant 0 : index
    %c0_47 = arith.constant 0 : index
    %c0_48 = arith.constant 0 : index
    %45 = vector.load %arg16[%c0_46, %c0_47, %c0_48] : memref<1x1x32xf32, #tpu.memory_space<vmem>>, vector<1x1x32xf32>
    %46 = vector.shape_cast %45 : vector<1x1x32xf32> to vector<1x32xf32>
    %47 = arith.truncf %3 : vector<8x32xf32> to vector<8x32xbf16>
    %48 = arith.truncf %3 : vector<8x32xf32> to vector<8x32xbf16>
    %cst_49 = arith.constant dense<0.000000e+00> : vector<8x32xf32>
    %49 = tpu.matmul %47, %28, %cst_49 {dimension_numbers = #tpu.dot_dimension_numbers<[1], [0], [0], [1], [0, 0, 1, 1], [], []>} : vector<8x32xbf16>, vector<32x32xbf16>, vector<8x32xf32> -> vector<8x32xf32>
    %50 = vector.broadcast %30 : vector<1x32xf32> to vector<8x32xf32>
    %51 = arith.addf %49, %50 : vector<8x32xf32>
    %52 = arith.truncf %51 : vector<8x32xf32> to vector<8x32xbf16>
    %cst_50 = arith.constant dense<0.000000e+00> : vector<8x32xf32>
    %53 = tpu.matmul %48, %32, %cst_50 {dimension_numbers = #tpu.dot_dimension_numbers<[1], [0], [0], [1], [0, 0, 1, 1], [], []>} : vector<8x32xbf16>, vector<32x32xbf16>, vector<8x32xf32> -> vector<8x32xf32>
    %54 = vector.broadcast %34 : vector<1x32xf32> to vector<8x32xf32>
    %55 = arith.addf %53, %54 : vector<8x32xf32>
    %56 = arith.truncf %55 : vector<8x32xf32> to vector<8x32xbf16>
    %cst_51 = arith.constant dense<0.000000e+00> : vector<8x32xf32>
    %57 = tpu.matmul %48, %36, %cst_51 {dimension_numbers = #tpu.dot_dimension_numbers<[1], [0], [0], [1], [0, 0, 1, 1], [], []>} : vector<8x32xbf16>, vector<32x32xbf16>, vector<8x32xf32> -> vector<8x32xf32>
    %58 = vector.broadcast %38 : vector<1x32xf32> to vector<8x32xf32>
    %59 = arith.addf %57, %58 : vector<8x32xf32>
    %60 = arith.truncf %59 : vector<8x32xf32> to vector<8x32xbf16>
    %61 = vector.extract_strided_slice %52 {offsets = [0, 0], sizes = [8, 8], strides = [1, 1]} : vector<8x32xbf16> to vector<8x8xbf16>
    %62 = vector.shape_cast %61 : vector<8x8xbf16> to vector<1x8x8xbf16>
    %63 = vector.extract_strided_slice %52 {offsets = [0, 8], sizes = [8, 8], strides = [1, 1]} : vector<8x32xbf16> to vector<8x8xbf16>
    %64 = vector.shape_cast %63 : vector<8x8xbf16> to vector<1x8x8xbf16>
    %65 = vector.extract_strided_slice %52 {offsets = [0, 16], sizes = [8, 8], strides = [1, 1]} : vector<8x32xbf16> to vector<8x8xbf16>
    %66 = vector.shape_cast %65 : vector<8x8xbf16> to vector<1x8x8xbf16>
    %67 = vector.extract_strided_slice %52 {offsets = [0, 24], sizes = [8, 8], strides = [1, 1]} : vector<8x32xbf16> to vector<8x8xbf16>
    %68 = vector.shape_cast %67 : vector<8x8xbf16> to vector<1x8x8xbf16>
    %69 = tpu.concatenate %62, %64, %66, %68 in 0 : vector<1x8x8xbf16>, vector<1x8x8xbf16>, vector<1x8x8xbf16>, vector<1x8x8xbf16> -> vector<4x8x8xbf16>
    %70 = vector.extract_strided_slice %56 {offsets = [0, 0], sizes = [8, 8], strides = [1, 1]} : vector<8x32xbf16> to vector<8x8xbf16>
    %71 = vector.shape_cast %70 : vector<8x8xbf16> to vector<1x8x8xbf16>
    %72 = vector.extract_strided_slice %56 {offsets = [0, 8], sizes = [8, 8], strides = [1, 1]} : vector<8x32xbf16> to vector<8x8xbf16>
    %73 = vector.shape_cast %72 : vector<8x8xbf16> to vector<1x8x8xbf16>
    %74 = vector.extract_strided_slice %56 {offsets = [0, 16], sizes = [8, 8], strides = [1, 1]} : vector<8x32xbf16> to vector<8x8xbf16>
    %75 = vector.shape_cast %74 : vector<8x8xbf16> to vector<1x8x8xbf16>
    %76 = vector.extract_strided_slice %56 {offsets = [0, 24], sizes = [8, 8], strides = [1, 1]} : vector<8x32xbf16> to vector<8x8xbf16>
    %77 = vector.shape_cast %76 : vector<8x8xbf16> to vector<1x8x8xbf16>
    %78 = tpu.concatenate %71, %73, %75, %77 in 0 : vector<1x8x8xbf16>, vector<1x8x8xbf16>, vector<1x8x8xbf16>, vector<1x8x8xbf16> -> vector<4x8x8xbf16>
    %79 = vector.extract_strided_slice %60 {offsets = [0, 0], sizes = [8, 8], strides = [1, 1]} : vector<8x32xbf16> to vector<8x8xbf16>
    %80 = vector.shape_cast %79 : vector<8x8xbf16> to vector<1x8x8xbf16>
    %81 = vector.extract_strided_slice %60 {offsets = [0, 8], sizes = [8, 8], strides = [1, 1]} : vector<8x32xbf16> to vector<8x8xbf16>
    %82 = vector.shape_cast %81 : vector<8x8xbf16> to vector<1x8x8xbf16>
    %83 = vector.extract_strided_slice %60 {offsets = [0, 16], sizes = [8, 8], strides = [1, 1]} : vector<8x32xbf16> to vector<8x8xbf16>
    %84 = vector.shape_cast %83 : vector<8x8xbf16> to vector<1x8x8xbf16>
    %85 = vector.extract_strided_slice %60 {offsets = [0, 24], sizes = [8, 8], strides = [1, 1]} : vector<8x32xbf16> to vector<8x8xbf16>
    %86 = vector.shape_cast %85 : vector<8x8xbf16> to vector<1x8x8xbf16>
    %87 = tpu.concatenate %80, %82, %84, %86 in 0 : vector<1x8x8xbf16>, vector<1x8x8xbf16>, vector<1x8x8xbf16>, vector<1x8x8xbf16> -> vector<4x8x8xbf16>
    "tpu.trace_start"() <{level = 10 : i32, message = "hqd,hkd->hqk"}> : () -> ()
    %cst_52 = arith.constant dense<0.000000e+00> : vector<4x8x8xf32>
    %88 = tpu.matmul %69, %78, %cst_52 {dimension_numbers = #tpu.dot_dimension_numbers<[2], [2], [1], [1], [0, 0, 0, 1, 1, 1], [0], [0]>} : vector<4x8x8xbf16>, vector<4x8x8xbf16>, vector<4x8x8xf32> -> vector<4x8x8xf32>
    "tpu.trace_stop"() : () -> ()
    %89 = vector.shape_cast %21 : vector<8x8xf32> to vector<1x8x8xf32>
    %90 = vector.broadcast %89 : vector<1x8x8xf32> to vector<4x8x8xf32>
    %91 = arith.addf %88, %90 : vector<4x8x8xf32>
    %cst_53 = arith.constant dense<0xFF800000> : vector<4x8xf32>
    %92 = vector.multi_reduction <maximumf>, %91, %cst_53 [2] : vector<4x8x8xf32> to vector<4x8xf32>
    %93 = vector.shape_cast %92 : vector<4x8xf32> to vector<4x8x1xf32>
    %94 = vector.broadcast %93 : vector<4x8x1xf32> to vector<4x8x8xf32>
    %95 = arith.subf %91, %94 : vector<4x8x8xf32>
    %96 = math.exp %95 : vector<4x8x8xf32>
    %cst_54 = arith.constant dense<0.000000e+00> : vector<4x8xf32>
    %97 = vector.multi_reduction <add>, %96, %cst_54 [2] : vector<4x8x8xf32> to vector<4x8xf32>
    %98 = vector.shape_cast %97 : vector<4x8xf32> to vector<4x8x1xf32>
    %99 = arith.truncf %96 : vector<4x8x8xf32> to vector<4x8x8xbf16>
    "tpu.trace_start"() <{level = 10 : i32, message = "hqk,hkd->hqd"}> : () -> ()
    %cst_55 = arith.constant dense<0.000000e+00> : vector<4x8x8xf32>
    %100 = tpu.matmul %99, %87, %cst_55 {dimension_numbers = #tpu.dot_dimension_numbers<[2], [1], [1], [2], [0, 0, 0, 1, 1, 2], [0], [0]>} : vector<4x8x8xbf16>, vector<4x8x8xbf16>, vector<4x8x8xf32> -> vector<4x8x8xf32>
    "tpu.trace_stop"() : () -> ()
    %101 = tpu.reciprocal %98 {approx = true} : vector<4x8x1xf32> -> vector<4x8x1xf32>
    %102 = vector.broadcast %101 : vector<4x8x1xf32> to vector<4x8x8xf32>
    %103 = arith.mulf %100, %102 : vector<4x8x8xf32>
    %104 = vector.extract_strided_slice %103 {offsets = [0, 0, 0], sizes = [1, 8, 8], strides = [1, 1, 1]} : vector<4x8x8xf32> to vector<1x8x8xf32>
    %105 = vector.shape_cast %104 : vector<1x8x8xf32> to vector<8x8xf32>
    %106 = vector.extract_strided_slice %103 {offsets = [1, 0, 0], sizes = [1, 8, 8], strides = [1, 1, 1]} : vector<4x8x8xf32> to vector<1x8x8xf32>
    %107 = vector.shape_cast %106 : vector<1x8x8xf32> to vector<8x8xf32>
    %108 = vector.extract_strided_slice %103 {offsets = [2, 0, 0], sizes = [1, 8, 8], strides = [1, 1, 1]} : vector<4x8x8xf32> to vector<1x8x8xf32>
    %109 = vector.shape_cast %108 : vector<1x8x8xf32> to vector<8x8xf32>
    %110 = vector.extract_strided_slice %103 {offsets = [3, 0, 0], sizes = [1, 8, 8], strides = [1, 1, 1]} : vector<4x8x8xf32> to vector<1x8x8xf32>
    %111 = vector.shape_cast %110 : vector<1x8x8xf32> to vector<8x8xf32>
    %112 = tpu.concatenate %105, %107, %109, %111 in 1 : vector<8x8xf32>, vector<8x8xf32>, vector<8x8xf32>, vector<8x8xf32> -> vector<8x32xf32>
    %113 = arith.truncf %112 : vector<8x32xf32> to vector<8x32xbf16>
    %cst_56 = arith.constant dense<0.000000e+00> : vector<8x32xf32>
    %114 = tpu.matmul %113, %40, %cst_56 {dimension_numbers = #tpu.dot_dimension_numbers<[1], [0], [0], [1], [0, 0, 1, 1], [], []>} : vector<8x32xbf16>, vector<32x32xbf16>, vector<8x32xf32> -> vector<8x32xf32>
    %115 = vector.broadcast %42 : vector<1x32xf32> to vector<8x32xf32>
    %116 = arith.addf %114, %115 : vector<8x32xf32>
    %117 = arith.addf %116, %3 : vector<8x32xf32>
    %cst_57 = arith.constant dense<0.000000e+00> : vector<8xf32>
    %118 = vector.multi_reduction <add>, %117, %cst_57 [1] : vector<8x32xf32> to vector<8xf32>
    %119 = vector.shape_cast %118 : vector<8xf32> to vector<8x1xf32>
    %cst_58 = arith.constant 3.200000e+01 : f32
    %120 = vector.broadcast %cst_58 : f32 to vector<8x1xf32>
    %121 = arith.divf %119, %120 : vector<8x1xf32>
    %122 = vector.broadcast %121 : vector<8x1xf32> to vector<8x32xf32>
    %123 = arith.subf %117, %122 : vector<8x32xf32>
    %124 = arith.mulf %123, %123 : vector<8x32xf32>
    %cst_59 = arith.constant dense<0.000000e+00> : vector<8xf32>
    %125 = vector.multi_reduction <add>, %124, %cst_59 [1] : vector<8x32xf32> to vector<8xf32>
    %126 = vector.shape_cast %125 : vector<8xf32> to vector<8x1xf32>
    %cst_60 = arith.constant 3.200000e+01 : f32
    %127 = vector.broadcast %cst_60 : f32 to vector<8x1xf32>
    %128 = arith.divf %126, %127 : vector<8x1xf32>
    %129 = vector.broadcast %121 : vector<8x1xf32> to vector<8x32xf32>
    %130 = arith.subf %117, %129 : vector<8x32xf32>
    %cst_61 = arith.constant 9.99999974E-6 : f32
    %131 = vector.broadcast %cst_61 : f32 to vector<8x1xf32>
    %132 = arith.addf %128, %131 : vector<8x1xf32>
    %133 = math.rsqrt %132 : vector<8x1xf32>
    %134 = vector.broadcast %133 : vector<8x1xf32> to vector<8x32xf32>
    %135 = arith.mulf %130, %134 : vector<8x32xf32>
    %136 = vector.broadcast %44 : vector<1x32xf32> to vector<8x32xf32>
    %137 = arith.mulf %135, %136 : vector<8x32xf32>
    %138 = vector.broadcast %46 : vector<1x32xf32> to vector<8x32xf32>
    %139 = arith.addf %137, %138 : vector<8x32xf32>
    %140 = vector.broadcast %11 : vector<8x1xf32> to vector<8x32xf32>
    %141 = arith.mulf %139, %140 : vector<8x32xf32>
    %c0_62 = arith.constant 0 : index
    %c0_63 = arith.constant 0 : index
    %c0_64 = arith.constant 0 : index
    %142 = vector.load %arg17[%c0_62, %c0_63, %c0_64] : memref<1x32x32xbf16, #tpu.memory_space<vmem>>, vector<1x32x32xbf16>
    %143 = vector.shape_cast %142 : vector<1x32x32xbf16> to vector<32x32xbf16>
    %c0_65 = arith.constant 0 : index
    %c0_66 = arith.constant 0 : index
    %c0_67 = arith.constant 0 : index
    %144 = vector.load %arg18[%c0_65, %c0_66, %c0_67] : memref<1x1x32xf32, #tpu.memory_space<vmem>>, vector<1x1x32xf32>
    %145 = vector.shape_cast %144 : vector<1x1x32xf32> to vector<1x32xf32>
    %c0_68 = arith.constant 0 : index
    %c0_69 = arith.constant 0 : index
    %c0_70 = arith.constant 0 : index
    %146 = vector.load %arg19[%c0_68, %c0_69, %c0_70] : memref<1x32x32xbf16, #tpu.memory_space<vmem>>, vector<1x32x32xbf16>
    %147 = vector.shape_cast %146 : vector<1x32x32xbf16> to vector<32x32xbf16>
    %c0_71 = arith.constant 0 : index
    %c0_72 = arith.constant 0 : index
    %c0_73 = arith.constant 0 : index
    %148 = vector.load %arg20[%c0_71, %c0_72, %c0_73] : memref<1x1x32xf32, #tpu.memory_space<vmem>>, vector<1x1x32xf32>
    %149 = vector.shape_cast %148 : vector<1x1x32xf32> to vector<1x32xf32>
    %c0_74 = arith.constant 0 : index
    %c0_75 = arith.constant 0 : index
    %c0_76 = arith.constant 0 : index
    %150 = vector.load %arg21[%c0_74, %c0_75, %c0_76] : memref<1x32x32xbf16, #tpu.memory_space<vmem>>, vector<1x32x32xbf16>
    %151 = vector.shape_cast %150 : vector<1x32x32xbf16> to vector<32x32xbf16>
    %c0_77 = arith.constant 0 : index
    %c0_78 = arith.constant 0 : index
    %c0_79 = arith.constant 0 : index
    %152 = vector.load %arg22[%c0_77, %c0_78, %c0_79] : memref<1x1x32xf32, #tpu.memory_space<vmem>>, vector<1x1x32xf32>
    %153 = vector.shape_cast %152 : vector<1x1x32xf32> to vector<1x32xf32>
    %c0_80 = arith.constant 0 : index
    %c0_81 = arith.constant 0 : index
    %c0_82 = arith.constant 0 : index
    %154 = vector.load %arg23[%c0_80, %c0_81, %c0_82] : memref<1x32x32xbf16, #tpu.memory_space<vmem>>, vector<1x32x32xbf16>
    %155 = vector.shape_cast %154 : vector<1x32x32xbf16> to vector<32x32xbf16>
    %c0_83 = arith.constant 0 : index
    %c0_84 = arith.constant 0 : index
    %c0_85 = arith.constant 0 : index
    %156 = vector.load %arg24[%c0_83, %c0_84, %c0_85] : memref<1x1x32xf32, #tpu.memory_space<vmem>>, vector<1x1x32xf32>
    %157 = vector.shape_cast %156 : vector<1x1x32xf32> to vector<1x32xf32>
    %c0_86 = arith.constant 0 : index
    %c0_87 = arith.constant 0 : index
    %c0_88 = arith.constant 0 : index
    %158 = vector.load %arg25[%c0_86, %c0_87, %c0_88] : memref<1x1x32xf32, #tpu.memory_space<vmem>>, vector<1x1x32xf32>
    %159 = vector.shape_cast %158 : vector<1x1x32xf32> to vector<1x32xf32>
    %c0_89 = arith.constant 0 : index
    %c0_90 = arith.constant 0 : index
    %c0_91 = arith.constant 0 : index
    %160 = vector.load %arg26[%c0_89, %c0_90, %c0_91] : memref<1x1x32xf32, #tpu.memory_space<vmem>>, vector<1x1x32xf32>
    %161 = vector.shape_cast %160 : vector<1x1x32xf32> to vector<1x32xf32>
    %162 = arith.truncf %141 : vector<8x32xf32> to vector<8x32xbf16>
    %163 = arith.truncf %5 : vector<10x32xf32> to vector<10x32xbf16>
    %cst_92 = arith.constant dense<0.000000e+00> : vector<8x32xf32>
    %164 = tpu.matmul %162, %143, %cst_92 {dimension_numbers = #tpu.dot_dimension_numbers<[1], [0], [0], [1], [0, 0, 1, 1], [], []>} : vector<8x32xbf16>, vector<32x32xbf16>, vector<8x32xf32> -> vector<8x32xf32>
    %165 = vector.broadcast %145 : vector<1x32xf32> to vector<8x32xf32>
    %166 = arith.addf %164, %165 : vector<8x32xf32>
    %167 = arith.truncf %166 : vector<8x32xf32> to vector<8x32xbf16>
    %cst_93 = arith.constant dense<0.000000e+00> : vector<10x32xf32>
    %168 = tpu.matmul %163, %147, %cst_93 {dimension_numbers = #tpu.dot_dimension_numbers<[1], [0], [0], [1], [0, 0, 1, 1], [], []>} : vector<10x32xbf16>, vector<32x32xbf16>, vector<10x32xf32> -> vector<10x32xf32>
    %169 = vector.broadcast %149 : vector<1x32xf32> to vector<10x32xf32>
    %170 = arith.addf %168, %169 : vector<10x32xf32>
    %171 = arith.truncf %170 : vector<10x32xf32> to vector<10x32xbf16>
    %cst_94 = arith.constant dense<0.000000e+00> : vector<10x32xf32>
    %172 = tpu.matmul %163, %151, %cst_94 {dimension_numbers = #tpu.dot_dimension_numbers<[1], [0], [0], [1], [0, 0, 1, 1], [], []>} : vector<10x32xbf16>, vector<32x32xbf16>, vector<10x32xf32> -> vector<10x32xf32>
    %173 = vector.broadcast %153 : vector<1x32xf32> to vector<10x32xf32>
    %174 = arith.addf %172, %173 : vector<10x32xf32>
    %175 = arith.truncf %174 : vector<10x32xf32> to vector<10x32xbf16>
    %176 = vector.extract_strided_slice %167 {offsets = [0, 0], sizes = [8, 8], strides = [1, 1]} : vector<8x32xbf16> to vector<8x8xbf16>
    %177 = vector.shape_cast %176 : vector<8x8xbf16> to vector<1x8x8xbf16>
    %178 = vector.extract_strided_slice %167 {offsets = [0, 8], sizes = [8, 8], strides = [1, 1]} : vector<8x32xbf16> to vector<8x8xbf16>
    %179 = vector.shape_cast %178 : vector<8x8xbf16> to vector<1x8x8xbf16>
    %180 = vector.extract_strided_slice %167 {offsets = [0, 16], sizes = [8, 8], strides = [1, 1]} : vector<8x32xbf16> to vector<8x8xbf16>
    %181 = vector.shape_cast %180 : vector<8x8xbf16> to vector<1x8x8xbf16>
    %182 = vector.extract_strided_slice %167 {offsets = [0, 24], sizes = [8, 8], strides = [1, 1]} : vector<8x32xbf16> to vector<8x8xbf16>
    %183 = vector.shape_cast %182 : vector<8x8xbf16> to vector<1x8x8xbf16>
    %184 = tpu.concatenate %177, %179, %181, %183 in 0 : vector<1x8x8xbf16>, vector<1x8x8xbf16>, vector<1x8x8xbf16>, vector<1x8x8xbf16> -> vector<4x8x8xbf16>
    %185 = vector.extract_strided_slice %171 {offsets = [0, 0], sizes = [10, 8], strides = [1, 1]} : vector<10x32xbf16> to vector<10x8xbf16>
    %186 = vector.shape_cast %185 : vector<10x8xbf16> to vector<1x10x8xbf16>
    %187 = vector.extract_strided_slice %171 {offsets = [0, 8], sizes = [10, 8], strides = [1, 1]} : vector<10x32xbf16> to vector<10x8xbf16>
    %188 = vector.shape_cast %187 : vector<10x8xbf16> to vector<1x10x8xbf16>
    %189 = vector.extract_strided_slice %171 {offsets = [0, 16], sizes = [10, 8], strides = [1, 1]} : vector<10x32xbf16> to vector<10x8xbf16>
    %190 = vector.shape_cast %189 : vector<10x8xbf16> to vector<1x10x8xbf16>
    %191 = vector.extract_strided_slice %171 {offsets = [0, 24], sizes = [10, 8], strides = [1, 1]} : vector<10x32xbf16> to vector<10x8xbf16>
    %192 = vector.shape_cast %191 : vector<10x8xbf16> to vector<1x10x8xbf16>
    %193 = tpu.concatenate %186, %188, %190, %192 in 0 : vector<1x10x8xbf16>, vector<1x10x8xbf16>, vector<1x10x8xbf16>, vector<1x10x8xbf16> -> vector<4x10x8xbf16>
    %194 = vector.extract_strided_slice %175 {offsets = [0, 0], sizes = [10, 8], strides = [1, 1]} : vector<10x32xbf16> to vector<10x8xbf16>
    %195 = vector.shape_cast %194 : vector<10x8xbf16> to vector<1x10x8xbf16>
    %196 = vector.extract_strided_slice %175 {offsets = [0, 8], sizes = [10, 8], strides = [1, 1]} : vector<10x32xbf16> to vector<10x8xbf16>
    %197 = vector.shape_cast %196 : vector<10x8xbf16> to vector<1x10x8xbf16>
    %198 = vector.extract_strided_slice %175 {offsets = [0, 16], sizes = [10, 8], strides = [1, 1]} : vector<10x32xbf16> to vector<10x8xbf16>
    %199 = vector.shape_cast %198 : vector<10x8xbf16> to vector<1x10x8xbf16>
    %200 = vector.extract_strided_slice %175 {offsets = [0, 24], sizes = [10, 8], strides = [1, 1]} : vector<10x32xbf16> to vector<10x8xbf16>
    %201 = vector.shape_cast %200 : vector<10x8xbf16> to vector<1x10x8xbf16>
    %202 = tpu.concatenate %195, %197, %199, %201 in 0 : vector<1x10x8xbf16>, vector<1x10x8xbf16>, vector<1x10x8xbf16>, vector<1x10x8xbf16> -> vector<4x10x8xbf16>
    "tpu.trace_start"() <{level = 10 : i32, message = "hqd,hkd->hqk"}> : () -> ()
    %cst_95 = arith.constant dense<0.000000e+00> : vector<4x8x10xf32>
    %203 = tpu.matmul %184, %193, %cst_95 {dimension_numbers = #tpu.dot_dimension_numbers<[2], [2], [1], [1], [0, 0, 0, 1, 1, 1], [0], [0]>} : vector<4x8x8xbf16>, vector<4x10x8xbf16>, vector<4x8x10xf32> -> vector<4x8x10xf32>
    "tpu.trace_stop"() : () -> ()
    %204 = vector.shape_cast %26 : vector<1x10xf32> to vector<1x1x10xf32>
    %205 = vector.broadcast %204 : vector<1x1x10xf32> to vector<4x8x10xf32>
    %206 = arith.addf %203, %205 : vector<4x8x10xf32>
    %cst_96 = arith.constant dense<0xFF800000> : vector<4x8xf32>
    %207 = vector.multi_reduction <maximumf>, %206, %cst_96 [2] : vector<4x8x10xf32> to vector<4x8xf32>
    %208 = vector.shape_cast %207 : vector<4x8xf32> to vector<4x8x1xf32>
    %209 = vector.broadcast %208 : vector<4x8x1xf32> to vector<4x8x10xf32>
    %210 = arith.subf %206, %209 : vector<4x8x10xf32>
    %211 = math.exp %210 : vector<4x8x10xf32>
    %cst_97 = arith.constant dense<0.000000e+00> : vector<4x8xf32>
    %212 = vector.multi_reduction <add>, %211, %cst_97 [2] : vector<4x8x10xf32> to vector<4x8xf32>
    %213 = vector.shape_cast %212 : vector<4x8xf32> to vector<4x8x1xf32>
    %214 = arith.truncf %211 : vector<4x8x10xf32> to vector<4x8x10xbf16>
    "tpu.trace_start"() <{level = 10 : i32, message = "hqk,hkd->hqd"}> : () -> ()
    %cst_98 = arith.constant dense<0.000000e+00> : vector<4x8x8xf32>
    %215 = tpu.matmul %214, %202, %cst_98 {dimension_numbers = #tpu.dot_dimension_numbers<[2], [1], [1], [2], [0, 0, 0, 1, 1, 2], [0], [0]>} : vector<4x8x10xbf16>, vector<4x10x8xbf16>, vector<4x8x8xf32> -> vector<4x8x8xf32>
    "tpu.trace_stop"() : () -> ()
    %216 = tpu.reciprocal %213 {approx = true} : vector<4x8x1xf32> -> vector<4x8x1xf32>
    %217 = vector.broadcast %216 : vector<4x8x1xf32> to vector<4x8x8xf32>
    %218 = arith.mulf %215, %217 : vector<4x8x8xf32>
    %219 = vector.extract_strided_slice %218 {offsets = [0, 0, 0], sizes = [1, 8, 8], strides = [1, 1, 1]} : vector<4x8x8xf32> to vector<1x8x8xf32>
    %220 = vector.shape_cast %219 : vector<1x8x8xf32> to vector<8x8xf32>
    %221 = vector.extract_strided_slice %218 {offsets = [1, 0, 0], sizes = [1, 8, 8], strides = [1, 1, 1]} : vector<4x8x8xf32> to vector<1x8x8xf32>
    %222 = vector.shape_cast %221 : vector<1x8x8xf32> to vector<8x8xf32>
    %223 = vector.extract_strided_slice %218 {offsets = [2, 0, 0], sizes = [1, 8, 8], strides = [1, 1, 1]} : vector<4x8x8xf32> to vector<1x8x8xf32>
    %224 = vector.shape_cast %223 : vector<1x8x8xf32> to vector<8x8xf32>
    %225 = vector.extract_strided_slice %218 {offsets = [3, 0, 0], sizes = [1, 8, 8], strides = [1, 1, 1]} : vector<4x8x8xf32> to vector<1x8x8xf32>
    %226 = vector.shape_cast %225 : vector<1x8x8xf32> to vector<8x8xf32>
    %227 = tpu.concatenate %220, %222, %224, %226 in 1 : vector<8x8xf32>, vector<8x8xf32>, vector<8x8xf32>, vector<8x8xf32> -> vector<8x32xf32>
    %228 = arith.truncf %227 : vector<8x32xf32> to vector<8x32xbf16>
    %cst_99 = arith.constant dense<0.000000e+00> : vector<8x32xf32>
    %229 = tpu.matmul %228, %155, %cst_99 {dimension_numbers = #tpu.dot_dimension_numbers<[1], [0], [0], [1], [0, 0, 1, 1], [], []>} : vector<8x32xbf16>, vector<32x32xbf16>, vector<8x32xf32> -> vector<8x32xf32>
    %230 = vector.broadcast %157 : vector<1x32xf32> to vector<8x32xf32>
    %231 = arith.addf %229, %230 : vector<8x32xf32>
    %232 = arith.addf %231, %141 : vector<8x32xf32>
    %cst_100 = arith.constant dense<0.000000e+00> : vector<8xf32>
    %233 = vector.multi_reduction <add>, %232, %cst_100 [1] : vector<8x32xf32> to vector<8xf32>
    %234 = vector.shape_cast %233 : vector<8xf32> to vector<8x1xf32>
    %cst_101 = arith.constant 3.200000e+01 : f32
    %235 = vector.broadcast %cst_101 : f32 to vector<8x1xf32>
    %236 = arith.divf %234, %235 : vector<8x1xf32>
    %237 = vector.broadcast %236 : vector<8x1xf32> to vector<8x32xf32>
    %238 = arith.subf %232, %237 : vector<8x32xf32>
    %239 = arith.mulf %238, %238 : vector<8x32xf32>
    %cst_102 = arith.constant dense<0.000000e+00> : vector<8xf32>
    %240 = vector.multi_reduction <add>, %239, %cst_102 [1] : vector<8x32xf32> to vector<8xf32>
    %241 = vector.shape_cast %240 : vector<8xf32> to vector<8x1xf32>
    %cst_103 = arith.constant 3.200000e+01 : f32
    %242 = vector.broadcast %cst_103 : f32 to vector<8x1xf32>
    %243 = arith.divf %241, %242 : vector<8x1xf32>
    %244 = vector.broadcast %236 : vector<8x1xf32> to vector<8x32xf32>
    %245 = arith.subf %232, %244 : vector<8x32xf32>
    %cst_104 = arith.constant 9.99999974E-6 : f32
    %246 = vector.broadcast %cst_104 : f32 to vector<8x1xf32>
    %247 = arith.addf %243, %246 : vector<8x1xf32>
    %248 = math.rsqrt %247 : vector<8x1xf32>
    %249 = vector.broadcast %248 : vector<8x1xf32> to vector<8x32xf32>
    %250 = arith.mulf %245, %249 : vector<8x32xf32>
    %251 = vector.broadcast %159 : vector<1x32xf32> to vector<8x32xf32>
    %252 = arith.mulf %250, %251 : vector<8x32xf32>
    %253 = vector.broadcast %161 : vector<1x32xf32> to vector<8x32xf32>
    %254 = arith.addf %252, %253 : vector<8x32xf32>
    %255 = vector.broadcast %11 : vector<8x1xf32> to vector<8x32xf32>
    %256 = arith.mulf %254, %255 : vector<8x32xf32>
    %c0_105 = arith.constant 0 : index
    %c0_106 = arith.constant 0 : index
    %c0_107 = arith.constant 0 : index
    %257 = vector.load %arg27[%c0_105, %c0_106, %c0_107] : memref<1x32x64xbf16, #tpu.memory_space<vmem>>, vector<1x32x64xbf16>
    %258 = vector.shape_cast %257 : vector<1x32x64xbf16> to vector<32x64xbf16>
    %c0_108 = arith.constant 0 : index
    %c0_109 = arith.constant 0 : index
    %c0_110 = arith.constant 0 : index
    %259 = vector.load %arg28[%c0_108, %c0_109, %c0_110] : memref<1x1x64xf32, #tpu.memory_space<vmem>>, vector<1x1x64xf32>
    %260 = vector.shape_cast %259 : vector<1x1x64xf32> to vector<1x64xf32>
    %c0_111 = arith.constant 0 : index
    %c0_112 = arith.constant 0 : index
    %c0_113 = arith.constant 0 : index
    %261 = vector.load %arg29[%c0_111, %c0_112, %c0_113] : memref<1x64x32xbf16, #tpu.memory_space<vmem>>, vector<1x64x32xbf16>
    %262 = vector.shape_cast %261 : vector<1x64x32xbf16> to vector<64x32xbf16>
    %c0_114 = arith.constant 0 : index
    %c0_115 = arith.constant 0 : index
    %c0_116 = arith.constant 0 : index
    %263 = vector.load %arg30[%c0_114, %c0_115, %c0_116] : memref<1x1x32xf32, #tpu.memory_space<vmem>>, vector<1x1x32xf32>
    %264 = vector.shape_cast %263 : vector<1x1x32xf32> to vector<1x32xf32>
    %c0_117 = arith.constant 0 : index
    %c0_118 = arith.constant 0 : index
    %c0_119 = arith.constant 0 : index
    %265 = vector.load %arg31[%c0_117, %c0_118, %c0_119] : memref<1x1x32xf32, #tpu.memory_space<vmem>>, vector<1x1x32xf32>
    %266 = vector.shape_cast %265 : vector<1x1x32xf32> to vector<1x32xf32>
    %c0_120 = arith.constant 0 : index
    %c0_121 = arith.constant 0 : index
    %c0_122 = arith.constant 0 : index
    %267 = vector.load %arg32[%c0_120, %c0_121, %c0_122] : memref<1x1x32xf32, #tpu.memory_space<vmem>>, vector<1x1x32xf32>
    %268 = vector.shape_cast %267 : vector<1x1x32xf32> to vector<1x32xf32>
    %269 = arith.truncf %256 : vector<8x32xf32> to vector<8x32xbf16>
    %cst_123 = arith.constant dense<0.000000e+00> : vector<8x64xf32>
    %270 = tpu.matmul %269, %258, %cst_123 {dimension_numbers = #tpu.dot_dimension_numbers<[1], [0], [0], [1], [0, 0, 1, 1], [], []>} : vector<8x32xbf16>, vector<32x64xbf16>, vector<8x64xf32> -> vector<8x64xf32>
    %271 = vector.broadcast %260 : vector<1x64xf32> to vector<8x64xf32>
    %272 = arith.addf %270, %271 : vector<8x64xf32>
    %cst_124 = arith.constant 0.000000e+00 : f32
    %273 = vector.broadcast %cst_124 : f32 to vector<8x64xf32>
    %274 = arith.maximumf %272, %273 : vector<8x64xf32>
    %275 = arith.truncf %274 : vector<8x64xf32> to vector<8x64xbf16>
    %cst_125 = arith.constant dense<0.000000e+00> : vector<8x32xf32>
    %276 = tpu.matmul %275, %262, %cst_125 {dimension_numbers = #tpu.dot_dimension_numbers<[1], [0], [0], [1], [0, 0, 1, 1], [], []>} : vector<8x64xbf16>, vector<64x32xbf16>, vector<8x32xf32> -> vector<8x32xf32>
    %277 = vector.broadcast %264 : vector<1x32xf32> to vector<8x32xf32>
    %278 = arith.addf %276, %277 : vector<8x32xf32>
    %279 = arith.addf %278, %256 : vector<8x32xf32>
    %cst_126 = arith.constant dense<0.000000e+00> : vector<8xf32>
    %280 = vector.multi_reduction <add>, %279, %cst_126 [1] : vector<8x32xf32> to vector<8xf32>
    %281 = vector.shape_cast %280 : vector<8xf32> to vector<8x1xf32>
    %cst_127 = arith.constant 3.200000e+01 : f32
    %282 = vector.broadcast %cst_127 : f32 to vector<8x1xf32>
    %283 = arith.divf %281, %282 : vector<8x1xf32>
    %284 = vector.broadcast %283 : vector<8x1xf32> to vector<8x32xf32>
    %285 = arith.subf %279, %284 : vector<8x32xf32>
    %286 = arith.mulf %285, %285 : vector<8x32xf32>
    %cst_128 = arith.constant dense<0.000000e+00> : vector<8xf32>
    %287 = vector.multi_reduction <add>, %286, %cst_128 [1] : vector<8x32xf32> to vector<8xf32>
    %288 = vector.shape_cast %287 : vector<8xf32> to vector<8x1xf32>
    %cst_129 = arith.constant 3.200000e+01 : f32
    %289 = vector.broadcast %cst_129 : f32 to vector<8x1xf32>
    %290 = arith.divf %288, %289 : vector<8x1xf32>
    %291 = vector.broadcast %283 : vector<8x1xf32> to vector<8x32xf32>
    %292 = arith.subf %279, %291 : vector<8x32xf32>
    %cst_130 = arith.constant 9.99999974E-6 : f32
    %293 = vector.broadcast %cst_130 : f32 to vector<8x1xf32>
    %294 = arith.addf %290, %293 : vector<8x1xf32>
    %295 = math.rsqrt %294 : vector<8x1xf32>
    %296 = vector.broadcast %295 : vector<8x1xf32> to vector<8x32xf32>
    %297 = arith.mulf %292, %296 : vector<8x32xf32>
    %298 = vector.broadcast %266 : vector<1x32xf32> to vector<8x32xf32>
    %299 = arith.mulf %297, %298 : vector<8x32xf32>
    %300 = vector.broadcast %268 : vector<1x32xf32> to vector<8x32xf32>
    %301 = arith.addf %299, %300 : vector<8x32xf32>
    %302 = vector.broadcast %11 : vector<8x1xf32> to vector<8x32xf32>
    %303 = arith.mulf %301, %302 : vector<8x32xf32>
    %c0_131 = arith.constant 0 : index
    %c0_132 = arith.constant 0 : index
    %304 = vector.load %arg34[%c0_131, %c0_132] : memref<8x32xf32, #tpu.memory_space<vmem>>, vector<8x32xf32>
    tpu.vector_store %arg34[%c0_131, %c0_132], %303 {strides = array<i32>} : memref<8x32xf32, #tpu.memory_space<vmem>>, vector<8x32xf32>,
    %c1_i32 = arith.constant 1 : i32
    %305 = arith.cmpi eq, %arg1, %c1_i32 : i32
    %306 = arith.extui %305 : i1 to i32
    %c0_i32_133 = arith.constant 0 : i32
    %307 = arith.cmpi ne, %306, %c0_i32_133 : i32
    scf.if %307 {
      %c0_134 = arith.constant 0 : index
      %c0_135 = arith.constant 0 : index
      %c0_136 = arith.constant 0 : index
      %308 = vector.load %arg33[%c0_134, %c0_135, %c0_136] : memref<1x8x32xf32, #tpu.memory_space<vmem>>, vector<1x8x32xf32>
      %309 = vector.shape_cast %308 : vector<1x8x32xf32> to vector<8x32xf32>
      %310 = vector.shape_cast %303 : vector<8x32xf32> to vector<1x8x32xf32>
      tpu.vector_store %arg33[%c0_134, %c0_135, %c0_136], %310 {strides = array<i32>} : memref<1x8x32xf32, #tpu.memory_space<vmem>>, vector<1x8x32xf32>,
    } else {
    }
    return
  }
  func.func @transform_0(%arg0: i32, %arg1: i32) -> (i32, i32, i32) {
    %c0_i32 = arith.constant 0 : i32
    %c0_i32_0 = arith.constant 0 : i32
    %c0_i32_1 = arith.constant 0 : i32
    return %arg0, %c0_i32, %c0_i32_0 : i32, i32, i32
  }
  func.func @transform_1(%arg0: i32, %arg1: i32) -> (i32, i32, i32) {
    %c0_i32 = arith.constant 0 : i32
    %c0_i32_0 = arith.constant 0 : i32
    %c0_i32_1 = arith.constant 0 : i32
    return %arg0, %c0_i32, %c0_i32_0 : i32, i32, i32
  }
  func.func @transform_2(%arg0: i32, %arg1: i32) -> (i32, i32, i32) {
    %c0_i32 = arith.constant 0 : i32
    %c0_i32_0 = arith.constant 0 : i32
    %c0_i32_1 = arith.constant 0 : i32
    return %arg0, %c0_i32, %c0_i32_0 : i32, i32, i32
  }
  func.func @transform_3(%arg0: i32, %arg1: i32) -> (i32, i32, i32) {
    %c0_i32 = arith.constant 0 : i32
    %c0_i32_0 = arith.constant 0 : i32
    %c0_i32_1 = arith.constant 0 : i32
    return %arg0, %c0_i32, %c0_i32_0 : i32, i32, i32
  }
  func.func @transform_4(%arg0: i32, %arg1: i32) -> (i32, i32, i32) {
    %c0_i32 = arith.constant 0 : i32
    %c0_i32_0 = arith.constant 0 : i32
    %c0_i32_1 = arith.constant 0 : i32
    return %arg0, %c0_i32, %c0_i32_0 : i32, i32, i32
  }
  func.func @transform_5(%arg0: i32, %arg1: i32) -> (i32, i32, i32) {
    %c0_i32 = arith.constant 0 : i32
    %c0_i32_0 = arith.constant 0 : i32
    %c0_i32_1 = arith.constant 0 : i32
    return %arg1, %c0_i32, %c0_i32_0 : i32, i32, i32
  }
  func.func @transform_6(%arg0: i32, %arg1: i32) -> (i32, i32, i32) {
    %c0_i32 = arith.constant 0 : i32
    %c0_i32_0 = arith.constant 0 : i32
    %c0_i32_1 = arith.constant 0 : i32
    return %arg1, %c0_i32, %c0_i32_0 : i32, i32, i32
  }
  func.func @transform_7(%arg0: i32, %arg1: i32) -> (i32, i32, i32) {
    %c0_i32 = arith.constant 0 : i32
    %c0_i32_0 = arith.constant 0 : i32
    %c0_i32_1 = arith.constant 0 : i32
    return %arg1, %c0_i32, %c0_i32_0 : i32, i32, i32
  }
  func.func @transform_8(%arg0: i32, %arg1: i32) -> (i32, i32, i32) {
    %c0_i32 = arith.constant 0 : i32
    %c0_i32_0 = arith.constant 0 : i32
    %c0_i32_1 = arith.constant 0 : i32
    return %arg1, %c0_i32, %c0_i32_0 : i32, i32, i32
  }
  func.func @transform_9(%arg0: i32, %arg1: i32) -> (i32, i32, i32) {
    %c0_i32 = arith.constant 0 : i32
    %c0_i32_0 = arith.constant 0 : i32
    %c0_i32_1 = arith.constant 0 : i32
    return %arg1, %c0_i32, %c0_i32_0 : i32, i32, i32
  }
  func.func @transform_10(%arg0: i32, %arg1: i32) -> (i32, i32, i32) {
    %c0_i32 = arith.constant 0 : i32
    %c0_i32_0 = arith.constant 0 : i32
    %c0_i32_1 = arith.constant 0 : i32
    return %arg1, %c0_i32, %c0_i32_0 : i32, i32, i32
  }
  func.func @transform_11(%arg0: i32, %arg1: i32) -> (i32, i32, i32) {
    %c0_i32 = arith.constant 0 : i32
    %c0_i32_0 = arith.constant 0 : i32
    %c0_i32_1 = arith.constant 0 : i32
    return %arg1, %c0_i32, %c0_i32_0 : i32, i32, i32
  }
  func.func @transform_12(%arg0: i32, %arg1: i32) -> (i32, i32, i32) {
    %c0_i32 = arith.constant 0 : i32
    %c0_i32_0 = arith.constant 0 : i32
    %c0_i32_1 = arith.constant 0 : i32
    return %arg1, %c0_i32, %c0_i32_0 : i32, i32, i32
  }
  func.func @transform_13(%arg0: i32, %arg1: i32) -> (i32, i32, i32) {
    %c0_i32 = arith.constant 0 : i32
    %c0_i32_0 = arith.constant 0 : i32
    %c0_i32_1 = arith.constant 0 : i32
    return %arg1, %c0_i32, %c0_i32_0 : i32, i32, i32
  }
  func.func @transform_14(%arg0: i32, %arg1: i32) -> (i32, i32, i32) {
    %c0_i32 = arith.constant 0 : i32
    %c0_i32_0 = arith.constant 0 : i32
    %c0_i32_1 = arith.constant 0 : i32
    return %arg1, %c0_i32, %c0_i32_0 : i32, i32, i32
  }
  func.func @transform_15(%arg0: i32, %arg1: i32) -> (i32, i32, i32) {
    %c0_i32 = arith.constant 0 : i32
    %c0_i32_0 = arith.constant 0 : i32
    %c0_i32_1 = arith.constant 0 : i32
    return %arg1, %c0_i32, %c0_i32_0 : i32, i32, i32
  }
  func.func @transform_16(%arg0: i32, %arg1: i32) -> (i32, i32, i32) {
    %c0_i32 = arith.constant 0 : i32
    %c0_i32_0 = arith.constant 0 : i32
    %c0_i32_1 = arith.constant 0 : i32
    return %arg1, %c0_i32, %c0_i32_0 : i32, i32, i32
  }
  func.func @transform_17(%arg0: i32, %arg1: i32) -> (i32, i32, i32) {
    %c0_i32 = arith.constant 0 : i32
    %c0_i32_0 = arith.constant 0 : i32
    %c0_i32_1 = arith.constant 0 : i32
    return %arg1, %c0_i32, %c0_i32_0 : i32, i32, i32
  }
  func.func @transform_18(%arg0: i32, %arg1: i32) -> (i32, i32, i32) {
    %c0_i32 = arith.constant 0 : i32
    %c0_i32_0 = arith.constant 0 : i32
    %c0_i32_1 = arith.constant 0 : i32
    return %arg1, %c0_i32, %c0_i32_0 : i32, i32, i32
  }
  func.func @transform_19(%arg0: i32, %arg1: i32) -> (i32, i32, i32) {
    %c0_i32 = arith.constant 0 : i32
    %c0_i32_0 = arith.constant 0 : i32
    %c0_i32_1 = arith.constant 0 : i32
    return %arg1, %c0_i32, %c0_i32_0 : i32, i32, i32
  }
  func.func @transform_20(%arg0: i32, %arg1: i32) -> (i32, i32, i32) {
    %c0_i32 = arith.constant 0 : i32
    %c0_i32_0 = arith.constant 0 : i32
    %c0_i32_1 = arith.constant 0 : i32
    return %arg1, %c0_i32, %c0_i32_0 : i32, i32, i32
  }
  func.func @transform_21(%arg0: i32, %arg1: i32) -> (i32, i32, i32) {
    %c0_i32 = arith.constant 0 : i32
    %c0_i32_0 = arith.constant 0 : i32
    %c0_i32_1 = arith.constant 0 : i32
    return %arg1, %c0_i32, %c0_i32_0 : i32, i32, i32
  }
  func.func @transform_22(%arg0: i32, %arg1: i32) -> (i32, i32, i32) {
    %c0_i32 = arith.constant 0 : i32
    %c0_i32_0 = arith.constant 0 : i32
    %c0_i32_1 = arith.constant 0 : i32
    return %arg1, %c0_i32, %c0_i32_0 : i32, i32, i32
  }
  func.func @transform_23(%arg0: i32, %arg1: i32) -> (i32, i32, i32) {
    %c0_i32 = arith.constant 0 : i32
    %c0_i32_0 = arith.constant 0 : i32
    %c0_i32_1 = arith.constant 0 : i32
    return %arg1, %c0_i32, %c0_i32_0 : i32, i32, i32
  }
  func.func @transform_24(%arg0: i32, %arg1: i32) -> (i32, i32, i32) {
    %c0_i32 = arith.constant 0 : i32
    %c0_i32_0 = arith.constant 0 : i32
    %c0_i32_1 = arith.constant 0 : i32
    return %arg1, %c0_i32, %c0_i32_0 : i32, i32, i32
  }
  func.func @transform_25(%arg0: i32, %arg1: i32) -> (i32, i32, i32) {
    %c0_i32 = arith.constant 0 : i32
    %c0_i32_0 = arith.constant 0 : i32
    %c0_i32_1 = arith.constant 0 : i32
    return %arg1, %c0_i32, %c0_i32_0 : i32, i32, i32
  }
  func.func @transform_26(%arg0: i32, %arg1: i32) -> (i32, i32, i32) {
    %c0_i32 = arith.constant 0 : i32
    %c0_i32_0 = arith.constant 0 : i32
    %c0_i32_1 = arith.constant 0 : i32
    return %arg1, %c0_i32, %c0_i32_0 : i32, i32, i32
  }
  func.func @transform_27(%arg0: i32, %arg1: i32) -> (i32, i32, i32) {
    %c0_i32 = arith.constant 0 : i32
    %c0_i32_0 = arith.constant 0 : i32
    %c0_i32_1 = arith.constant 0 : i32
    return %arg1, %c0_i32, %c0_i32_0 : i32, i32, i32
  }
  func.func @transform_28(%arg0: i32, %arg1: i32) -> (i32, i32, i32) {
    %c0_i32 = arith.constant 0 : i32
    %c0_i32_0 = arith.constant 0 : i32
    %c0_i32_1 = arith.constant 0 : i32
    return %arg1, %c0_i32, %c0_i32_0 : i32, i32, i32
  }
  func.func @transform_29(%arg0: i32, %arg1: i32) -> (i32, i32, i32) {
    %c0_i32 = arith.constant 0 : i32
    %c0_i32_0 = arith.constant 0 : i32
    %c0_i32_1 = arith.constant 0 : i32
    return %arg1, %c0_i32, %c0_i32_0 : i32, i32, i32
  }
  func.func @transform_30(%arg0: i32, %arg1: i32) -> (i32, i32, i32) {
    %c0_i32 = arith.constant 0 : i32
    %c0_i32_0 = arith.constant 0 : i32
    %c0_i32_1 = arith.constant 0 : i32
    return %arg1, %c0_i32, %c0_i32_0 : i32, i32, i32
  }
  func.func @transform_31(%arg0: i32, %arg1: i32) -> (i32, i32, i32) {
    %c0_i32 = arith.constant 0 : i32
    %c0_i32_0 = arith.constant 0 : i32
    %c0_i32_1 = arith.constant 0 : i32
    return %arg0, %c0_i32, %c0_i32_0 : i32, i32, i32
  }
}

</mosaic_0001>

<llo_original>
// kernel: tpu_custom_call.1
$region0: #{tpu_custom_call.1}
  #allocation0 [shape = 'u32[]', space=smem, size = 0x4, offset = 0x4, fixed_abs, tag = 'smem constant byte address 0x4 - core index']
  #allocation1 [shape = 'u32[144,128]{1,0:T(1,128)}', space=vmem, size = 0x12000, scoped, tag = 'internal scratch']
  #allocation2 [shape = 'f32[8,32]{1,0:T(8,128)}', space=vmem, size = 0x1000, scoped, tag = 'scratch operand']
  %s0 = inlined_call_operand.smem [shape: u32[32], index: -1, kind: input, shape index: {}]
  %s1 = sld [smem:[%s0]]
  %s2 = scalar_lea.smem %s0, 1
  %s3 = sld [smem:[%s2]]
  %s4 = scalar_lea.smem %s0, 2
  %s5 = sld [smem:[%s4]]
  %s6 = scalar_lea.smem %s0, 3
  %s7 = sld [smem:[%s6]]
  %s8 = scalar_lea.smem %s0, 4
  %s9 = sld [smem:[%s8]]
  %s10 = scalar_lea.smem %s0, 5
  %s11 = sld [smem:[%s10]]
  %s12 = scalar_lea.smem %s0, 6
  %s13 = sld [smem:[%s12]]
  %s14 = scalar_lea.smem %s0, 7
  %s15 = sld [smem:[%s14]]
  %s16 = scalar_lea.smem %s0, 8
  %s17 = sld [smem:[%s16]]
  %s18 = scalar_lea.smem %s0, 9
  %s19 = sld [smem:[%s18]]
  %s20 = scalar_lea.smem %s0, 10
  %s21 = sld [smem:[%s20]]
  %s22 = scalar_lea.smem %s0, 11
  %s23 = sld [smem:[%s22]]
  %s24 = scalar_lea.smem %s0, 12
  %s25 = sld [smem:[%s24]]
  %s26 = scalar_lea.smem %s0, 13
  %s27 = sld [smem:[%s26]]
  %s28 = scalar_lea.smem %s0, 14
  %s29 = sld [smem:[%s28]]
  %s30 = scalar_lea.smem %s0, 15
  %s31 = sld [smem:[%s30]]
  %s32 = scalar_lea.smem %s0, 16
  %s33 = sld [smem:[%s32]]
  %s34 = scalar_lea.smem %s0, 17
  %s35 = sld [smem:[%s34]]
  %s36 = scalar_lea.smem %s0, 18
  %s37 = sld [smem:[%s36]]
  %s38 = scalar_lea.smem %s0, 19
  %s39 = sld [smem:[%s38]]
  %s40 = scalar_lea.smem %s0, 20
  %s41 = sld [smem:[%s40]]
  %s42 = scalar_lea.smem %s0, 21
  %s43 = sld [smem:[%s42]]
  %s44 = scalar_lea.smem %s0, 22
  %s45 = sld [smem:[%s44]]
  %s46 = scalar_lea.smem %s0, 23
  %s47 = sld [smem:[%s46]]
  %s48 = scalar_lea.smem %s0, 24
  %s49 = sld [smem:[%s48]]
  %s50 = scalar_lea.smem %s0, 25
  %s51 = sld [smem:[%s50]]
  %s52 = scalar_lea.smem %s0, 26
  %s53 = sld [smem:[%s52]]
  %s54 = scalar_lea.smem %s0, 27
  %s55 = sld [smem:[%s54]]
  %s56 = scalar_lea.smem %s0, 28
  %s57 = sld [smem:[%s56]]
  %s58 = scalar_lea.smem %s0, 29
  %s59 = sld [smem:[%s58]]
  %s60 = scalar_lea.smem %s0, 30
  %s61 = sld [smem:[%s60]]
  %s62 = scalar_lea.smem %s0, 31
  %s63 = sld [smem:[%s62]]
  %s64 = sld [smem:[#allocation0]]
  $region233: #{tpu_custom_call.1} parent=0
    _
  %s66 = ssub.s32 1, %s64
  %s67 = scalar_select 0, %s66, %s64
  $region1: #{tpu_custom_call.1} parent=0
    #allocation3 [shape = 'u8[8192]{0}', space=vmem, size = 0x2000, scoped, tag = 'input window, operand 0']
    #allocation4 [shape = 's32[2]{0}', space=sflag, size = 0x8, scoped, tag = 'scoped memory for tpu_custom_call.1']
    #allocation5 [shape = 's32[2]{0}', space=sflag, size = 0x8, scoped, tag = 'scoped memory for tpu_custom_call.1']
    #allocation6 [shape = 'u8[1024]{0}', space=vmem, size = 0x400, scoped, tag = 'input window, operand 2']
    #allocation7 [shape = 's32[2]{0}', space=sflag, size = 0x8, scoped, tag = 'scoped memory for tpu_custom_call.1']
    #allocation8 [shape = 'u8[1024]{0}', space=vmem, size = 0x400, scoped, tag = 'input window, operand 3']
    #allocation9 [shape = 'u8[1024]{0}', space=vmem, size = 0x400, scoped, tag = 'input window, operand 6']
    #allocation10 [shape = 's32[2]{0}', space=sflag, size = 0x8, scoped, tag = 'scoped memory for tpu_custom_call.1']
    #allocation11 [shape = 'u8[1024]{0}', space=vmem, size = 0x400, scoped, tag = 'input window, operand 8']
    #allocation12 [shape = 'u8[1024]{0}', space=vmem, size = 0x400, scoped, tag = 'input window, operand 10']
    #allocation13 [shape = 's32[2]{0}', space=sflag, size = 0x8, scoped, tag = 'scoped memory for tpu_custom_call.1']
    #allocation14 [shape = 'u8[1024]{0}', space=vmem, size = 0x400, scoped, tag = 'input window, operand 12']
    #allocation15 [shape = 'u8[1024]{0}', space=vmem, size = 0x400, scoped, tag = 'input window, operand 13']
    #allocation16 [shape = 's32[2]{0}', space=sflag, size = 0x8, scoped, tag = 'scoped memory for tpu_custom_call.1']
    #allocation17 [shape = 'u8[1024]{0}', space=vmem, size = 0x400, scoped, tag = 'input window, operand 14']
    #allocation18 [shape = 'u8[1024]{0}', space=vmem, size = 0x400, scoped, tag = 'input window, operand 16']
    #allocation19 [shape = 's32[2]{0}', space=sflag, size = 0x8, scoped, tag = 'scoped memory for tpu_custom_call.1']
    #allocation20 [shape = 'u8[1024]{0}', space=vmem, size = 0x400, scoped, tag = 'input window, operand 18']
    #allocation21 [shape = 'u8[16384]{0}', space=vmem, size = 0x4000, scoped, tag = 'input window, operand 19']
    #allocation22 [shape = 's32[2]{0}', space=sflag, size = 0x8, scoped, tag = 'scoped memory for tpu_custom_call.1']
    #allocation23 [shape = 'u8[1024]{0}', space=vmem, size = 0x400, scoped, tag = 'input window, operand 20']
    #allocation24 [shape = 'u8[16384]{0}', space=vmem, size = 0x4000, scoped, tag = 'input window, operand 21']
    #allocation25 [shape = 's32[2]{0}', space=sflag, size = 0x8, scoped, tag = 'scoped memory for tpu_custom_call.1']
    #allocation26 [shape = 'u8[1024]{0}', space=vmem, size = 0x400, scoped, tag = 'input window, operand 22']
    #allocation27 [shape = 'u8[1024]{0}', space=vmem, size = 0x400, scoped, tag = 'input window, operand 23']
    #allocation28 [shape = 's32[2]{0}', space=sflag, size = 0x8, scoped, tag = 'scoped memory for tpu_custom_call.1']
    #allocation29 [shape = 'u8[1024]{0}', space=vmem, size = 0x400, scoped, tag = 'input window, operand 24']
    #allocation30 [shape = 'u8[8192]{0}', space=vmem, size = 0x2000, scoped, tag = 'output window, operand 0']
    %68 = vsyncpa [#allocation4], 0
    %s69 = scalar_lea.sflag [#allocation4], 1
    %70 = vsyncpa %s69, 0
    %71 = vsyncpa [#allocation7], 0
    %s72 = scalar_lea.sflag [#allocation7], 1
    %73 = vsyncpa %s72, 0
    %74 = vsyncpa [#allocation10], 0
    %s75 = scalar_lea.sflag [#allocation10], 1
    %76 = vsyncpa %s75, 0
    %77 = vsyncpa [#allocation13], 0
    %s78 = scalar_lea.sflag [#allocation13], 1
    %79 = vsyncpa %s78, 0
    %80 = vsyncpa [#allocation16], 0
    %s81 = scalar_lea.sflag [#allocation16], 1
    %82 = vsyncpa %s81, 0
    %83 = vsyncpa [#allocation19], 0
    %s84 = scalar_lea.sflag [#allocation19], 1
    %85 = vsyncpa %s84, 0
    %86 = vsyncpa [#allocation22], 0
    %s87 = scalar_lea.sflag [#allocation22], 1
    %88 = vsyncpa %s87, 0
    %89 = vsyncpa [#allocation25], 0
    %s90 = scalar_lea.sflag [#allocation25], 1
    %91 = vsyncpa %s90, 0
    %92 = vsyncpa [#allocation28], 0
    %s93 = scalar_lea.sflag [#allocation28], 1
    %94 = vsyncpa %s93, 0
    %95 = vsyncpa [#allocation5], 0
    %s96 = scalar_lea.sflag [#allocation5], 1
    %97 = vsyncpa %s96, 0
    loop: start=0, step=1, limit=6
    $region2: #{tpu_custom_call.1} parent=1 // loop_pre_header
      _
    $region3: #{tpu_custom_call.1} parent=1 // loop_header
      %s99 = sphi 0, %s103
      %p100 = scmp.ge.s32.totalorder %s99, 6
      %s106 = sphi 0, %s118
      %s107 = sphi 0, %s114
      %s108 = sphi 0, %s106
      %s109 = sphi 0, %s107
      %s110 = sphi 0, %s108
      %s111 = sphi 0, %s109
      %s121 = sphi 0, %s123
      %s124 = sphi 0, %s121
      %s125 = sphi 0, %s124
      %s141 = sphi 0, %s125
      %s147 = sphi 0, %s149
      %s150 = sphi 0, %s147
      %s151 = sphi 0, %s150
      %s167 = sphi 0, %s151
      %s173 = sphi 0, %s175
      %s176 = sphi 0, %s173
      %s177 = sphi 0, %s176
      %s193 = sphi 0, %s177
      %s199 = sphi 0, %s201
      %s202 = sphi 0, %s199
      %s203 = sphi 0, %s202
      %s219 = sphi 0, %s203
      %s225 = sphi 0, %s227
      %s228 = sphi 0, %s225
      %s229 = sphi 0, %s228
      %s245 = sphi 0, %s229
      %s251 = sphi 0, %s253
      %s254 = sphi 0, %s251
      %s255 = sphi 0, %s254
      %s271 = sphi 0, %s255
      %s277 = sphi 0, %s279
      %s280 = sphi 0, %s277
      %s281 = sphi 0, %s280
      %s297 = sphi 0, %s281
      %s303 = sphi 0, %s305
      %s306 = sphi 0, %s303
      %s307 = sphi 0, %s306
      %s323 = sphi 0, %s307
      %s329 = sphi 0, %s331
      %s332 = sphi 0, %s329
      %s333 = sphi 0, %s332
      %s349 = sphi 0, %s333
      %s355 = sphi 0, %s357
      %s358 = sphi 0, %s355
      %s359 = sphi 0, %s358
      %s375 = sphi 0, %s359
      %s381 = sphi 0, %s383
      %s384 = sphi 0, %s381
      %s385 = sphi 0, %s384
      %s401 = sphi 0, %s385
      %s407 = sphi 0, %s409
      %s410 = sphi 0, %s407
      %s411 = sphi 0, %s410
      %s427 = sphi 0, %s411
      %s433 = sphi 0, %s435
      %s436 = sphi 0, %s433
      %s437 = sphi 0, %s436
      %s453 = sphi 0, %s437
      %s459 = sphi 0, %s461
      %s462 = sphi 0, %s459
      %s463 = sphi 0, %s462
      %s479 = sphi 0, %s463
      %s485 = sphi 0, %s487
      %s488 = sphi 0, %s485
      %s489 = sphi 0, %s488
      %s505 = sphi 0, %s489
      %s511 = sphi 0, %s513
      %s514 = sphi 0, %s511
      %s515 = sphi 0, %s514
      %s531 = sphi 0, %s515
      %s537 = sphi 0, %s539
      %s540 = sphi 0, %s537
      %s541 = sphi 0, %s540
      %s557 = sphi 0, %s541
      %s563 = sphi 0, %s565
      %s566 = sphi 0, %s563
      %s567 = sphi 0, %s566
      %s583 = sphi 0, %s567
      %s589 = sphi 0, %s591
      %s592 = sphi 0, %s589
      %s593 = sphi 0, %s592
      %s609 = sphi 0, %s593
      %s615 = sphi 0, %s617
      %s618 = sphi 0, %s615
      %s619 = sphi 0, %s618
      %s635 = sphi 0, %s619
      %s641 = sphi 0, %s643
      %s644 = sphi 0, %s641
      %s645 = sphi 0, %s644
      %s661 = sphi 0, %s645
      %s667 = sphi 0, %s669
      %s670 = sphi 0, %s667
      %s671 = sphi 0, %s670
      %s687 = sphi 0, %s671
      %s693 = sphi 0, %s695
      %s696 = sphi 0, %s693
      %s697 = sphi 0, %s696
      %s713 = sphi 0, %s697
      %s719 = sphi 0, %s721
      %s722 = sphi 0, %s719
      %s723 = sphi 0, %s722
      %s739 = sphi 0, %s723
      %s745 = sphi 0, %s747
      %s748 = sphi 0, %s745
      %s749 = sphi 0, %s748
      %s765 = sphi 0, %s749
      %s771 = sphi 0, %s773
      %s774 = sphi 0, %s771
      %s775 = sphi 0, %s774
      %s791 = sphi 0, %s775
      %s797 = sphi 0, %s799
      %s800 = sphi 0, %s797
      %s801 = sphi 0, %s800
      %s817 = sphi 0, %s801
      %s823 = sphi 0, %s825
      %s826 = sphi 0, %s823
      %s827 = sphi 0, %s826
      %s843 = sphi 0, %s827
      %s849 = sphi 0, %s851
      %s852 = sphi 0, %s849
      %s853 = sphi 0, %s852
      %s869 = sphi 0, %s853
      %s875 = sphi 0, %s877
      %s878 = sphi 0, %s875
      %s879 = sphi 0, %s878
      %s895 = sphi 0, %s879
      %s901 = sphi 0, %s903
      %s904 = sphi 0, %s901
      %s905 = sphi 0, %s904
      %s921 = sphi 0, %s905
      %s927 = sphi 0, %s929
      %s930 = sphi 0, %s927
      %s931 = sphi 0, %s930
      %s947 = sphi 0, %s931
    $region4: #{tpu_custom_call.1} parent=1 // loop_header_branch
      %102 = sbr.rel (%p100) target = $region8
    $region5: #{tpu_custom_call.1} parent=1 // loop_body
      %s104 = ssub.s32 %s99, 1
      %s105 = ssub.s32 %s99, 2
      %s112 = sadd.s32 1, %s107
      %p113 = scmp.ge.s32.totalorder %s112, 2
      %s114 = scalar_select %p113, 0, %s112
      %s115 = sadd.s32 1, %s106
      %s116 = scalar_select %p113, %s115, %s106
      %p117 = scmp.ge.s32.totalorder %s116, 2
      %s118 = scalar_select %p117, 0, %s116
      %s119 = ssub.s32 %s106, %s118
      %p120 = scmp.eq.s32.totalorder %s119, 0
      %s122 = sadd.s32 %s121, 1
      %s123 = scalar_select %p120, %s121, %s122
      %p126 = pneg %p120
      %p127 = scmp.eq.s32.totalorder %s99, 3
      %p128 = por %p126, %p127
      %p129 = scmp.ne.s32.totalorder %s121, %s124
      %p130 = scmp.eq.s32.totalorder %s99, 0
      %p131 = por %p129, %p130
      %p132 = scmp.ne.s32.totalorder %s121, %s124
      %p133 = scmp.eq.s32.totalorder %s104, 3
      %p134 = por %p132, %p133
      %p135 = scmp.ne.s32.totalorder %s124, %s125
      %p136 = scmp.eq.s32.totalorder %s104, 0
      %p137 = por %p135, %p136
      %p138 = scmp.ne.s32.totalorder %s124, %s125
      %p139 = scmp.eq.s32.totalorder %s105, 3
      %p140 = por %p138, %p139
      %p142 = scmp.ne.s32.totalorder %s125, %s141
      %p143 = scmp.eq.s32.totalorder %s105, 0
      %p144 = por %p142, %p143
      %s145 = ssub.s32 %s106, %s118
      %p146 = scmp.eq.s32.totalorder %s145, 0
      %s148 = sadd.s32 %s147, 1
      %s149 = scalar_select %p146, %s147, %s148
      %p152 = pneg %p146
      %p153 = scmp.eq.s32.totalorder %s99, 3
      %p154 = por %p152, %p153
      %p155 = scmp.ne.s32.totalorder %s147, %s150
      %p156 = scmp.eq.s32.totalorder %s99, 0
      %p157 = por %p155, %p156
      %p158 = scmp.ne.s32.totalorder %s147, %s150
      %p159 = scmp.eq.s32.totalorder %s104, 3
      %p160 = por %p158, %p159
      %p161 = scmp.ne.s32.totalorder %s150, %s151
      %p162 = scmp.eq.s32.totalorder %s104, 0
      %p163 = por %p161, %p162
      %p164 = scmp.ne.s32.totalorder %s150, %s151
      %p165 = scmp.eq.s32.totalorder %s105, 3
      %p166 = por %p164, %p165
      %p168 = scmp.ne.s32.totalorder %s151, %s167
      %p169 = scmp.eq.s32.totalorder %s105, 0
      %p170 = por %p168, %p169
      %s171 = ssub.s32 %s106, %s118
      %p172 = scmp.eq.s32.totalorder %s171, 0
      %s174 = sadd.s32 %s173, 1
      %s175 = scalar_select %p172, %s173, %s174
      %p178 = pneg %p172
      %p179 = scmp.eq.s32.totalorder %s99, 3
      %p180 = por %p178, %p179
      %p181 = scmp.ne.s32.totalorder %s173, %s176
      %p182 = scmp.eq.s32.totalorder %s99, 0
      %p183 = por %p181, %p182
      %p184 = scmp.ne.s32.totalorder %s173, %s176
      %p185 = scmp.eq.s32.totalorder %s104, 3
      %p186 = por %p184, %p185
      %p187 = scmp.ne.s32.totalorder %s176, %s177
      %p188 = scmp.eq.s32.totalorder %s104, 0
      %p189 = por %p187, %p188
      %p190 = scmp.ne.s32.totalorder %s176, %s177
      %p191 = scmp.eq.s32.totalorder %s105, 3
      %p192 = por %p190, %p191
      %p194 = scmp.ne.s32.totalorder %s177, %s193
      %p195 = scmp.eq.s32.totalorder %s105, 0
      %p196 = por %p194, %p195
      %s197 = ssub.s32 %s106, %s118
      %p198 = scmp.eq.s32.totalorder %s197, 0
      %s200 = sadd.s32 %s199, 1
      %s201 = scalar_select %p198, %s199, %s200
      %p204 = pneg %p198
      %p205 = scmp.eq.s32.totalorder %s99, 3
      %p206 = por %p204, %p205
      %p207 = scmp.ne.s32.totalorder %s199, %s202
      %p208 = scmp.eq.s32.totalorder %s99, 0
      %p209 = por %p207, %p208
      %p210 = scmp.ne.s32.totalorder %s199, %s202
      %p211 = scmp.eq.s32.totalorder %s104, 3
      %p212 = por %p210, %p211
      %p213 = scmp.ne.s32.totalorder %s202, %s203
      %p214 = scmp.eq.s32.totalorder %s104, 0
      %p215 = por %p213, %p214
      %p216 = scmp.ne.s32.totalorder %s202, %s203
      %p217 = scmp.eq.s32.totalorder %s105, 3
      %p218 = por %p216, %p217
      %p220 = scmp.ne.s32.totalorder %s203, %s219
      %p221 = scmp.eq.s32.totalorder %s105, 0
      %p222 = por %p220, %p221
      %s223 = ssub.s32 %s106, %s118
      %p224 = scmp.eq.s32.totalorder %s223, 0
      %s226 = sadd.s32 %s225, 1
      %s227 = scalar_select %p224, %s225, %s226
      %p230 = pneg %p224
      %p231 = scmp.eq.s32.totalorder %s99, 3
      %p232 = por %p230, %p231
      %p233 = scmp.ne.s32.totalorder %s225, %s228
      %p234 = scmp.eq.s32.totalorder %s99, 0
      %p235 = por %p233, %p234
      %p236 = scmp.ne.s32.totalorder %s225, %s228
      %p237 = scmp.eq.s32.totalorder %s104, 3
      %p238 = por %p236, %p237
      %p239 = scmp.ne.s32.totalorder %s228, %s229
      %p240 = scmp.eq.s32.totalorder %s104, 0
      %p241 = por %p239, %p240
      %p242 = scmp.ne.s32.totalorder %s228, %s229
      %p243 = scmp.eq.s32.totalorder %s105, 3
      %p244 = por %p242, %p243
      %p246 = scmp.ne.s32.totalorder %s229, %s245
      %p247 = scmp.eq.s32.totalorder %s105, 0
      %p248 = por %p246, %p247
      %s249 = ssub.s32 %s107, %s114
      %p250 = scmp.eq.s32.totalorder %s249, 0
      %s252 = sadd.s32 %s251, 1
      %s253 = scalar_select %p250, %s251, %s252
      %p256 = pneg %p250
      %p257 = scmp.eq.s32.totalorder %s99, 3
      %p258 = por %p256, %p257
      %p259 = scmp.ne.s32.totalorder %s251, %s254
      %p260 = scmp.eq.s32.totalorder %s99, 0
      %p261 = por %p259, %p260
      %p262 = scmp.ne.s32.totalorder %s251, %s254
      %p263 = scmp.eq.s32.totalorder %s104, 3
      %p264 = por %p262, %p263
      %p265 = scmp.ne.s32.totalorder %s254, %s255
      %p266 = scmp.eq.s32.totalorder %s104, 0
      %p267 = por %p265, %p266
      %p268 = scmp.ne.s32.totalorder %s254, %s255
      %p269 = scmp.eq.s32.totalorder %s105, 3
      %p270 = por %p268, %p269
      %p272 = scmp.ne.s32.totalorder %s255, %s271
      %p273 = scmp.eq.s32.totalorder %s105, 0
      %p274 = por %p272, %p273
      %s275 = ssub.s32 %s107, %s114
      %p276 = scmp.eq.s32.totalorder %s275, 0
      %s278 = sadd.s32 %s277, 1
      %s279 = scalar_select %p276, %s277, %s278
      %p282 = pneg %p276
      %p283 = scmp.eq.s32.totalorder %s99, 3
      %p284 = por %p282, %p283
      %p285 = scmp.ne.s32.totalorder %s277, %s280
      %p286 = scmp.eq.s32.totalorder %s99, 0
      %p287 = por %p285, %p286
      %p288 = scmp.ne.s32.totalorder %s277, %s280
      %p289 = scmp.eq.s32.totalorder %s104, 3
      %p290 = por %p288, %p289
      %p291 = scmp.ne.s32.totalorder %s280, %s281
      %p292 = scmp.eq.s32.totalorder %s104, 0
      %p293 = por %p291, %p292
      %p294 = scmp.ne.s32.totalorder %s280, %s281
      %p295 = scmp.eq.s32.totalorder %s105, 3
      %p296 = por %p294, %p295
      %p298 = scmp.ne.s32.totalorder %s281, %s297
      %p299 = scmp.eq.s32.totalorder %s105, 0
      %p300 = por %p298, %p299
      %s301 = ssub.s32 %s107, %s114
      %p302 = scmp.eq.s32.totalorder %s301, 0
      %s304 = sadd.s32 %s303, 1
      %s305 = scalar_select %p302, %s303, %s304
      %p308 = pneg %p302
      %p309 = scmp.eq.s32.totalorder %s99, 3
      %p310 = por %p308, %p309
      %p311 = scmp.ne.s32.totalorder %s303, %s306
      %p312 = scmp.eq.s32.totalorder %s99, 0
      %p313 = por %p311, %p312
      %p314 = scmp.ne.s32.totalorder %s303, %s306
      %p315 = scmp.eq.s32.totalorder %s104, 3
      %p316 = por %p314, %p315
      %p317 = scmp.ne.s32.totalorder %s306, %s307
      %p318 = scmp.eq.s32.totalorder %s104, 0
      %p319 = por %p317, %p318
      %p320 = scmp.ne.s32.totalorder %s306, %s307
      %p321 = scmp.eq.s32.totalorder %s105, 3
      %p322 = por %p320, %p321
      %p324 = scmp.ne.s32.totalorder %s307, %s323
      %p325 = scmp.eq.s32.totalorder %s105, 0
      %p326 = por %p324, %p325
      %s327 = ssub.s32 %s107, %s114
      %p328 = scmp.eq.s32.totalorder %s327, 0
      %s330 = sadd.s32 %s329, 1
      %s331 = scalar_select %p328, %s329, %s330
      %p334 = pneg %p328
      %p335 = scmp.eq.s32.totalorder %s99, 3
      %p336 = por %p334, %p335
      %p337 = scmp.ne.s32.totalorder %s329, %s332
      %p338 = scmp.eq.s32.totalorder %s99, 0
      %p339 = por %p337, %p338
      %p340 = scmp.ne.s32.totalorder %s329, %s332
      %p341 = scmp.eq.s32.totalorder %s104, 3
      %p342 = por %p340, %p341
      %p343 = scmp.ne.s32.totalorder %s332, %s333
      %p344 = scmp.eq.s32.totalorder %s104, 0
      %p345 = por %p343, %p344
      %p346 = scmp.ne.s32.totalorder %s332, %s333
      %p347 = scmp.eq.s32.totalorder %s105, 3
      %p348 = por %p346, %p347
      %p350 = scmp.ne.s32.totalorder %s333, %s349
      %p351 = scmp.eq.s32.totalorder %s105, 0
      %p352 = por %p350, %p351
      %s353 = ssub.s32 %s107, %s114
      %p354 = scmp.eq.s32.totalorder %s353, 0
      %s356 = sadd.s32 %s355, 1
      %s357 = scalar_select %p354, %s355, %s356
      %p360 = pneg %p354
      %p361 = scmp.eq.s32.totalorder %s99, 3
      %p362 = por %p360, %p361
      %p363 = scmp.ne.s32.totalorder %s355, %s358
      %p364 = scmp.eq.s32.totalorder %s99, 0
      %p365 = por %p363, %p364
      %p366 = scmp.ne.s32.totalorder %s355, %s358
      %p367 = scmp.eq.s32.totalorder %s104, 3
      %p368 = por %p366, %p367
      %p369 = scmp.ne.s32.totalorder %s358, %s359
      %p370 = scmp.eq.s32.totalorder %s104, 0
      %p371 = por %p369, %p370
      %p372 = scmp.ne.s32.totalorder %s358, %s359
      %p373 = scmp.eq.s32.totalorder %s105, 3
      %p374 = por %p372, %p373
      %p376 = scmp.ne.s32.totalorder %s359, %s375
      %p377 = scmp.eq.s32.totalorder %s105, 0
      %p378 = por %p376, %p377
      %s379 = ssub.s32 %s107, %s114
      %p380 = scmp.eq.s32.totalorder %s379, 0
      %s382 = sadd.s32 %s381, 1
      %s383 = scalar_select %p380, %s381, %s382
      %p386 = pneg %p380
      %p387 = scmp.eq.s32.totalorder %s99, 3
      %p388 = por %p386, %p387
      %p389 = scmp.ne.s32.totalorder %s381, %s384
      %p390 = scmp.eq.s32.totalorder %s99, 0
      %p391 = por %p389, %p390
      %p392 = scmp.ne.s32.totalorder %s381, %s384
      %p393 = scmp.eq.s32.totalorder %s104, 3
      %p394 = por %p392, %p393
      %p395 = scmp.ne.s32.totalorder %s384, %s385
      %p396 = scmp.eq.s32.totalorder %s104, 0
      %p397 = por %p395, %p396
      %p398 = scmp.ne.s32.totalorder %s384, %s385
      %p399 = scmp.eq.s32.totalorder %s105, 3
      %p400 = por %p398, %p399
      %p402 = scmp.ne.s32.totalorder %s385, %s401
      %p403 = scmp.eq.s32.totalorder %s105, 0
      %p404 = por %p402, %p403
      %s405 = ssub.s32 %s107, %s114
      %p406 = scmp.eq.s32.totalorder %s405, 0
      %s408 = sadd.s32 %s407, 1
      %s409 = scalar_select %p406, %s407, %s408
      %p412 = pneg %p406
      %p413 = scmp.eq.s32.totalorder %s99, 3
      %p414 = por %p412, %p413
      %p415 = scmp.ne.s32.totalorder %s407, %s410
      %p416 = scmp.eq.s32.totalorder %s99, 0
      %p417 = por %p415, %p416
      %p418 = scmp.ne.s32.totalorder %s407, %s410
      %p419 = scmp.eq.s32.totalorder %s104, 3
      %p420 = por %p418, %p419
      %p421 = scmp.ne.s32.totalorder %s410, %s411
      %p422 = scmp.eq.s32.totalorder %s104, 0
      %p423 = por %p421, %p422
      %p424 = scmp.ne.s32.totalorder %s410, %s411
      %p425 = scmp.eq.s32.totalorder %s105, 3
      %p426 = por %p424, %p425
      %p428 = scmp.ne.s32.totalorder %s411, %s427
      %p429 = scmp.eq.s32.totalorder %s105, 0
      %p430 = por %p428, %p429
      %s431 = ssub.s32 %s107, %s114
      %p432 = scmp.eq.s32.totalorder %s431, 0
      %s434 = sadd.s32 %s433, 1
      %s435 = scalar_select %p432, %s433, %s434
      %p438 = pneg %p432
      %p439 = scmp.eq.s32.totalorder %s99, 3
      %p440 = por %p438, %p439
      %p441 = scmp.ne.s32.totalorder %s433, %s436
      %p442 = scmp.eq.s32.totalorder %s99, 0
      %p443 = por %p441, %p442
      %p444 = scmp.ne.s32.totalorder %s433, %s436
      %p445 = scmp.eq.s32.totalorder %s104, 3
      %p446 = por %p444, %p445
      %p447 = scmp.ne.s32.totalorder %s436, %s437
      %p448 = scmp.eq.s32.totalorder %s104, 0
      %p449 = por %p447, %p448
      %p450 = scmp.ne.s32.totalorder %s436, %s437
      %p451 = scmp.eq.s32.totalorder %s105, 3
      %p452 = por %p450, %p451
      %p454 = scmp.ne.s32.totalorder %s437, %s453
      %p455 = scmp.eq.s32.totalorder %s105, 0
      %p456 = por %p454, %p455
      %s457 = ssub.s32 %s107, %s114
      %p458 = scmp.eq.s32.totalorder %s457, 0
      %s460 = sadd.s32 %s459, 1
      %s461 = scalar_select %p458, %s459, %s460
      %p464 = pneg %p458
      %p465 = scmp.eq.s32.totalorder %s99, 3
      %p466 = por %p464, %p465
      %p467 = scmp.ne.s32.totalorder %s459, %s462
      %p468 = scmp.eq.s32.totalorder %s99, 0
      %p469 = por %p467, %p468
      %p470 = scmp.ne.s32.totalorder %s459, %s462
      %p471 = scmp.eq.s32.totalorder %s104, 3
      %p472 = por %p470, %p471
      %p473 = scmp.ne.s32.totalorder %s462, %s463
      %p474 = scmp.eq.s32.totalorder %s104, 0
      %p475 = por %p473, %p474
      %p476 = scmp.ne.s32.totalorder %s462, %s463
      %p477 = scmp.eq.s32.totalorder %s105, 3
      %p478 = por %p476, %p477
      %p480 = scmp.ne.s32.totalorder %s463, %s479
      %p481 = scmp.eq.s32.totalorder %s105, 0
      %p482 = por %p480, %p481
      %s483 = ssub.s32 %s107, %s114
      %p484 = scmp.eq.s32.totalorder %s483, 0
      %s486 = sadd.s32 %s485, 1
      %s487 = scalar_select %p484, %s485, %s486
      %p490 = pneg %p484
      %p491 = scmp.eq.s32.totalorder %s99, 3
      %p492 = por %p490, %p491
      %p493 = scmp.ne.s32.totalorder %s485, %s488
      %p494 = scmp.eq.s32.totalorder %s99, 0
      %p495 = por %p493, %p494
      %p496 = scmp.ne.s32.totalorder %s485, %s488
      %p497 = scmp.eq.s32.totalorder %s104, 3
      %p498 = por %p496, %p497
      %p499 = scmp.ne.s32.totalorder %s488, %s489
      %p500 = scmp.eq.s32.totalorder %s104, 0
      %p501 = por %p499, %p500
      %p502 = scmp.ne.s32.totalorder %s488, %s489
      %p503 = scmp.eq.s32.totalorder %s105, 3
      %p504 = por %p502, %p503
      %p506 = scmp.ne.s32.totalorder %s489, %s505
      %p507 = scmp.eq.s32.totalorder %s105, 0
      %p508 = por %p506, %p507
      %s509 = ssub.s32 %s107, %s114
      %p510 = scmp.eq.s32.totalorder %s509, 0
      %s512 = sadd.s32 %s511, 1
      %s513 = scalar_select %p510, %s511, %s512
      %p516 = pneg %p510
      %p517 = scmp.eq.s32.totalorder %s99, 3
      %p518 = por %p516, %p517
      %p519 = scmp.ne.s32.totalorder %s511, %s514
      %p520 = scmp.eq.s32.totalorder %s99, 0
      %p521 = por %p519, %p520
      %p522 = scmp.ne.s32.totalorder %s511, %s514
      %p523 = scmp.eq.s32.totalorder %s104, 3
      %p524 = por %p522, %p523
      %p525 = scmp.ne.s32.totalorder %s514, %s515
      %p526 = scmp.eq.s32.totalorder %s104, 0
      %p527 = por %p525, %p526
      %p528 = scmp.ne.s32.totalorder %s514, %s515
      %p529 = scmp.eq.s32.totalorder %s105, 3
      %p530 = por %p528, %p529
      %p532 = scmp.ne.s32.totalorder %s515, %s531
      %p533 = scmp.eq.s32.totalorder %s105, 0
      %p534 = por %p532, %p533
      %s535 = ssub.s32 %s107, %s114
      %p536 = scmp.eq.s32.totalorder %s535, 0
      %s538 = sadd.s32 %s537, 1
      %s539 = scalar_select %p536, %s537, %s538
      %p542 = pneg %p536
      %p543 = scmp.eq.s32.totalorder %s99, 3
      %p544 = por %p542, %p543
      %p545 = scmp.ne.s32.totalorder %s537, %s540
      %p546 = scmp.eq.s32.totalorder %s99, 0
      %p547 = por %p545, %p546
      %p548 = scmp.ne.s32.totalorder %s537, %s540
      %p549 = scmp.eq.s32.totalorder %s104, 3
      %p550 = por %p548, %p549
      %p551 = scmp.ne.s32.totalorder %s540, %s541
      %p552 = scmp.eq.s32.totalorder %s104, 0
      %p553 = por %p551, %p552
      %p554 = scmp.ne.s32.totalorder %s540, %s541
      %p555 = scmp.eq.s32.totalorder %s105, 3
      %p556 = por %p554, %p555
      %p558 = scmp.ne.s32.totalorder %s541, %s557
      %p559 = scmp.eq.s32.totalorder %s105, 0
      %p560 = por %p558, %p559
      %s561 = ssub.s32 %s107, %s114
      %p562 = scmp.eq.s32.totalorder %s561, 0
      %s564 = sadd.s32 %s563, 1
      %s565 = scalar_select %p562, %s563, %s564
      %p568 = pneg %p562
      %p569 = scmp.eq.s32.totalorder %s99, 3
      %p570 = por %p568, %p569
      %p571 = scmp.ne.s32.totalorder %s563, %s566
      %p572 = scmp.eq.s32.totalorder %s99, 0
      %p573 = por %p571, %p572
      %p574 = scmp.ne.s32.totalorder %s563, %s566
      %p575 = scmp.eq.s32.totalorder %s104, 3
      %p576 = por %p574, %p575
      %p577 = scmp.ne.s32.totalorder %s566, %s567
      %p578 = scmp.eq.s32.totalorder %s104, 0
      %p579 = por %p577, %p578
      %p580 = scmp.ne.s32.totalorder %s566, %s567
      %p581 = scmp.eq.s32.totalorder %s105, 3
      %p582 = por %p580, %p581
      %p584 = scmp.ne.s32.totalorder %s567, %s583
      %p585 = scmp.eq.s32.totalorder %s105, 0
      %p586 = por %p584, %p585
      %s587 = ssub.s32 %s107, %s114
      %p588 = scmp.eq.s32.totalorder %s587, 0
      %s590 = sadd.s32 %s589, 1
      %s591 = scalar_select %p588, %s589, %s590
      %p594 = pneg %p588
      %p595 = scmp.eq.s32.totalorder %s99, 3
      %p596 = por %p594, %p595
      %p597 = scmp.ne.s32.totalorder %s589, %s592
      %p598 = scmp.eq.s32.totalorder %s99, 0
      %p599 = por %p597, %p598
      %p600 = scmp.ne.s32.totalorder %s589, %s592
      %p601 = scmp.eq.s32.totalorder %s104, 3
      %p602 = por %p600, %p601
      %p603 = scmp.ne.s32.totalorder %s592, %s593
      %p604 = scmp.eq.s32.totalorder %s104, 0
      %p605 = por %p603, %p604
      %p606 = scmp.ne.s32.totalorder %s592, %s593
      %p607 = scmp.eq.s32.totalorder %s105, 3
      %p608 = por %p606, %p607
      %p610 = scmp.ne.s32.totalorder %s593, %s609
      %p611 = scmp.eq.s32.totalorder %s105, 0
      %p612 = por %p610, %p611
      %s613 = ssub.s32 %s107, %s114
      %p614 = scmp.eq.s32.totalorder %s613, 0
      %s616 = sadd.s32 %s615, 1
      %s617 = scalar_select %p614, %s615, %s616
      %p620 = pneg %p614
      %p621 = scmp.eq.s32.totalorder %s99, 3
      %p622 = por %p620, %p621
      %p623 = scmp.ne.s32.totalorder %s615, %s618
      %p624 = scmp.eq.s32.totalorder %s99, 0
      %p625 = por %p623, %p624
      %p626 = scmp.ne.s32.totalorder %s615, %s618
      %p627 = scmp.eq.s32.totalorder %s104, 3
      %p628 = por %p626, %p627
      %p629 = scmp.ne.s32.totalorder %s618, %s619
      %p630 = scmp.eq.s32.totalorder %s104, 0
      %p631 = por %p629, %p630
      %p632 = scmp.ne.s32.totalorder %s618, %s619
      %p633 = scmp.eq.s32.totalorder %s105, 3
      %p634 = por %p632, %p633
      %p636 = scmp.ne.s32.totalorder %s619, %s635
      %p637 = scmp.eq.s32.totalorder %s105, 0
      %p638 = por %p636, %p637
      %s639 = ssub.s32 %s107, %s114
      %p640 = scmp.eq.s32.totalorder %s639, 0
      %s642 = sadd.s32 %s641, 1
      %s643 = scalar_select %p640, %s641, %s642
      %p646 = pneg %p640
      %p647 = scmp.eq.s32.totalorder %s99, 3
      %p648 = por %p646, %p647
      %p649 = scmp.ne.s32.totalorder %s641, %s644
      %p650 = scmp.eq.s32.totalorder %s99, 0
      %p651 = por %p649, %p650
      %p652 = scmp.ne.s32.totalorder %s641, %s644
      %p653 = scmp.eq.s32.totalorder %s104, 3
      %p654 = por %p652, %p653
      %p655 = scmp.ne.s32.totalorder %s644, %s645
      %p656 = scmp.eq.s32.totalorder %s104, 0
      %p657 = por %p655, %p656
      %p658 = scmp.ne.s32.totalorder %s644, %s645
      %p659 = scmp.eq.s32.totalorder %s105, 3
      %p660 = por %p658, %p659
      %p662 = scmp.ne.s32.totalorder %s645, %s661
      %p663 = scmp.eq.s32.totalorder %s105, 0
      %p664 = por %p662, %p663
      %s665 = ssub.s32 %s107, %s114
      %p666 = scmp.eq.s32.totalorder %s665, 0
      %s668 = sadd.s32 %s667, 1
      %s669 = scalar_select %p666, %s667, %s668
      %p672 = pneg %p666
      %p673 = scmp.eq.s32.totalorder %s99, 3
      %p674 = por %p672, %p673
      %p675 = scmp.ne.s32.totalorder %s667, %s670
      %p676 = scmp.eq.s32.totalorder %s99, 0
      %p677 = por %p675, %p676
      %p678 = scmp.ne.s32.totalorder %s667, %s670
      %p679 = scmp.eq.s32.totalorder %s104, 3
      %p680 = por %p678, %p679
      %p681 = scmp.ne.s32.totalorder %s670, %s671
      %p682 = scmp.eq.s32.totalorder %s104, 0
      %p683 = por %p681, %p682
      %p684 = scmp.ne.s32.totalorder %s670, %s671
      %p685 = scmp.eq.s32.totalorder %s105, 3
      %p686 = por %p684, %p685
      %p688 = scmp.ne.s32.totalorder %s671, %s687
      %p689 = scmp.eq.s32.totalorder %s105, 0
      %p690 = por %p688, %p689
      %s691 = ssub.s32 %s107, %s114
      %p692 = scmp.eq.s32.totalorder %s691, 0
      %s694 = sadd.s32 %s693, 1
      %s695 = scalar_select %p692, %s693, %s694
      %p698 = pneg %p692
      %p699 = scmp.eq.s32.totalorder %s99, 3
      %p700 = por %p698, %p699
      %p701 = scmp.ne.s32.totalorder %s693, %s696
      %p702 = scmp.eq.s32.totalorder %s99, 0
      %p703 = por %p701, %p702
      %p704 = scmp.ne.s32.totalorder %s693, %s696
      %p705 = scmp.eq.s32.totalorder %s104, 3
      %p706 = por %p704, %p705
      %p707 = scmp.ne.s32.totalorder %s696, %s697
      %p708 = scmp.eq.s32.totalorder %s104, 0
      %p709 = por %p707, %p708
      %p710 = scmp.ne.s32.totalorder %s696, %s697
      %p711 = scmp.eq.s32.totalorder %s105, 3
      %p712 = por %p710, %p711
      %p714 = scmp.ne.s32.totalorder %s697, %s713
      %p715 = scmp.eq.s32.totalorder %s105, 0
      %p716 = por %p714, %p715
      %s717 = ssub.s32 %s107, %s114
      %p718 = scmp.eq.s32.totalorder %s717, 0
      %s720 = sadd.s32 %s719, 1
      %s721 = scalar_select %p718, %s719, %s720
      %p724 = pneg %p718
      %p725 = scmp.eq.s32.totalorder %s99, 3
      %p726 = por %p724, %p725
      %p727 = scmp.ne.s32.totalorder %s719, %s722
      %p728 = scmp.eq.s32.totalorder %s99, 0
      %p729 = por %p727, %p728
      %p730 = scmp.ne.s32.totalorder %s719, %s722
      %p731 = scmp.eq.s32.totalorder %s104, 3
      %p732 = por %p730, %p731
      %p733 = scmp.ne.s32.totalorder %s722, %s723
      %p734 = scmp.eq.s32.totalorder %s104, 0
      %p735 = por %p733, %p734
      %p736 = scmp.ne.s32.totalorder %s722, %s723
      %p737 = scmp.eq.s32.totalorder %s105, 3
      %p738 = por %p736, %p737
      %p740 = scmp.ne.s32.totalorder %s723, %s739
      %p741 = scmp.eq.s32.totalorder %s105, 0
      %p742 = por %p740, %p741
      %s743 = ssub.s32 %s107, %s114
      %p744 = scmp.eq.s32.totalorder %s743, 0
      %s746 = sadd.s32 %s745, 1
      %s747 = scalar_select %p744, %s745, %s746
      %p750 = pneg %p744
      %p751 = scmp.eq.s32.totalorder %s99, 3
      %p752 = por %p750, %p751
      %p753 = scmp.ne.s32.totalorder %s745, %s748
      %p754 = scmp.eq.s32.totalorder %s99, 0
      %p755 = por %p753, %p754
      %p756 = scmp.ne.s32.totalorder %s745, %s748
      %p757 = scmp.eq.s32.totalorder %s104, 3
      %p758 = por %p756, %p757
      %p759 = scmp.ne.s32.totalorder %s748, %s749
      %p760 = scmp.eq.s32.totalorder %s104, 0
      %p761 = por %p759, %p760
      %p762 = scmp.ne.s32.totalorder %s748, %s749
      %p763 = scmp.eq.s32.totalorder %s105, 3
      %p764 = por %p762, %p763
      %p766 = scmp.ne.s32.totalorder %s749, %s765
      %p767 = scmp.eq.s32.totalorder %s105, 0
      %p768 = por %p766, %p767
      %s769 = ssub.s32 %s107, %s114
      %p770 = scmp.eq.s32.totalorder %s769, 0
      %s772 = sadd.s32 %s771, 1
      %s773 = scalar_select %p770, %s771, %s772
      %p776 = pneg %p770
      %p777 = scmp.eq.s32.totalorder %s99, 3
      %p778 = por %p776, %p777
      %p779 = scmp.ne.s32.totalorder %s771, %s774
      %p780 = scmp.eq.s32.totalorder %s99, 0
      %p781 = por %p779, %p780
      %p782 = scmp.ne.s32.totalorder %s771, %s774
      %p783 = scmp.eq.s32.totalorder %s104, 3
      %p784 = por %p782, %p783
      %p785 = scmp.ne.s32.totalorder %s774, %s775
      %p786 = scmp.eq.s32.totalorder %s104, 0
      %p787 = por %p785, %p786
      %p788 = scmp.ne.s32.totalorder %s774, %s775
      %p789 = scmp.eq.s32.totalorder %s105, 3
      %p790 = por %p788, %p789
      %p792 = scmp.ne.s32.totalorder %s775, %s791
      %p793 = scmp.eq.s32.totalorder %s105, 0
      %p794 = por %p792, %p793
      %s795 = ssub.s32 %s107, %s114
      %p796 = scmp.eq.s32.totalorder %s795, 0
      %s798 = sadd.s32 %s797, 1
      %s799 = scalar_select %p796, %s797, %s798
      %p802 = pneg %p796
      %p803 = scmp.eq.s32.totalorder %s99, 3
      %p804 = por %p802, %p803
      %p805 = scmp.ne.s32.totalorder %s797, %s800
      %p806 = scmp.eq.s32.totalorder %s99, 0
      %p807 = por %p805, %p806
      %p808 = scmp.ne.s32.totalorder %s797, %s800
      %p809 = scmp.eq.s32.totalorder %s104, 3
      %p810 = por %p808, %p809
      %p811 = scmp.ne.s32.totalorder %s800, %s801
      %p812 = scmp.eq.s32.totalorder %s104, 0
      %p813 = por %p811, %p812
      %p814 = scmp.ne.s32.totalorder %s800, %s801
      %p815 = scmp.eq.s32.totalorder %s105, 3
      %p816 = por %p814, %p815
      %p818 = scmp.ne.s32.totalorder %s801, %s817
      %p819 = scmp.eq.s32.totalorder %s105, 0
      %p820 = por %p818, %p819
      %s821 = ssub.s32 %s107, %s114
      %p822 = scmp.eq.s32.totalorder %s821, 0
      %s824 = sadd.s32 %s823, 1
      %s825 = scalar_select %p822, %s823, %s824
      %p828 = pneg %p822
      %p829 = scmp.eq.s32.totalorder %s99, 3
      %p830 = por %p828, %p829
      %p831 = scmp.ne.s32.totalorder %s823, %s826
      %p832 = scmp.eq.s32.totalorder %s99, 0
      %p833 = por %p831, %p832
      %p834 = scmp.ne.s32.totalorder %s823, %s826
      %p835 = scmp.eq.s32.totalorder %s104, 3
      %p836 = por %p834, %p835
      %p837 = scmp.ne.s32.totalorder %s826, %s827
      %p838 = scmp.eq.s32.totalorder %s104, 0
      %p839 = por %p837, %p838
      %p840 = scmp.ne.s32.totalorder %s826, %s827
      %p841 = scmp.eq.s32.totalorder %s105, 3
      %p842 = por %p840, %p841
      %p844 = scmp.ne.s32.totalorder %s827, %s843
      %p845 = scmp.eq.s32.totalorder %s105, 0
      %p846 = por %p844, %p845
      %s847 = ssub.s32 %s107, %s114
      %p848 = scmp.eq.s32.totalorder %s847, 0
      %s850 = sadd.s32 %s849, 1
      %s851 = scalar_select %p848, %s849, %s850
      %p854 = pneg %p848
      %p855 = scmp.eq.s32.totalorder %s99, 3
      %p856 = por %p854, %p855
      %p857 = scmp.ne.s32.totalorder %s849, %s852
      %p858 = scmp.eq.s32.totalorder %s99, 0
      %p859 = por %p857, %p858
      %p860 = scmp.ne.s32.totalorder %s849, %s852
      %p861 = scmp.eq.s32.totalorder %s104, 3
      %p862 = por %p860, %p861
      %p863 = scmp.ne.s32.totalorder %s852, %s853
      %p864 = scmp.eq.s32.totalorder %s104, 0
      %p865 = por %p863, %p864
      %p866 = scmp.ne.s32.totalorder %s852, %s853
      %p867 = scmp.eq.s32.totalorder %s105, 3
      %p868 = por %p866, %p867
      %p870 = scmp.ne.s32.totalorder %s853, %s869
      %p871 = scmp.eq.s32.totalorder %s105, 0
      %p872 = por %p870, %p871
      %s873 = ssub.s32 %s107, %s114
      %p874 = scmp.eq.s32.totalorder %s873, 0
      %s876 = sadd.s32 %s875, 1
      %s877 = scalar_select %p874, %s875, %s876
      %p880 = pneg %p874
      %p881 = scmp.eq.s32.totalorder %s99, 3
      %p882 = por %p880, %p881
      %p883 = scmp.ne.s32.totalorder %s875, %s878
      %p884 = scmp.eq.s32.totalorder %s99, 0
      %p885 = por %p883, %p884
      %p886 = scmp.ne.s32.totalorder %s875, %s878
      %p887 = scmp.eq.s32.totalorder %s104, 3
      %p888 = por %p886, %p887
      %p889 = scmp.ne.s32.totalorder %s878, %s879
      %p890 = scmp.eq.s32.totalorder %s104, 0
      %p891 = por %p889, %p890
      %p892 = scmp.ne.s32.totalorder %s878, %s879
      %p893 = scmp.eq.s32.totalorder %s105, 3
      %p894 = por %p892, %p893
      %p896 = scmp.ne.s32.totalorder %s879, %s895
      %p897 = scmp.eq.s32.totalorder %s105, 0
      %p898 = por %p896, %p897
      %s899 = ssub.s32 %s107, %s114
      %p900 = scmp.eq.s32.totalorder %s899, 0
      %s902 = sadd.s32 %s901, 1
      %s903 = scalar_select %p900, %s901, %s902
      %p906 = pneg %p900
      %p907 = scmp.eq.s32.totalorder %s99, 3
      %p908 = por %p906, %p907
      %p909 = scmp.ne.s32.totalorder %s901, %s904
      %p910 = scmp.eq.s32.totalorder %s99, 0
      %p911 = por %p909, %p910
      %p912 = scmp.ne.s32.totalorder %s901, %s904
      %p913 = scmp.eq.s32.totalorder %s104, 3
      %p914 = por %p912, %p913
      %p915 = scmp.ne.s32.totalorder %s904, %s905
      %p916 = scmp.eq.s32.totalorder %s104, 0
      %p917 = por %p915, %p916
      %p918 = scmp.ne.s32.totalorder %s904, %s905
      %p919 = scmp.eq.s32.totalorder %s105, 3
      %p920 = por %p918, %p919
      %p922 = scmp.ne.s32.totalorder %s905, %s921
      %p923 = scmp.eq.s32.totalorder %s105, 0
      %p924 = por %p922, %p923
      %s925 = ssub.s32 %s106, %s118
      %p926 = scmp.eq.s32.totalorder %s925, 0
      %s928 = sadd.s32 %s927, 1
      %s929 = scalar_select %p926, %s927, %s928
      %p932 = pneg %p926
      %p933 = scmp.eq.s32.totalorder %s99, 3
      %p934 = por %p932, %p933
      %p935 = scmp.ne.s32.totalorder %s927, %s930
      %p936 = scmp.eq.s32.totalorder %s99, 0
      %p937 = por %p935, %p936
      %p938 = scmp.ne.s32.totalorder %s927, %s930
      %p939 = scmp.eq.s32.totalorder %s104, 3
      %p940 = por %p938, %p939
      %p941 = scmp.ne.s32.totalorder %s930, %s931
      %p942 = scmp.eq.s32.totalorder %s104, 0
      %p943 = por %p941, %p942
      %p944 = scmp.ne.s32.totalorder %s930, %s931
      %p945 = scmp.eq.s32.totalorder %s105, 3
      %p946 = por %p944, %p945
      %p948 = scmp.ne.s32.totalorder %s931, %s947
      %p949 = scmp.eq.s32.totalorder %s105, 0
      %p950 = por %p948, %p949
      %p951 = scmp.le.s32.totalorder 1, %s99
      %p952 = scmp.lt.s32.totalorder %s99, 5
      %p953 = pnand %p951, %p952
      %p954 = pneg %p953
      // Predicated region
      $region9: #{tpu_custom_call.1} parent=5 // pred_check
        _
      $region10: #{tpu_custom_call.1} parent=5 // pred_check_branch
        %956 = sbr.rel (%p953) target = $region12
      $region11: #{tpu_custom_call.1} parent=5 // pred_region
        %s957 = ssub.s32 %s99, 1
      $region12: #{tpu_custom_call.1} parent=5 // pred_fallthru
        _
      %p958 = scmp.lt.s32.totalorder %s99, 4
      // Predicated region
      $region13: #{tpu_custom_call.1} parent=5 // pred_check
        %p959 = pneg %p958
      $region14: #{tpu_custom_call.1} parent=5 // pred_check_branch
        %961 = sbr.rel (%p959) target = $region16
      $region15: #{tpu_custom_call.1} parent=5 // pred_region
        // Predicated region
        $region17: #{tpu_custom_call.1} parent=15 // pred_check
          %p962 = pneg %p131
        $region18: #{tpu_custom_call.1} parent=15 // pred_check_branch
          %964 = sbr.rel (%p962) target = $region20
        $region19: #{tpu_custom_call.1} parent=15 // pred_region
          %s965 = sand.u32 %s121, 1
          %s966 = scalar_lea.sflag [#allocation4], %s965
          %s967 = sand.u32 %s121, 1
          %s968 = smul.addr %s967, 8
          %s969 = scalar_lea.vmem [#allocation3], %s968
          %s971 = ssub.s32 128, 128
          %972 = vsyncadd %s966, %s971
          %s973 = smul.addr %s106, 128
          %s974 = scalar_lea.hbm %s1, %s973
          %s976 = sshll.u32 %s969, 4
          %s977 = int_to_ptr.vmem [resolvable:$true] %s976
          %979 = dma.hbm_to_vmem [thread:$0]  %s974, 128, %s977, %s966
        $region20: #{tpu_custom_call.1} parent=15 // pred_fallthru
          _
        // Predicated region
        $region21: #{tpu_custom_call.1} parent=15 // pred_check
          %p980 = pneg %p157
        $region22: #{tpu_custom_call.1} parent=15 // pred_check_branch
          %982 = sbr.rel (%p980) target = $region24
        $region23: #{tpu_custom_call.1} parent=15 // pred_region
          %p983 = scmp.lt.s32.totalorder %s106, 1
          %s984 = scalar_select %p983, %s106, 1
          %s985 = smul.addr %s984, 2
          %s986 = smul.addr %s985, 8
          %s987 = scalar_lea.vmem %s3, %s986
        $region24: #{tpu_custom_call.1} parent=15 // pred_fallthru
          _
        // Predicated region
        $region25: #{tpu_custom_call.1} parent=15 // pred_check
          %p988 = pneg %p183
        $region26: #{tpu_custom_call.1} parent=15 // pred_check_branch
          %990 = sbr.rel (%p988) target = $region28
        $region27: #{tpu_custom_call.1} parent=15 // pred_region
          %s991 = sand.u32 %s99, 1
          %s992 = scalar_lea.sflag [#allocation7], %s991
          %s993 = sand.u32 %s173, 1
          %s994 = scalar_lea.vmem [#allocation6], %s993
          %s996 = ssub.s32 16, 16
          %997 = vsyncadd %s992, %s996
          %s998 = smul.addr %s106, 16
          %s999 = scalar_lea.hbm %s5, %s998
          %s1001 = sshll.u32 %s994, 4
          %s1002 = int_to_ptr.vmem [resolvable:$true] %s1001
          %1004 = dma.hbm_to_vmem [thread:$0]  %s999, 16, %s1002, %s992
        $region28: #{tpu_custom_call.1} parent=15 // pred_fallthru
          _
        // Predicated region
        $region29: #{tpu_custom_call.1} parent=15 // pred_check
          %p1005 = pneg %p209
        $region30: #{tpu_custom_call.1} parent=15 // pred_check_branch
          %1007 = sbr.rel (%p1005) target = $region32
        $region31: #{tpu_custom_call.1} parent=15 // pred_region
          %s1008 = sand.u32 %s99, 1
          %s1009 = scalar_lea.sflag [#allocation7], %s1008
          %s1010 = sand.u32 %s199, 1
          %s1011 = scalar_lea.vmem [#allocation8], %s1010
          %s1013 = ssub.s32 16, 16
          %1014 = vsyncadd %s1009, %s1013
          %s1015 = smul.addr %s106, 16
          %s1016 = scalar_lea.hbm %s7, %s1015
          %s1018 = sshll.u32 %s1011, 4
          %s1019 = int_to_ptr.vmem [resolvable:$true] %s1018
          %1021 = dma.hbm_to_vmem [thread:$0]  %s1016, 16, %s1019, %s1009
        $region32: #{tpu_custom_call.1} parent=15 // pred_fallthru
          _
        // Predicated region
        $region33: #{tpu_custom_call.1} parent=15 // pred_check
          %p1022 = pneg %p235
        $region34: #{tpu_custom_call.1} parent=15 // pred_check_branch
          %1024 = sbr.rel (%p1022) target = $region36
        $region35: #{tpu_custom_call.1} parent=15 // pred_region
          %p1025 = scmp.lt.s32.totalorder %s106, 1
          %s1026 = scalar_select %p1025, %s106, 1
          %s1027 = smul.addr %s1026, 8
          %s1028 = scalar_lea.vmem %s9, %s1027
        $region36: #{tpu_custom_call.1} parent=15 // pred_fallthru
          _
        // Predicated region
        $region37: #{tpu_custom_call.1} parent=15 // pred_check
          %p1029 = pneg %p261
        $region38: #{tpu_custom_call.1} parent=15 // pred_check_branch
          %1031 = sbr.rel (%p1029) target = $region40
        $region39: #{tpu_custom_call.1} parent=15 // pred_region
          %p1032 = scmp.lt.s32.totalorder %s107, 1
          %s1033 = scalar_select %p1032, %s107, 1
          %s1034 = smul.addr %s1033, 4
          %s1035 = smul.addr %s1034, 4
          %s1036 = scalar_lea.vmem %s11, %s1035
        $region40: #{tpu_custom_call.1} parent=15 // pred_fallthru
          _
        // Predicated region
        $region41: #{tpu_custom_call.1} parent=15 // pred_check
          %p1037 = pneg %p287
        $region42: #{tpu_custom_call.1} parent=15 // pred_check_branch
          %1039 = sbr.rel (%p1037) target = $region44
        $region43: #{tpu_custom_call.1} parent=15 // pred_region
          %s1040 = sand.u32 %s99, 1
          %s1041 = scalar_lea.sflag [#allocation10], %s1040
          %s1042 = sand.u32 %s277, 1
          %s1043 = scalar_lea.vmem [#allocation9], %s1042
          %s1045 = ssub.s32 16, 16
          %1046 = vsyncadd %s1041, %s1045
          %s1047 = smul.addr %s107, 16
          %s1048 = scalar_lea.hbm %s13, %s1047
          %s1050 = sshll.u32 %s1043, 4
          %s1051 = int_to_ptr.vmem [resolvable:$true] %s1050
          %1053 = dma.hbm_to_vmem [thread:$0]  %s1048, 16, %s1051, %s1041
        $region44: #{tpu_custom_call.1} parent=15 // pred_fallthru
          _
        // Predicated region
        $region45: #{tpu_custom_call.1} parent=15 // pred_check
          %p1054 = pneg %p313
        $region46: #{tpu_custom_call.1} parent=15 // pred_check_branch
          %1056 = sbr.rel (%p1054) target = $region48
        $region47: #{tpu_custom_call.1} parent=15 // pred_region
          %p1057 = scmp.lt.s32.totalorder %s107, 1
          %s1058 = scalar_select %p1057, %s107, 1
          %s1059 = smul.addr %s1058, 4
          %s1060 = smul.addr %s1059, 4
          %s1061 = scalar_lea.vmem %s15, %s1060
        $region48: #{tpu_custom_call.1} parent=15 // pred_fallthru
          _
        // Predicated region
        $region49: #{tpu_custom_call.1} parent=15 // pred_check
          %p1062 = pneg %p339
        $region50: #{tpu_custom_call.1} parent=15 // pred_check_branch
          %1064 = sbr.rel (%p1062) target = $region52
        $region51: #{tpu_custom_call.1} parent=15 // pred_region
          %s1065 = sand.u32 %s99, 1
          %s1066 = scalar_lea.sflag [#allocation10], %s1065
          %s1067 = sand.u32 %s329, 1
          %s1068 = scalar_lea.vmem [#allocation11], %s1067
          %s1070 = ssub.s32 16, 16
          %1071 = vsyncadd %s1066, %s1070
          %s1072 = smul.addr %s107, 16
          %s1073 = scalar_lea.hbm %s17, %s1072
          %s1075 = sshll.u32 %s1068, 4
          %s1076 = int_to_ptr.vmem [resolvable:$true] %s1075
          %1078 = dma.hbm_to_vmem [thread:$0]  %s1073, 16, %s1076, %s1066
        $region52: #{tpu_custom_call.1} parent=15 // pred_fallthru
          _
        // Predicated region
        $region53: #{tpu_custom_call.1} parent=15 // pred_check
          %p1079 = pneg %p365
        $region54: #{tpu_custom_call.1} parent=15 // pred_check_branch
          %1081 = sbr.rel (%p1079) target = $region56
        $region55: #{tpu_custom_call.1} parent=15 // pred_region
          %p1082 = scmp.lt.s32.totalorder %s107, 1
          %s1083 = scalar_select %p1082, %s107, 1
          %s1084 = smul.addr %s1083, 4
          %s1085 = smul.addr %s1084, 4
          %s1086 = scalar_lea.vmem %s19, %s1085
        $region56: #{tpu_custom_call.1} parent=15 // pred_fallthru
          _
        // Predicated region
        $region57: #{tpu_custom_call.1} parent=15 // pred_check
          %p1087 = pneg %p391
        $region58: #{tpu_custom_call.1} parent=15 // pred_check_branch
          %1089 = sbr.rel (%p1087) target = $region60
        $region59: #{tpu_custom_call.1} parent=15 // pred_region
          %s1090 = sand.u32 %s99, 1
          %s1091 = scalar_lea.sflag [#allocation13], %s1090
          %s1092 = sand.u32 %s381, 1
          %s1093 = scalar_lea.vmem [#allocation12], %s1092
          %s1095 = ssub.s32 16, 16
          %1096 = vsyncadd %s1091, %s1095
          %s1097 = smul.addr %s107, 16
          %s1098 = scalar_lea.hbm %s21, %s1097
          %s1100 = sshll.u32 %s1093, 4
          %s1101 = int_to_ptr.vmem [resolvable:$true] %s1100
          %1103 = dma.hbm_to_vmem [thread:$0]  %s1098, 16, %s1101, %s1091
        $region60: #{tpu_custom_call.1} parent=15 // pred_fallthru
          _
        // Predicated region
        $region61: #{tpu_custom_call.1} parent=15 // pred_check
          %p1104 = pneg %p417
        $region62: #{tpu_custom_call.1} parent=15 // pred_check_branch
          %1106 = sbr.rel (%p1104) target = $region64
        $region63: #{tpu_custom_call.1} parent=15 // pred_region
          %p1107 = scmp.lt.s32.totalorder %s107, 1
          %s1108 = scalar_select %p1107, %s107, 1
          %s1109 = smul.addr %s1108, 4
          %s1110 = smul.addr %s1109, 4
          %s1111 = scalar_lea.vmem %s23, %s1110
        $region64: #{tpu_custom_call.1} parent=15 // pred_fallthru
          _
        // Predicated region
        $region65: #{tpu_custom_call.1} parent=15 // pred_check
          %p1112 = pneg %p443
        $region66: #{tpu_custom_call.1} parent=15 // pred_check_branch
          %1114 = sbr.rel (%p1112) target = $region68
        $region67: #{tpu_custom_call.1} parent=15 // pred_region
          %s1115 = sand.u32 %s99, 1
          %s1116 = scalar_lea.sflag [#allocation13], %s1115
          %s1117 = sand.u32 %s433, 1
          %s1118 = scalar_lea.vmem [#allocation14], %s1117
          %s1120 = ssub.s32 16, 16
          %1121 = vsyncadd %s1116, %s1120
          %s1122 = smul.addr %s107, 16
          %s1123 = scalar_lea.hbm %s25, %s1122
          %s1125 = sshll.u32 %s1118, 4
          %s1126 = int_to_ptr.vmem [resolvable:$true] %s1125
          %1128 = dma.hbm_to_vmem [thread:$0]  %s1123, 16, %s1126, %s1116
        $region68: #{tpu_custom_call.1} parent=15 // pred_fallthru
          _
        // Predicated region
        $region69: #{tpu_custom_call.1} parent=15 // pred_check
          %p1129 = pneg %p469
        $region70: #{tpu_custom_call.1} parent=15 // pred_check_branch
          %1131 = sbr.rel (%p1129) target = $region72
        $region71: #{tpu_custom_call.1} parent=15 // pred_region
          %s1132 = sand.u32 %s99, 1
          %s1133 = scalar_lea.sflag [#allocation16], %s1132
          %s1134 = sand.u32 %s459, 1
          %s1135 = scalar_lea.vmem [#allocation15], %s1134
          %s1137 = ssub.s32 16, 16
          %1138 = vsyncadd %s1133, %s1137
          %s1139 = smul.addr %s107, 16
          %s1140 = scalar_lea.hbm %s27, %s1139
          %s1142 = sshll.u32 %s1135, 4
          %s1143 = int_to_ptr.vmem [resolvable:$true] %s1142
          %1145 = dma.hbm_to_vmem [thread:$0]  %s1140, 16, %s1143, %s1133
        $region72: #{tpu_custom_call.1} parent=15 // pred_fallthru
          _
        // Predicated region
        $region73: #{tpu_custom_call.1} parent=15 // pred_check
          %p1146 = pneg %p495
        $region74: #{tpu_custom_call.1} parent=15 // pred_check_branch
          %1148 = sbr.rel (%p1146) target = $region76
        $region75: #{tpu_custom_call.1} parent=15 // pred_region
          %s1149 = sand.u32 %s99, 1
          %s1150 = scalar_lea.sflag [#allocation16], %s1149
          %s1151 = sand.u32 %s485, 1
          %s1152 = scalar_lea.vmem [#allocation17], %s1151
          %s1154 = ssub.s32 16, 16
          %1155 = vsyncadd %s1150, %s1154
          %s1156 = smul.addr %s107, 16
          %s1157 = scalar_lea.hbm %s29, %s1156
          %s1159 = sshll.u32 %s1152, 4
          %s1160 = int_to_ptr.vmem [resolvable:$true] %s1159
          %1162 = dma.hbm_to_vmem [thread:$0]  %s1157, 16, %s1160, %s1150
        $region76: #{tpu_custom_call.1} parent=15 // pred_fallthru
          _
        // Predicated region
        $region77: #{tpu_custom_call.1} parent=15 // pred_check
          %p1163 = pneg %p521
        $region78: #{tpu_custom_call.1} parent=15 // pred_check_branch
          %1165 = sbr.rel (%p1163) target = $region80
        $region79: #{tpu_custom_call.1} parent=15 // pred_region
          %p1166 = scmp.lt.s32.totalorder %s107, 1
          %s1167 = scalar_select %p1166, %s107, 1
          %s1168 = smul.addr %s1167, 4
          %s1169 = smul.addr %s1168, 4
          %s1170 = scalar_lea.vmem %s31, %s1169
        $region80: #{tpu_custom_call.1} parent=15 // pred_fallthru
          _
        // Predicated region
        $region81: #{tpu_custom_call.1} parent=15 // pred_check
          %p1171 = pneg %p547
        $region82: #{tpu_custom_call.1} parent=15 // pred_check_branch
          %1173 = sbr.rel (%p1171) target = $region84
        $region83: #{tpu_custom_call.1} parent=15 // pred_region
          %s1174 = sand.u32 %s99, 1
          %s1175 = scalar_lea.sflag [#allocation19], %s1174
          %s1176 = sand.u32 %s537, 1
          %s1177 = scalar_lea.vmem [#allocation18], %s1176
          %s1179 = ssub.s32 16, 16
          %1180 = vsyncadd %s1175, %s1179
          %s1181 = smul.addr %s107, 16
          %s1182 = scalar_lea.hbm %s33, %s1181
          %s1184 = sshll.u32 %s1177, 4
          %s1185 = int_to_ptr.vmem [resolvable:$true] %s1184
          %1187 = dma.hbm_to_vmem [thread:$0]  %s1182, 16, %s1185, %s1175
        $region84: #{tpu_custom_call.1} parent=15 // pred_fallthru
          _
        // Predicated region
        $region85: #{tpu_custom_call.1} parent=15 // pred_check
          %p1188 = pneg %p573
        $region86: #{tpu_custom_call.1} parent=15 // pred_check_branch
          %1190 = sbr.rel (%p1188) target = $region88
        $region87: #{tpu_custom_call.1} parent=15 // pred_region
          %p1191 = scmp.lt.s32.totalorder %s107, 1
          %s1192 = scalar_select %p1191, %s107, 1
          %s1193 = smul.addr %s1192, 4
          %s1194 = smul.addr %s1193, 4
          %s1195 = scalar_lea.vmem %s35, %s1194
        $region88: #{tpu_custom_call.1} parent=15 // pred_fallthru
          _
        // Predicated region
        $region89: #{tpu_custom_call.1} parent=15 // pred_check
          %p1196 = pneg %p599
        $region90: #{tpu_custom_call.1} parent=15 // pred_check_branch
          %1198 = sbr.rel (%p1196) target = $region92
        $region91: #{tpu_custom_call.1} parent=15 // pred_region
          %s1199 = sand.u32 %s99, 1
          %s1200 = scalar_lea.sflag [#allocation19], %s1199
          %s1201 = sand.u32 %s589, 1
          %s1202 = scalar_lea.vmem [#allocation20], %s1201
          %s1204 = ssub.s32 16, 16
          %1205 = vsyncadd %s1200, %s1204
          %s1206 = smul.addr %s107, 16
          %s1207 = scalar_lea.hbm %s37, %s1206
          %s1209 = sshll.u32 %s1202, 4
          %s1210 = int_to_ptr.vmem [resolvable:$true] %s1209
          %1212 = dma.hbm_to_vmem [thread:$0]  %s1207, 16, %s1210, %s1200
        $region92: #{tpu_custom_call.1} parent=15 // pred_fallthru
          _
        // Predicated region
        $region93: #{tpu_custom_call.1} parent=15 // pred_check
          %p1213 = pneg %p625
        $region94: #{tpu_custom_call.1} parent=15 // pred_check_branch
          %1215 = sbr.rel (%p1213) target = $region96
        $region95: #{tpu_custom_call.1} parent=15 // pred_region
          %s1216 = sand.u32 %s99, 1
          %s1217 = scalar_lea.sflag [#allocation22], %s1216
          %s1218 = sand.u32 %s615, 1
          %s1219 = smul.addr %s1218, 16
          %s1220 = scalar_lea.vmem [#allocation21], %s1219
          %s1222 = ssub.s32 256, 256
          %1223 = vsyncadd %s1217, %s1222
          %s1224 = smul.addr %s107, 4
          %s1225 = smul.addr %s1224, 64
          %s1226 = scalar_lea.hbm %s39, %s1225
          %s1227 = sshll.u32 %s1220, 4
          %s1228 = int_to_ptr.vmem [resolvable:$true] %s1227
          %1233 = dma.hbm_to_vmem [thread:$0]  %s1226, 256, %s1228, %s1217, 64, 64, 4
        $region96: #{tpu_custom_call.1} parent=15 // pred_fallthru
          _
        // Predicated region
        $region97: #{tpu_custom_call.1} parent=15 // pred_check
          %p1234 = pneg %p651
        $region98: #{tpu_custom_call.1} parent=15 // pred_check_branch
          %1236 = sbr.rel (%p1234) target = $region100
        $region99: #{tpu_custom_call.1} parent=15 // pred_region
          %s1237 = sand.u32 %s99, 1
          %s1238 = scalar_lea.sflag [#allocation22], %s1237
          %s1239 = sand.u32 %s641, 1
          %s1240 = scalar_lea.vmem [#allocation23], %s1239
          %s1242 = ssub.s32 16, 16
          %1243 = vsyncadd %s1238, %s1242
          %s1244 = smul.addr %s107, 16
          %s1245 = scalar_lea.hbm %s41, %s1244
          %s1247 = sshll.u32 %s1240, 4
          %s1248 = int_to_ptr.vmem [resolvable:$true] %s1247
          %1250 = dma.hbm_to_vmem [thread:$0]  %s1245, 16, %s1248, %s1238
        $region100: #{tpu_custom_call.1} parent=15 // pred_fallthru
          _
        // Predicated region
        $region101: #{tpu_custom_call.1} parent=15 // pred_check
          %p1251 = pneg %p677
        $region102: #{tpu_custom_call.1} parent=15 // pred_check_branch
          %1253 = sbr.rel (%p1251) target = $region104
        $region103: #{tpu_custom_call.1} parent=15 // pred_region
          %s1254 = sand.u32 %s99, 1
          %s1255 = scalar_lea.sflag [#allocation25], %s1254
          %s1256 = sand.u32 %s667, 1
          %s1257 = smul.addr %s1256, 16
          %s1258 = scalar_lea.vmem [#allocation24], %s1257
          %s1260 = ssub.s32 256, 256
          %1261 = vsyncadd %s1255, %s1260
          %s1262 = smul.addr %s107, 4
          %s1263 = smul.addr %s1262, 64
          %s1264 = scalar_lea.hbm %s43, %s1263
          %s1265 = sshll.u32 %s1258, 4
          %s1266 = int_to_ptr.vmem [resolvable:$true] %s1265
          %1271 = dma.hbm_to_vmem [thread:$0]  %s1264, 256, %s1266, %s1255, 64, 64, 4
        $region104: #{tpu_custom_call.1} parent=15 // pred_fallthru
          _
        // Predicated region
        $region105: #{tpu_custom_call.1} parent=15 // pred_check
          %p1272 = pneg %p703
        $region106: #{tpu_custom_call.1} parent=15 // pred_check_branch
          %1274 = sbr.rel (%p1272) target = $region108
        $region107: #{tpu_custom_call.1} parent=15 // pred_region
          %s1275 = sand.u32 %s99, 1
          %s1276 = scalar_lea.sflag [#allocation25], %s1275
          %s1277 = sand.u32 %s693, 1
          %s1278 = scalar_lea.vmem [#allocation26], %s1277
          %s1280 = ssub.s32 16, 16
          %1281 = vsyncadd %s1276, %s1280
          %s1282 = smul.addr %s107, 16
          %s1283 = scalar_lea.hbm %s45, %s1282
          %s1285 = sshll.u32 %s1278, 4
          %s1286 = int_to_ptr.vmem [resolvable:$true] %s1285
          %1288 = dma.hbm_to_vmem [thread:$0]  %s1283, 16, %s1286, %s1276
        $region108: #{tpu_custom_call.1} parent=15 // pred_fallthru
          _
        // Predicated region
        $region109: #{tpu_custom_call.1} parent=15 // pred_check
          %p1289 = pneg %p729
        $region110: #{tpu_custom_call.1} parent=15 // pred_check_branch
          %1291 = sbr.rel (%p1289) target = $region112
        $region111: #{tpu_custom_call.1} parent=15 // pred_region
          %s1292 = sand.u32 %s99, 1
          %s1293 = scalar_lea.sflag [#allocation28], %s1292
          %s1294 = sand.u32 %s719, 1
          %s1295 = scalar_lea.vmem [#allocation27], %s1294
          %s1297 = ssub.s32 16, 16
          %1298 = vsyncadd %s1293, %s1297
          %s1299 = smul.addr %s107, 16
          %s1300 = scalar_lea.hbm %s47, %s1299
          %s1302 = sshll.u32 %s1295, 4
          %s1303 = int_to_ptr.vmem [resolvable:$true] %s1302
          %1305 = dma.hbm_to_vmem [thread:$0]  %s1300, 16, %s1303, %s1293
        $region112: #{tpu_custom_call.1} parent=15 // pred_fallthru
          _
        // Predicated region
        $region113: #{tpu_custom_call.1} parent=15 // pred_check
          %p1306 = pneg %p755
        $region114: #{tpu_custom_call.1} parent=15 // pred_check_branch
          %1308 = sbr.rel (%p1306) target = $region116
        $region115: #{tpu_custom_call.1} parent=15 // pred_region
          %s1309 = sand.u32 %s99, 1
          %s1310 = scalar_lea.sflag [#allocation28], %s1309
          %s1311 = sand.u32 %s745, 1
          %s1312 = scalar_lea.vmem [#allocation29], %s1311
          %s1314 = ssub.s32 16, 16
          %1315 = vsyncadd %s1310, %s1314
          %s1316 = smul.addr %s107, 16
          %s1317 = scalar_lea.hbm %s49, %s1316
          %s1319 = sshll.u32 %s1312, 4
          %s1320 = int_to_ptr.vmem [resolvable:$true] %s1319
          %1322 = dma.hbm_to_vmem [thread:$0]  %s1317, 16, %s1320, %s1310
        $region116: #{tpu_custom_call.1} parent=15 // pred_fallthru
          _
        // Predicated region
        $region117: #{tpu_custom_call.1} parent=15 // pred_check
          %p1323 = pneg %p781
        $region118: #{tpu_custom_call.1} parent=15 // pred_check_branch
          %1325 = sbr.rel (%p1323) target = $region120
        $region119: #{tpu_custom_call.1} parent=15 // pred_region
          %p1326 = scmp.lt.s32.totalorder %s107, 1
          %s1327 = scalar_select %p1326, %s107, 1
          %s1328 = smul.addr %s1327, 4
          %s1329 = smul.addr %s1328, 4
          %s1330 = scalar_lea.vmem %s51, %s1329
        $region120: #{tpu_custom_call.1} parent=15 // pred_fallthru
          _
        // Predicated region
        $region121: #{tpu_custom_call.1} parent=15 // pred_check
          %p1331 = pneg %p807
        $region122: #{tpu_custom_call.1} parent=15 // pred_check_branch
          %1333 = sbr.rel (%p1331) target = $region124
        $region123: #{tpu_custom_call.1} parent=15 // pred_region
          %p1334 = scmp.lt.s32.totalorder %s107, 1
          %s1335 = scalar_select %p1334, %s107, 1
          %s1336 = scalar_lea.vmem %s53, %s1335
        $region124: #{tpu_custom_call.1} parent=15 // pred_fallthru
          _
        // Predicated region
        $region125: #{tpu_custom_call.1} parent=15 // pred_check
          %p1337 = pneg %p833
        $region126: #{tpu_custom_call.1} parent=15 // pred_check_branch
          %1339 = sbr.rel (%p1337) target = $region128
        $region127: #{tpu_custom_call.1} parent=15 // pred_region
          %p1340 = scmp.lt.s32.totalorder %s107, 1
          %s1341 = scalar_select %p1340, %s107, 1
          %s1342 = smul.addr %s1341, 8
          %s1343 = smul.addr %s1342, 4
          %s1344 = scalar_lea.vmem %s55, %s1343
        $region128: #{tpu_custom_call.1} parent=15 // pred_fallthru
          _
        // Predicated region
        $region129: #{tpu_custom_call.1} parent=15 // pred_check
          %p1345 = pneg %p859
        $region130: #{tpu_custom_call.1} parent=15 // pred_check_branch
          %1347 = sbr.rel (%p1345) target = $region132
        $region131: #{tpu_custom_call.1} parent=15 // pred_region
          %p1348 = scmp.lt.s32.totalorder %s107, 1
          %s1349 = scalar_select %p1348, %s107, 1
          %s1350 = scalar_lea.vmem %s57, %s1349
        $region132: #{tpu_custom_call.1} parent=15 // pred_fallthru
          _
        // Predicated region
        $region133: #{tpu_custom_call.1} parent=15 // pred_check
          %p1351 = pneg %p885
        $region134: #{tpu_custom_call.1} parent=15 // pred_check_branch
          %1353 = sbr.rel (%p1351) target = $region136
        $region135: #{tpu_custom_call.1} parent=15 // pred_region
          %p1354 = scmp.lt.s32.totalorder %s107, 1
          %s1355 = scalar_select %p1354, %s107, 1
          %s1356 = scalar_lea.vmem %s59, %s1355
        $region136: #{tpu_custom_call.1} parent=15 // pred_fallthru
          _
        // Predicated region
        $region137: #{tpu_custom_call.1} parent=15 // pred_check
          %p1357 = pneg %p911
        $region138: #{tpu_custom_call.1} parent=15 // pred_check_branch
          %1359 = sbr.rel (%p1357) target = $region140
        $region139: #{tpu_custom_call.1} parent=15 // pred_region
          %p1360 = scmp.lt.s32.totalorder %s107, 1
          %s1361 = scalar_select %p1360, %s107, 1
          %s1362 = scalar_lea.vmem %s61, %s1361
        $region140: #{tpu_custom_call.1} parent=15 // pred_fallthru
          _
      $region16: #{tpu_custom_call.1} parent=5 // pred_fallthru
        _
      %p1363 = scmp.le.s32.totalorder 1, %s99
      %p1364 = scmp.lt.s32.totalorder %s99, 5
      %p1365 = pnand %p1363, %p1364
      %p1366 = pneg %p1365
      // Predicated region
      $region141: #{tpu_custom_call.1} parent=5 // pred_check
        _
      $region142: #{tpu_custom_call.1} parent=5 // pred_check_branch
        %1368 = sbr.rel (%p1365) target = $region144
      $region143: #{tpu_custom_call.1} parent=5 // pred_region
        %s1369 = ssub.s32 %s99, 1
        %s1370 = sand.u32 %s124, 1
        %s1371 = scalar_lea.sflag [#allocation4], %s1370
        %s1372 = sand.u32 %s124, 1
        %s1373 = smul.addr %s1372, 8
        %s1374 = scalar_lea.vmem [#allocation3], %s1373
        // Predicated region
        $region145: #{tpu_custom_call.1} parent=143 // pred_check
          %p1375 = pneg %p137
        $region146: #{tpu_custom_call.1} parent=143 // pred_check_branch
          %1377 = sbr.rel (%p1375) target = $region148
        $region147: #{tpu_custom_call.1} parent=143 // pred_region
          %1378 = dma.done %s1371, 128
        $region148: #{tpu_custom_call.1} parent=143 // pred_fallthru
          _
        %s1379 = sand.u32 %s104, 1
        %s1380 = scalar_lea.sflag [#allocation7], %s1379
        %s1381 = sand.u32 %s176, 1
        %s1382 = scalar_lea.vmem [#allocation6], %s1381
        // Predicated region
        $region149: #{tpu_custom_call.1} parent=143 // pred_check
          %p1383 = pneg %p189
        $region150: #{tpu_custom_call.1} parent=143 // pred_check_branch
          %1385 = sbr.rel (%p1383) target = $region152
        $region151: #{tpu_custom_call.1} parent=143 // pred_region
          %1386 = dma.done %s1380, 16
        $region152: #{tpu_custom_call.1} parent=143 // pred_fallthru
          _
        %s1387 = sand.u32 %s104, 1
        %s1388 = scalar_lea.sflag [#allocation7], %s1387
        %s1389 = sand.u32 %s202, 1
        %s1390 = scalar_lea.vmem [#allocation8], %s1389
        // Predicated region
        $region153: #{tpu_custom_call.1} parent=143 // pred_check
          %p1391 = pneg %p215
        $region154: #{tpu_custom_call.1} parent=143 // pred_check_branch
          %1393 = sbr.rel (%p1391) target = $region156
        $region155: #{tpu_custom_call.1} parent=143 // pred_region
          %1394 = dma.done %s1388, 16
        $region156: #{tpu_custom_call.1} parent=143 // pred_fallthru
          _
        %s1395 = sand.u32 %s104, 1
        %s1396 = scalar_lea.sflag [#allocation10], %s1395
        %s1397 = sand.u32 %s280, 1
        %s1398 = scalar_lea.vmem [#allocation9], %s1397
        // Predicated region
        $region157: #{tpu_custom_call.1} parent=143 // pred_check
          %p1399 = pneg %p293
        $region158: #{tpu_custom_call.1} parent=143 // pred_check_branch
          %1401 = sbr.rel (%p1399) target = $region160
        $region159: #{tpu_custom_call.1} parent=143 // pred_region
          %1402 = dma.done %s1396, 16
        $region160: #{tpu_custom_call.1} parent=143 // pred_fallthru
          _
        %s1403 = sand.u32 %s104, 1
        %s1404 = scalar_lea.sflag [#allocation10], %s1403
        %s1405 = sand.u32 %s332, 1
        %s1406 = scalar_lea.vmem [#allocation11], %s1405
        // Predicated region
        $region161: #{tpu_custom_call.1} parent=143 // pred_check
          %p1407 = pneg %p345
        $region162: #{tpu_custom_call.1} parent=143 // pred_check_branch
          %1409 = sbr.rel (%p1407) target = $region164
        $region163: #{tpu_custom_call.1} parent=143 // pred_region
          %1410 = dma.done %s1404, 16
        $region164: #{tpu_custom_call.1} parent=143 // pred_fallthru
          _
        %s1411 = sand.u32 %s104, 1
        %s1412 = scalar_lea.sflag [#allocation13], %s1411
        %s1413 = sand.u32 %s384, 1
        %s1414 = scalar_lea.vmem [#allocation12], %s1413
        // Predicated region
        $region165: #{tpu_custom_call.1} parent=143 // pred_check
          %p1415 = pneg %p397
        $region166: #{tpu_custom_call.1} parent=143 // pred_check_branch
          %1417 = sbr.rel (%p1415) target = $region168
        $region167: #{tpu_custom_call.1} parent=143 // pred_region
          %1418 = dma.done %s1412, 16
        $region168: #{tpu_custom_call.1} parent=143 // pred_fallthru
          _
        %s1419 = sand.u32 %s104, 1
        %s1420 = scalar_lea.sflag [#allocation13], %s1419
        %s1421 = sand.u32 %s436, 1
        %s1422 = scalar_lea.vmem [#allocation14], %s1421
        // Predicated region
        $region169: #{tpu_custom_call.1} parent=143 // pred_check
          %p1423 = pneg %p449
        $region170: #{tpu_custom_call.1} parent=143 // pred_check_branch
          %1425 = sbr.rel (%p1423) target = $region172
        $region171: #{tpu_custom_call.1} parent=143 // pred_region
          %1426 = dma.done %s1420, 16
        $region172: #{tpu_custom_call.1} parent=143 // pred_fallthru
          _
        %s1427 = sand.u32 %s104, 1
        %s1428 = scalar_lea.sflag [#allocation16], %s1427
        %s1429 = sand.u32 %s462, 1
        %s1430 = scalar_lea.vmem [#allocation15], %s1429
        // Predicated region
        $region173: #{tpu_custom_call.1} parent=143 // pred_check
          %p1431 = pneg %p475
        $region174: #{tpu_custom_call.1} parent=143 // pred_check_branch
          %1433 = sbr.rel (%p1431) target = $region176
        $region175: #{tpu_custom_call.1} parent=143 // pred_region
          %1434 = dma.done %s1428, 16
        $region176: #{tpu_custom_call.1} parent=143 // pred_fallthru
          _
        %s1435 = sand.u32 %s104, 1
        %s1436 = scalar_lea.sflag [#allocation16], %s1435
        %s1437 = sand.u32 %s488, 1
        %s1438 = scalar_lea.vmem [#allocation17], %s1437
        // Predicated region
        $region177: #{tpu_custom_call.1} parent=143 // pred_check
          %p1439 = pneg %p501
        $region178: #{tpu_custom_call.1} parent=143 // pred_check_branch
          %1441 = sbr.rel (%p1439) target = $region180
        $region179: #{tpu_custom_call.1} parent=143 // pred_region
          %1442 = dma.done %s1436, 16
        $region180: #{tpu_custom_call.1} parent=143 // pred_fallthru
          _
        %s1443 = sand.u32 %s104, 1
        %s1444 = scalar_lea.sflag [#allocation19], %s1443
        %s1445 = sand.u32 %s540, 1
        %s1446 = scalar_lea.vmem [#allocation18], %s1445
        // Predicated region
        $region181: #{tpu_custom_call.1} parent=143 // pred_check
          %p1447 = pneg %p553
        $region182: #{tpu_custom_call.1} parent=143 // pred_check_branch
          %1449 = sbr.rel (%p1447) target = $region184
        $region183: #{tpu_custom_call.1} parent=143 // pred_region
          %1450 = dma.done %s1444, 16
        $region184: #{tpu_custom_call.1} parent=143 // pred_fallthru
          _
        %s1451 = sand.u32 %s104, 1
        %s1452 = scalar_lea.sflag [#allocation19], %s1451
        %s1453 = sand.u32 %s592, 1
        %s1454 = scalar_lea.vmem [#allocation20], %s1453
        // Predicated region
        $region185: #{tpu_custom_call.1} parent=143 // pred_check
          %p1455 = pneg %p605
        $region186: #{tpu_custom_call.1} parent=143 // pred_check_branch
          %1457 = sbr.rel (%p1455) target = $region188
        $region187: #{tpu_custom_call.1} parent=143 // pred_region
          %1458 = dma.done %s1452, 16
        $region188: #{tpu_custom_call.1} parent=143 // pred_fallthru
          _
        %s1459 = sand.u32 %s104, 1
        %s1460 = scalar_lea.sflag [#allocation22], %s1459
        %s1461 = sand.u32 %s618, 1
        %s1462 = smul.addr %s1461, 16
        %s1463 = scalar_lea.vmem [#allocation21], %s1462
        // Predicated region
        $region189: #{tpu_custom_call.1} parent=143 // pred_check
          %p1464 = pneg %p631
        $region190: #{tpu_custom_call.1} parent=143 // pred_check_branch
          %1466 = sbr.rel (%p1464) target = $region192
        $region191: #{tpu_custom_call.1} parent=143 // pred_region
          %1467 = dma.done %s1460, 256
        $region192: #{tpu_custom_call.1} parent=143 // pred_fallthru
          _
        %s1468 = sand.u32 %s104, 1
        %s1469 = scalar_lea.sflag [#allocation22], %s1468
        %s1470 = sand.u32 %s644, 1
        %s1471 = scalar_lea.vmem [#allocation23], %s1470
        // Predicated region
        $region193: #{tpu_custom_call.1} parent=143 // pred_check
          %p1472 = pneg %p657
        $region194: #{tpu_custom_call.1} parent=143 // pred_check_branch
          %1474 = sbr.rel (%p1472) target = $region196
        $region195: #{tpu_custom_call.1} parent=143 // pred_region
          %1475 = dma.done %s1469, 16
        $region196: #{tpu_custom_call.1} parent=143 // pred_fallthru
          _
        %s1476 = sand.u32 %s104, 1
        %s1477 = scalar_lea.sflag [#allocation25], %s1476
        %s1478 = sand.u32 %s670, 1
        %s1479 = smul.addr %s1478, 16
        %s1480 = scalar_lea.vmem [#allocation24], %s1479
        // Predicated region
        $region197: #{tpu_custom_call.1} parent=143 // pred_check
          %p1481 = pneg %p683
        $region198: #{tpu_custom_call.1} parent=143 // pred_check_branch
          %1483 = sbr.rel (%p1481) target = $region200
        $region199: #{tpu_custom_call.1} parent=143 // pred_region
          %1484 = dma.done %s1477, 256
        $region200: #{tpu_custom_call.1} parent=143 // pred_fallthru
          _
        %s1485 = sand.u32 %s104, 1
        %s1486 = scalar_lea.sflag [#allocation25], %s1485
        %s1487 = sand.u32 %s696, 1
        %s1488 = scalar_lea.vmem [#allocation26], %s1487
        // Predicated region
        $region201: #{tpu_custom_call.1} parent=143 // pred_check
          %p1489 = pneg %p709
        $region202: #{tpu_custom_call.1} parent=143 // pred_check_branch
          %1491 = sbr.rel (%p1489) target = $region204
        $region203: #{tpu_custom_call.1} parent=143 // pred_region
          %1492 = dma.done %s1486, 16
        $region204: #{tpu_custom_call.1} parent=143 // pred_fallthru
          _
        %s1493 = sand.u32 %s104, 1
        %s1494 = scalar_lea.sflag [#allocation28], %s1493
        %s1495 = sand.u32 %s722, 1
        %s1496 = scalar_lea.vmem [#allocation27], %s1495
        // Predicated region
        $region205: #{tpu_custom_call.1} parent=143 // pred_check
          %p1497 = pneg %p735
        $region206: #{tpu_custom_call.1} parent=143 // pred_check_branch
          %1499 = sbr.rel (%p1497) target = $region208
        $region207: #{tpu_custom_call.1} parent=143 // pred_region
          %1500 = dma.done %s1494, 16
        $region208: #{tpu_custom_call.1} parent=143 // pred_fallthru
          _
        %s1501 = sand.u32 %s104, 1
        %s1502 = scalar_lea.sflag [#allocation28], %s1501
        %s1503 = sand.u32 %s748, 1
        %s1504 = scalar_lea.vmem [#allocation29], %s1503
        // Predicated region
        $region209: #{tpu_custom_call.1} parent=143 // pred_check
          %p1505 = pneg %p761
        $region210: #{tpu_custom_call.1} parent=143 // pred_check_branch
          %1507 = sbr.rel (%p1505) target = $region212
        $region211: #{tpu_custom_call.1} parent=143 // pred_region
          %1508 = dma.done %s1502, 16
        $region212: #{tpu_custom_call.1} parent=143 // pred_fallthru
          _
        %s1509 = sand.u32 %s124, 1
        %s1510 = scalar_lea.sflag [#allocation4], %s1509
        %s1511 = sand.u32 %s124, 1
        %s1512 = smul.addr %s1511, 8
        %s1513 = scalar_lea.vmem [#allocation3], %s1512
        %p1514 = pneg %p137
        %p1515 = pneg %p134
        %p1516 = scmp.lt.s32.totalorder %s108, 1
        %s1517 = scalar_select %p1516, %s108, 1
        %s1518 = smul.addr %s1517, 2
        %s1519 = smul.addr %s1518, 8
        %s1520 = scalar_lea.vmem %s3, %s1519
        %p1521 = pneg %p163
        %p1522 = pneg %p160
        %s1523 = sand.u32 %s104, 1
        %s1524 = scalar_lea.sflag [#allocation7], %s1523
        %s1525 = sand.u32 %s176, 1
        %s1526 = scalar_lea.vmem [#allocation6], %s1525
        %p1527 = pneg %p189
        %p1528 = pneg %p186
        %s1529 = sand.u32 %s104, 1
        %s1530 = scalar_lea.sflag [#allocation7], %s1529
        %s1531 = sand.u32 %s202, 1
        %s1532 = scalar_lea.vmem [#allocation8], %s1531
        %p1533 = pneg %p215
        %p1534 = pneg %p212
        %p1535 = scmp.lt.s32.totalorder %s108, 1
        %s1536 = scalar_select %p1535, %s108, 1
        %s1537 = smul.addr %s1536, 8
        %s1538 = scalar_lea.vmem %s9, %s1537
        %p1539 = pneg %p241
        %p1540 = pneg %p238
        %p1541 = scmp.lt.s32.totalorder %s109, 1
        %s1542 = scalar_select %p1541, %s109, 1
        %s1543 = smul.addr %s1542, 4
        %s1544 = smul.addr %s1543, 4
        %s1545 = scalar_lea.vmem %s11, %s1544
        %p1546 = pneg %p267
        %p1547 = pneg %p264
        %s1548 = sand.u32 %s104, 1
        %s1549 = scalar_lea.sflag [#allocation10], %s1548
        %s1550 = sand.u32 %s280, 1
        %s1551 = scalar_lea.vmem [#allocation9], %s1550
        %p1552 = pneg %p293
        %p1553 = pneg %p290
        %p1554 = scmp.lt.s32.totalorder %s109, 1
        %s1555 = scalar_select %p1554, %s109, 1
        %s1556 = smul.addr %s1555, 4
        %s1557 = smul.addr %s1556, 4
        %s1558 = scalar_lea.vmem %s15, %s1557
        %p1559 = pneg %p319
        %p1560 = pneg %p316
        %s1561 = sand.u32 %s104, 1
        %s1562 = scalar_lea.sflag [#allocation10], %s1561
        %s1563 = sand.u32 %s332, 1
        %s1564 = scalar_lea.vmem [#allocation11], %s1563
        %p1565 = pneg %p345
        %p1566 = pneg %p342
        %p1567 = scmp.lt.s32.totalorder %s109, 1
        %s1568 = scalar_select %p1567, %s109, 1
        %s1569 = smul.addr %s1568, 4
        %s1570 = smul.addr %s1569, 4
        %s1571 = scalar_lea.vmem %s19, %s1570
        %p1572 = pneg %p371
        %p1573 = pneg %p368
        %s1574 = sand.u32 %s104, 1
        %s1575 = scalar_lea.sflag [#allocation13], %s1574
        %s1576 = sand.u32 %s384, 1
        %s1577 = scalar_lea.vmem [#allocation12], %s1576
        %p1578 = pneg %p397
        %p1579 = pneg %p394
        %p1580 = scmp.lt.s32.totalorder %s109, 1
        %s1581 = scalar_select %p1580, %s109, 1
        %s1582 = smul.addr %s1581, 4
        %s1583 = smul.addr %s1582, 4
        %s1584 = scalar_lea.vmem %s23, %s1583
        %p1585 = pneg %p423
        %p1586 = pneg %p420
        %s1587 = sand.u32 %s104, 1
        %s1588 = scalar_lea.sflag [#allocation13], %s1587
        %s1589 = sand.u32 %s436, 1
        %s1590 = scalar_lea.vmem [#allocation14], %s1589
        %p1591 = pneg %p449
        %p1592 = pneg %p446
        %s1593 = sand.u32 %s104, 1
        %s1594 = scalar_lea.sflag [#allocation16], %s1593
        %s1595 = sand.u32 %s462, 1
        %s1596 = scalar_lea.vmem [#allocation15], %s1595
        %p1597 = pneg %p475
        %p1598 = pneg %p472
        %s1599 = sand.u32 %s104, 1
        %s1600 = scalar_lea.sflag [#allocation16], %s1599
        %s1601 = sand.u32 %s488, 1
        %s1602 = scalar_lea.vmem [#allocation17], %s1601
        %p1603 = pneg %p501
        %p1604 = pneg %p498
        %p1605 = scmp.lt.s32.totalorder %s109, 1
        %s1606 = scalar_select %p1605, %s109, 1
        %s1607 = smul.addr %s1606, 4
        %s1608 = smul.addr %s1607, 4
        %s1609 = scalar_lea.vmem %s31, %s1608
        %p1610 = pneg %p527
        %p1611 = pneg %p524
        %s1612 = sand.u32 %s104, 1
        %s1613 = scalar_lea.sflag [#allocation19], %s1612
        %s1614 = sand.u32 %s540, 1
        %s1615 = scalar_lea.vmem [#allocation18], %s1614
        %p1616 = pneg %p553
        %p1617 = pneg %p550
        %p1618 = scmp.lt.s32.totalorder %s109, 1
        %s1619 = scalar_select %p1618, %s109, 1
        %s1620 = smul.addr %s1619, 4
        %s1621 = smul.addr %s1620, 4
        %s1622 = scalar_lea.vmem %s35, %s1621
        %p1623 = pneg %p579
        %p1624 = pneg %p576
        %s1625 = sand.u32 %s104, 1
        %s1626 = scalar_lea.sflag [#allocation19], %s1625
        %s1627 = sand.u32 %s592, 1
        %s1628 = scalar_lea.vmem [#allocation20], %s1627
        %p1629 = pneg %p605
        %p1630 = pneg %p602
        %s1631 = sand.u32 %s104, 1
        %s1632 = scalar_lea.sflag [#allocation22], %s1631
        %s1633 = sand.u32 %s618, 1
        %s1634 = smul.addr %s1633, 16
        %s1635 = scalar_lea.vmem [#allocation21], %s1634
        %p1636 = pneg %p631
        %p1637 = pneg %p628
        %s1638 = sand.u32 %s104, 1
        %s1639 = scalar_lea.sflag [#allocation22], %s1638
        %s1640 = sand.u32 %s644, 1
        %s1641 = scalar_lea.vmem [#allocation23], %s1640
        %p1642 = pneg %p657
        %p1643 = pneg %p654
        %s1644 = sand.u32 %s104, 1
        %s1645 = scalar_lea.sflag [#allocation25], %s1644
        %s1646 = sand.u32 %s670, 1
        %s1647 = smul.addr %s1646, 16
        %s1648 = scalar_lea.vmem [#allocation24], %s1647
        %p1649 = pneg %p683
        %p1650 = pneg %p680
        %s1651 = sand.u32 %s104, 1
        %s1652 = scalar_lea.sflag [#allocation25], %s1651
        %s1653 = sand.u32 %s696, 1
        %s1654 = scalar_lea.vmem [#allocation26], %s1653
        %p1655 = pneg %p709
        %p1656 = pneg %p706
        %s1657 = sand.u32 %s104, 1
        %s1658 = scalar_lea.sflag [#allocation28], %s1657
        %s1659 = sand.u32 %s722, 1
        %s1660 = scalar_lea.vmem [#allocation27], %s1659
        %p1661 = pneg %p735
        %p1662 = pneg %p732
        %s1663 = sand.u32 %s104, 1
        %s1664 = scalar_lea.sflag [#allocation28], %s1663
        %s1665 = sand.u32 %s748, 1
        %s1666 = scalar_lea.vmem [#allocation29], %s1665
        %p1667 = pneg %p761
        %p1668 = pneg %p758
        %p1669 = scmp.lt.s32.totalorder %s109, 1
        %s1670 = scalar_select %p1669, %s109, 1
        %s1671 = smul.addr %s1670, 4
        %s1672 = smul.addr %s1671, 4
        %s1673 = scalar_lea.vmem %s51, %s1672
        %p1674 = pneg %p787
        %p1675 = pneg %p784
        %p1676 = scmp.lt.s32.totalorder %s109, 1
        %s1677 = scalar_select %p1676, %s109, 1
        %s1678 = scalar_lea.vmem %s53, %s1677
        %p1679 = pneg %p813
        %p1680 = pneg %p810
        %p1681 = scmp.lt.s32.totalorder %s109, 1
        %s1682 = scalar_select %p1681, %s109, 1
        %s1683 = smul.addr %s1682, 8
        %s1684 = smul.addr %s1683, 4
        %s1685 = scalar_lea.vmem %s55, %s1684
        %p1686 = pneg %p839
        %p1687 = pneg %p836
        %p1688 = scmp.lt.s32.totalorder %s109, 1
        %s1689 = scalar_select %p1688, %s109, 1
        %s1690 = scalar_lea.vmem %s57, %s1689
        %p1691 = pneg %p865
        %p1692 = pneg %p862
        %p1693 = scmp.lt.s32.totalorder %s109, 1
        %s1694 = scalar_select %p1693, %s109, 1
        %s1695 = scalar_lea.vmem %s59, %s1694
        %p1696 = pneg %p891
        %p1697 = pneg %p888
        %p1698 = scmp.lt.s32.totalorder %s109, 1
        %s1699 = scalar_select %p1698, %s109, 1
        %s1700 = scalar_lea.vmem %s61, %s1699
        %p1701 = pneg %p917
        %p1702 = pneg %p914
        %p1703 = pneg %p943
        %p1704 = pneg %p940
        %s1705 = sand.u32 %s930, 1
        %s1706 = scalar_lea.sflag [#allocation5], %s1705
        %s1707 = sand.u32 %s930, 1
        %s1708 = smul.addr %s1707, 8
        %s1709 = scalar_lea.vmem [#allocation30], %s1708
        %p1710 = scmp.lt.s32.totalorder %s108, 1
        %s1711 = scalar_select %p1710, %s108, 1
        %s1712 = smul.addr %s1711, 2
        %s1713 = smul.addr %s1712, 8
        %s1714 = scalar_lea.vmem %s3, %s1713
        %p1715 = scmp.lt.s32.totalorder %s108, 1
        %s1716 = scalar_select %p1715, %s108, 1
        %s1717 = smul.addr %s1716, 8
        %s1718 = scalar_lea.vmem %s9, %s1717
        %p1719 = scmp.lt.s32.totalorder %s109, 1
        %s1720 = scalar_select %p1719, %s109, 1
        %s1721 = smul.addr %s1720, 4
        %s1722 = smul.addr %s1721, 4
        %s1723 = scalar_lea.vmem %s11, %s1722
        %p1724 = scmp.lt.s32.totalorder %s109, 1
        %s1725 = scalar_select %p1724, %s109, 1
        %s1726 = smul.addr %s1725, 4
        %s1727 = smul.addr %s1726, 4
        %s1728 = scalar_lea.vmem %s15, %s1727
        %p1729 = scmp.lt.s32.totalorder %s109, 1
        %s1730 = scalar_select %p1729, %s109, 1
        %s1731 = smul.addr %s1730, 4
        %s1732 = smul.addr %s1731, 4
        %s1733 = scalar_lea.vmem %s19, %s1732
        %p1734 = scmp.lt.s32.totalorder %s109, 1
        %s1735 = scalar_select %p1734, %s109, 1
        %s1736 = smul.addr %s1735, 4
        %s1737 = smul.addr %s1736, 4
        %s1738 = scalar_lea.vmem %s23, %s1737
        %p1739 = scmp.lt.s32.totalorder %s109, 1
        %s1740 = scalar_select %p1739, %s109, 1
        %s1741 = smul.addr %s1740, 4
        %s1742 = smul.addr %s1741, 4
        %s1743 = scalar_lea.vmem %s31, %s1742
        %p1744 = scmp.lt.s32.totalorder %s109, 1
        %s1745 = scalar_select %p1744, %s109, 1
        %s1746 = smul.addr %s1745, 4
        %s1747 = smul.addr %s1746, 4
        %s1748 = scalar_lea.vmem %s35, %s1747
        %p1749 = scmp.lt.s32.totalorder %s109, 1
        %s1750 = scalar_select %p1749, %s109, 1
        %s1751 = smul.addr %s1750, 4
        %s1752 = smul.addr %s1751, 4
        %s1753 = scalar_lea.vmem %s51, %s1752
        %p1754 = scmp.lt.s32.totalorder %s109, 1
        %s1755 = scalar_select %p1754, %s109, 1
        %s1756 = scalar_lea.vmem %s53, %s1755
        %p1757 = scmp.lt.s32.totalorder %s109, 1
        %s1758 = scalar_select %p1757, %s109, 1
        %s1759 = smul.addr %s1758, 8
        %s1760 = smul.addr %s1759, 4
        %s1761 = scalar_lea.vmem %s55, %s1760
        %p1762 = scmp.lt.s32.totalorder %s109, 1
        %s1763 = scalar_select %p1762, %s109, 1
        %s1764 = scalar_lea.vmem %s57, %s1763
        %p1765 = scmp.lt.s32.totalorder %s109, 1
        %s1766 = scalar_select %p1765, %s109, 1
        %s1767 = scalar_lea.vmem %s59, %s1766
        %p1768 = scmp.lt.s32.totalorder %s109, 1
        %s1769 = scalar_select %p1768, %s109, 1
        %s1770 = scalar_lea.vmem %s61, %s1769
        %p1772 = scmp.eq.s32.totalorder %s109, 0
        // Predicated region
        $region213: #{tpu_custom_call.1} parent=143 // pred_check
          %p1773 = pneg %p1772
        $region214: #{tpu_custom_call.1} parent=143 // pred_check_branch
          %1775 = sbr.rel (%p1773) target = $region216
        $region215: #{tpu_custom_call.1} parent=143 // pred_region
          %v1776 = vld [vmem:[%s1374] sm:$0xff]
          %vm1777 = vcmask 261120
          %1778 = vst.msk [vmem:[#allocation2] sm:$0xff] %vm1777, %v1776
        $region216: #{tpu_custom_call.1} parent=143 // pred_fallthru
          _
        %v1779 = vld [vmem:[#allocation2] sm:$0xff]
        %v1780 = vld [vmem:[%s1714] sm:$0xff]
        %v1781 = vld [vmem:[%s1714 + $0x8] sm:$0x3]
        %v1782 = vld [vmem:[%s1382] sm:$0x1]
        %v1783 = vld [vmem:[%s1390] sm:$0x1]
        %v1784 = vld [vmem:[%s1718] sm:$0xff]
        %v1785 = vlaneseq
        %v1786 = vshrl.u32 %v1785, 7
        %v1787 = vlaneseq
        %v1788 = vand.u32 %v1787, 127
        %vm1789 = vcmp.le.s32.totalorder %v1788, %v1786
        %vm1790 = vcmp.gt.f32.partialorder %v1782, 0.5
        %v1791 = vsel %vm1790, 1, 0
        %v1792 = vlaneseq
        %v1793 = vshrl.u32 %v1792, 7
        %v1794 = vsub.s32 0, %v1793
        %v1795 = vrot.slane %v1791, %v1794
        %vm1796 = vcmp.eq.s32.totalorder %v1795, 1
        %vm1797 = vmand %vm1789, %vm1796
        %v1798 = vsel %vm1797, 0.0, -1e+09
        %vm1799 = vcmp.gt.f32.partialorder %v1783, 0.5
        %v1800 = vsel %vm1799, 0.0, -1e+09
        %v1801 = vld [vmem:[%s1723] sm:$0xf]
        %v1802 = vld [vmem:[%s1723 + $0x4] sm:$0xf]
        %v1803 = vld [vmem:[%s1723 + $0x8] sm:$0xf]
        %v1804 = vld [vmem:[%s1723 + $0xc] sm:$0xf]
        %v1805 = vld [vmem:[%s1398] sm:$0x1]
        %v1806 = vld [vmem:[%s1728] sm:$0xf]
        %v1807 = vld [vmem:[%s1728 + $0x4] sm:$0xf]
        %v1808 = vld [vmem:[%s1728 + $0x8] sm:$0xf]
        %v1809 = vld [vmem:[%s1728 + $0xc] sm:$0xf]
        %v1810 = vld [vmem:[%s1406] sm:$0x1]
        %v1811 = vld [vmem:[%s1733] sm:$0xf]
        %v1812 = vld [vmem:[%s1733 + $0x4] sm:$0xf]
        %v1813 = vld [vmem:[%s1733 + $0x8] sm:$0xf]
        %v1814 = vld [vmem:[%s1733 + $0xc] sm:$0xf]
        %v1815 = vld [vmem:[%s1414] sm:$0x1]
        %v1816 = vld [vmem:[%s1738] sm:$0xf]
        %v1817 = vld [vmem:[%s1738 + $0x4] sm:$0xf]
        %v1818 = vld [vmem:[%s1738 + $0x8] sm:$0xf]
        %v1819 = vld [vmem:[%s1738 + $0xc] sm:$0xf]
        %v1820 = vld [vmem:[%s1422] sm:$0x1]
        %v1821 = vld [vmem:[%s1430] sm:$0x1]
        %v1822 = vld [vmem:[%s1438] sm:$0x1]
        %v1823 = vpack.c.bf16 %v1779, %v1779
        %v1825 = vlaneseq
        %v1826 = vshrl.u32 %v1825, 7
        %v1827 = vsub.s32 0, %v1826
        %v1828 = vrot.slane %v1805, %v1827
        %v1834 = vunpack.c.l.b16 %v1801
        %v1835 = vunpack.c.l.b16 %v1802
        %v1836 = vunpack.c.l.b16 %v1803
        %v1837 = vunpack.c.l.b16 %v1804
        %v1838 = vpack.c.b16 %v1835, %v1834
        %v1839 = vpack.c.b16 %v1837, %v1836
        %vm1842 = vcmask 261120
        %v1844 = vsel %vm1842, %v1823, 0
        %1846 = vmatprep.subr.bf16.mxu0 0
        %1847 = vmatpush1.bf16.msra.mxu0 %v1838
        %1848 = vmatprep.subr.bf16.mxu0 0
        %1849 = vmatpush1.bf16.msra.mxu0 %v1839
        %1850 = vmatprep.subr.bf16.mxu0 0
        %1851 = vmatpush1.bf16.msra.mxu0 0
        %1852 = vmatprep.subr.bf16.mxu0 0
        %1853 = vmatpush1.bf16.msra.mxu0 0
        %1854 = vmatprep.subr.bf16.mxu0 0
        %1855 = vmatpush1.bf16.msra.mxu0 0
        %1856 = vmatprep.subr.bf16.mxu0 0
        %1857 = vmatpush1.bf16.msra.mxu0 0
        %1858 = vmatprep.subr.bf16.mxu0 0
        %1859 = vmatpush1.bf16.msra.mxu0 0
        %1860 = vmatprep.subr.bf16.mxu0 0
        %1861 = vmatpush1.bf16.msra.mxu0 0
        %1862 = vmatprep.subr.bf16.mxu0 0
        %1863 = vmatpush1.bf16.msra.mxu0 0
        %1864 = vmatprep.subr.bf16.mxu0 0
        %1865 = vmatpush1.bf16.msra.mxu0 0
        %1866 = vmatprep.subr.bf16.mxu0 0
        %1867 = vmatpush1.bf16.msra.mxu0 0
        %1868 = vmatprep.subr.bf16.mxu0 0
        %1869 = vmatpush1.bf16.msra.mxu0 0
        %1870 = vmatprep.subr.bf16.mxu0 0
        %1871 = vmatpush1.bf16.msra.mxu0 0
        %1872 = vmatprep.subr.bf16.mxu0 0
        %1873 = vmatpush1.bf16.msra.mxu0 0
        %1874 = vmatprep.subr.bf16.mxu0 0
        %1875 = vmatpush1.bf16.msra.mxu0 0
        %1876 = vmatprep.subr.bf16.mxu0 0
        %1877 = vmatpush1.bf16.msra.mxu0 0
        %1878 = vmatprep.mubr.bf16.mxu0 0
        %1879 = vmatmul.mubr.bf16.gmra.mrb[0].mxu0 %v1844
        %v1880 = vpop.f32.mrb[0].mxu0
        %v1881 = vadd.f32 %v1828, %v1880
        %v1882 = vpop.f32.mrb[0].mxu0
        %v1883 = vpop.f32.mrb[0].mxu0
        %v1884 = vpop.f32.mrb[0].mxu0
        %1885 = vdwg.mxu0
        %v1886 = vpack.c.bf16 %v1881, %v1881
        %v1888 = vlaneseq
        %v1889 = vshrl.u32 %v1888, 7
        %v1890 = vsub.s32 0, %v1889
        %v1891 = vrot.slane %v1810, %v1890
        %v1897 = vunpack.c.l.b16 %v1806
        %v1898 = vunpack.c.l.b16 %v1807
        %v1899 = vunpack.c.l.b16 %v1808
        %v1900 = vunpack.c.l.b16 %v1809
        %v1901 = vpack.c.b16 %v1898, %v1897
        %v1902 = vpack.c.b16 %v1900, %v1899
        %1905 = vmatprep.subr.bf16.mxu0 0
        %1906 = vmatpush1.bf16.msra.mxu0 %v1901
        %1907 = vmatprep.subr.bf16.mxu0 0
        %1908 = vmatpush1.bf16.msra.mxu0 %v1902
        %1909 = vmatprep.subr.bf16.mxu0 0
        %1910 = vmatpush1.bf16.msra.mxu0 0
        %1911 = vmatprep.subr.bf16.mxu0 0
        %1912 = vmatpush1.bf16.msra.mxu0 0
        %1913 = vmatprep.subr.bf16.mxu0 0
        %1914 = vmatpush1.bf16.msra.mxu0 0
        %1915 = vmatprep.subr.bf16.mxu0 0
        %1916 = vmatpush1.bf16.msra.mxu0 0
        %1917 = vmatprep.subr.bf16.mxu0 0
        %1918 = vmatpush1.bf16.msra.mxu0 0
        %1919 = vmatprep.subr.bf16.mxu0 0
        %1920 = vmatpush1.bf16.msra.mxu0 0
        %1921 = vmatprep.subr.bf16.mxu0 0
        %1922 = vmatpush1.bf16.msra.mxu0 0
        %1923 = vmatprep.subr.bf16.mxu0 0
        %1924 = vmatpush1.bf16.msra.mxu0 0
        %1925 = vmatprep.subr.bf16.mxu0 0
        %1926 = vmatpush1.bf16.msra.mxu0 0
        %1927 = vmatprep.subr.bf16.mxu0 0
        %1928 = vmatpush1.bf16.msra.mxu0 0
        %1929 = vmatprep.subr.bf16.mxu0 0
        %1930 = vmatpush1.bf16.msra.mxu0 0
        %1931 = vmatprep.subr.bf16.mxu0 0
        %1932 = vmatpush1.bf16.msra.mxu0 0
        %1933 = vmatprep.subr.bf16.mxu0 0
        %1934 = vmatpush1.bf16.msra.mxu0 0
        %1935 = vmatprep.subr.bf16.mxu0 0
        %1936 = vmatpush1.bf16.msra.mxu0 0
        %1937 = vmatprep.mubr.bf16.mxu0 0
        %1938 = vmatmul.mubr.bf16.gmra.mrb[0].mxu0 %v1844
        %v1939 = vpop.f32.mrb[0].mxu0
        %v1940 = vadd.f32 %v1891, %v1939
        %v1941 = vpop.f32.mrb[0].mxu0
        %v1942 = vpop.f32.mrb[0].mxu0
        %v1943 = vpop.f32.mrb[0].mxu0
        %1944 = vdwg.mxu0
        %v1945 = vpack.c.bf16 %v1940, %v1940
        %v1947 = vlaneseq
        %v1948 = vshrl.u32 %v1947, 7
        %v1949 = vsub.s32 0, %v1948
        %v1950 = vrot.slane %v1815, %v1949
        %v1956 = vunpack.c.l.b16 %v1811
        %v1957 = vunpack.c.l.b16 %v1812
        %v1958 = vunpack.c.l.b16 %v1813
        %v1959 = vunpack.c.l.b16 %v1814
        %v1960 = vpack.c.b16 %v1957, %v1956
        %v1961 = vpack.c.b16 %v1959, %v1958
        %1964 = vmatprep.subr.bf16.mxu0 0
        %1965 = vmatpush1.bf16.msra.mxu0 %v1960
        %1966 = vmatprep.subr.bf16.mxu0 0
        %1967 = vmatpush1.bf16.msra.mxu0 %v1961
        %1968 = vmatprep.subr.bf16.mxu0 0
        %1969 = vmatpush1.bf16.msra.mxu0 0
        %1970 = vmatprep.subr.bf16.mxu0 0
        %1971 = vmatpush1.bf16.msra.mxu0 0
        %1972 = vmatprep.subr.bf16.mxu0 0
        %1973 = vmatpush1.bf16.msra.mxu0 0
        %1974 = vmatprep.subr.bf16.mxu0 0
        %1975 = vmatpush1.bf16.msra.mxu0 0
        %1976 = vmatprep.subr.bf16.mxu0 0
        %1977 = vmatpush1.bf16.msra.mxu0 0
        %1978 = vmatprep.subr.bf16.mxu0 0
        %1979 = vmatpush1.bf16.msra.mxu0 0
        %1980 = vmatprep.subr.bf16.mxu0 0
        %1981 = vmatpush1.bf16.msra.mxu0 0
        %1982 = vmatprep.subr.bf16.mxu0 0
        %1983 = vmatpush1.bf16.msra.mxu0 0
        %1984 = vmatprep.subr.bf16.mxu0 0
        %1985 = vmatpush1.bf16.msra.mxu0 0
        %1986 = vmatprep.subr.bf16.mxu0 0
        %1987 = vmatpush1.bf16.msra.mxu0 0
        %1988 = vmatprep.subr.bf16.mxu0 0
        %1989 = vmatpush1.bf16.msra.mxu0 0
        %1990 = vmatprep.subr.bf16.mxu0 0
        %1991 = vmatpush1.bf16.msra.mxu0 0
        %1992 = vmatprep.subr.bf16.mxu0 0
        %1993 = vmatpush1.bf16.msra.mxu0 0
        %1994 = vmatprep.subr.bf16.mxu0 0
        %1995 = vmatpush1.bf16.msra.mxu0 0
        %1996 = vmatprep.mubr.bf16.mxu0 0
        %1997 = vmatmul.mubr.bf16.gmra.mrb[0].mxu0 %v1844
        %v1998 = vpop.f32.mrb[0].mxu0
        %v1999 = vadd.f32 %v1950, %v1998
        %v2000 = vpop.f32.mrb[0].mxu0
        %v2001 = vpop.f32.mrb[0].mxu0
        %v2002 = vpop.f32.mrb[0].mxu0
        %2003 = vdwg.mxu0
        %v2004 = vpack.c.bf16 %v1999, %v1999
        %2006 = vrot.lane.b32.xlu0 %v1886, 120
        %v2007 = vpop.permute.xlu0 %2006
        %2008 = vrot.lane.b32.xlu0 %v1886, 112
        %v2009 = vpop.permute.xlu0 %2008
        %2010 = vrot.lane.b32.xlu0 %v1886, 104
        %v2011 = vpop.permute.xlu0 %2010
        %2013 = vrot.lane.b32.xlu0 %v1945, 120
        %v2014 = vpop.permute.xlu0 %2013
        %2015 = vrot.lane.b32.xlu0 %v1945, 112
        %v2016 = vpop.permute.xlu0 %2015
        %2017 = vrot.lane.b32.xlu0 %v1945, 104
        %v2018 = vpop.permute.xlu0 %2017
        %2020 = vrot.lane.b32.xlu0 %v2004, 120
        %v2021 = vpop.permute.xlu0 %2020
        %2022 = vrot.lane.b32.xlu0 %v2004, 112
        %v2023 = vpop.permute.xlu0 %2022
        %2024 = vrot.lane.b32.xlu0 %v2004, 104
        %v2025 = vpop.permute.xlu0 %2024
        %vm2026 = vcmask 64512
        %v2028 = vsel %vm2026, %v1886, 0
        %v2031 = vsel %vm2026, %v1945, 0
        %2033 = vmatprep.subr.bf16.mxu0 0
        %2034 = vmatpush1.bf16.xpose.msra.mxu0 %v2031
        %2035 = vmatprep.subr.bf16.mxu0 0
        %2036 = vmatpush1.bf16.xpose.msra.mxu0 0
        %2037 = vmatprep.subr.bf16.mxu0 0
        %2038 = vmatpush1.bf16.xpose.msra.mxu0 0
        %2039 = vmatprep.subr.bf16.mxu0 0
        %2040 = vmatpush1.bf16.xpose.msra.mxu0 0
        %2041 = vmatprep.subr.bf16.mxu0 0
        %2042 = vmatpush1.bf16.xpose.msra.mxu0 0
        %2043 = vmatprep.subr.bf16.mxu0 0
        %2044 = vmatpush1.bf16.xpose.msra.mxu0 0
        %2045 = vmatprep.subr.bf16.mxu0 0
        %2046 = vmatpush1.bf16.xpose.msra.mxu0 0
        %2047 = vmatprep.subr.bf16.mxu0 0
        %2048 = vmatpush1.bf16.xpose.msra.mxu0 0
        %2049 = vmatprep.subr.bf16.mxu0 0
        %2050 = vmatpush1.bf16.xpose.msra.mxu0 0
        %2051 = vmatprep.subr.bf16.mxu0 0
        %2052 = vmatpush1.bf16.xpose.msra.mxu0 0
        %2053 = vmatprep.subr.bf16.mxu0 0
        %2054 = vmatpush1.bf16.xpose.msra.mxu0 0
        %2055 = vmatprep.subr.bf16.mxu0 0
        %2056 = vmatpush1.bf16.xpose.msra.mxu0 0
        %2057 = vmatprep.subr.bf16.mxu0 0
        %2058 = vmatpush1.bf16.xpose.msra.mxu0 0
        %2059 = vmatprep.subr.bf16.mxu0 0
        %2060 = vmatpush1.bf16.xpose.msra.mxu0 0
        %2061 = vmatprep.subr.bf16.mxu0 0
        %2062 = vmatpush1.bf16.xpose.msra.mxu0 0
        %2063 = vmatprep.subr.bf16.mxu0 0
        %2064 = vmatpush1.bf16.xpose.msra.mxu0 0
        %2065 = vmatprep.mubr.bf16.mxu0 0
        %2066 = vmatmul.mubr.bf16.gmra.mrb[0].mxu0 %v2028
        %v2067 = vpop.f32.mrb[0].mxu0
        %v2068 = vadd.f32 %v1798, %v2067
        %v2069 = vpop.f32.mrb[0].mxu0
        %v2070 = vpop.f32.mrb[0].mxu0
        %v2071 = vpop.f32.mrb[0].mxu0
        %2072 = vdwg.mxu0
        %v2074 = vsel %vm2026, %v2007, 0
        %v2077 = vsel %vm2026, %v2014, 0
        %2079 = vmatprep.subr.bf16.mxu0 0
        %2080 = vmatpush1.bf16.xpose.msra.mxu0 %v2077
        %2081 = vmatprep.subr.bf16.mxu0 0
        %2082 = vmatpush1.bf16.xpose.msra.mxu0 0
        %2083 = vmatprep.subr.bf16.mxu0 0
        %2084 = vmatpush1.bf16.xpose.msra.mxu0 0
        %2085 = vmatprep.subr.bf16.mxu0 0
        %2086 = vmatpush1.bf16.xpose.msra.mxu0 0
        %2087 = vmatprep.subr.bf16.mxu0 0
        %2088 = vmatpush1.bf16.xpose.msra.mxu0 0
        %2089 = vmatprep.subr.bf16.mxu0 0
        %2090 = vmatpush1.bf16.xpose.msra.mxu0 0
        %2091 = vmatprep.subr.bf16.mxu0 0
        %2092 = vmatpush1.bf16.xpose.msra.mxu0 0
        %2093 = vmatprep.subr.bf16.mxu0 0
        %2094 = vmatpush1.bf16.xpose.msra.mxu0 0
        %2095 = vmatprep.subr.bf16.mxu0 0
        %2096 = vmatpush1.bf16.xpose.msra.mxu0 0
        %2097 = vmatprep.subr.bf16.mxu0 0
        %2098 = vmatpush1.bf16.xpose.msra.mxu0 0
        %2099 = vmatprep.subr.bf16.mxu0 0
        %2100 = vmatpush1.bf16.xpose.msra.mxu0 0
        %2101 = vmatprep.subr.bf16.mxu0 0
        %2102 = vmatpush1.bf16.xpose.msra.mxu0 0
        %2103 = vmatprep.subr.bf16.mxu0 0
        %2104 = vmatpush1.bf16.xpose.msra.mxu0 0
        %2105 = vmatprep.subr.bf16.mxu0 0
        %2106 = vmatpush1.bf16.xpose.msra.mxu0 0
        %2107 = vmatprep.subr.bf16.mxu0 0
        %2108 = vmatpush1.bf16.xpose.msra.mxu0 0
        %2109 = vmatprep.subr.bf16.mxu0 0
        %2110 = vmatpush1.bf16.xpose.msra.mxu0 0
        %2111 = vmatprep.mubr.bf16.mxu0 0
        %2112 = vmatmul.mubr.bf16.gmra.mrb[0].mxu0 %v2074
        %v2113 = vpop.f32.mrb[0].mxu0
        %v2114 = vadd.f32 %v1798, %v2113
        %v2115 = vpop.f32.mrb[0].mxu0
        %v2116 = vpop.f32.mrb[0].mxu0
        %v2117 = vpop.f32.mrb[0].mxu0
        %2118 = vdwg.mxu0
        %v2120 = vsel %vm2026, %v2009, 0
        %v2123 = vsel %vm2026, %v2016, 0
        %2125 = vmatprep.subr.bf16.mxu0 0
        %2126 = vmatpush1.bf16.xpose.msra.mxu0 %v2123
        %2127 = vmatprep.subr.bf16.mxu0 0
        %2128 = vmatpush1.bf16.xpose.msra.mxu0 0
        %2129 = vmatprep.subr.bf16.mxu0 0
        %2130 = vmatpush1.bf16.xpose.msra.mxu0 0
        %2131 = vmatprep.subr.bf16.mxu0 0
        %2132 = vmatpush1.bf16.xpose.msra.mxu0 0
        %2133 = vmatprep.subr.bf16.mxu0 0
        %2134 = vmatpush1.bf16.xpose.msra.mxu0 0
        %2135 = vmatprep.subr.bf16.mxu0 0
        %2136 = vmatpush1.bf16.xpose.msra.mxu0 0
        %2137 = vmatprep.subr.bf16.mxu0 0
        %2138 = vmatpush1.bf16.xpose.msra.mxu0 0
        %2139 = vmatprep.subr.bf16.mxu0 0
        %2140 = vmatpush1.bf16.xpose.msra.mxu0 0
        %2141 = vmatprep.subr.bf16.mxu0 0
        %2142 = vmatpush1.bf16.xpose.msra.mxu0 0
        %2143 = vmatprep.subr.bf16.mxu0 0
        %2144 = vmatpush1.bf16.xpose.msra.mxu0 0
        %2145 = vmatprep.subr.bf16.mxu0 0
        %2146 = vmatpush1.bf16.xpose.msra.mxu0 0
        %2147 = vmatprep.subr.bf16.mxu0 0
        %2148 = vmatpush1.bf16.xpose.msra.mxu0 0
        %2149 = vmatprep.subr.bf16.mxu0 0
        %2150 = vmatpush1.bf16.xpose.msra.mxu0 0
        %2151 = vmatprep.subr.bf16.mxu0 0
        %2152 = vmatpush1.bf16.xpose.msra.mxu0 0
        %2153 = vmatprep.subr.bf16.mxu0 0
        %2154 = vmatpush1.bf16.xpose.msra.mxu0 0
        %2155 = vmatprep.subr.bf16.mxu0 0
        %2156 = vmatpush1.bf16.xpose.msra.mxu0 0
        %2157 = vmatprep.mubr.bf16.mxu0 0
        %2158 = vmatmul.mubr.bf16.gmra.mrb[0].mxu0 %v2120
        %v2159 = vpop.f32.mrb[0].mxu0
        %v2160 = vadd.f32 %v1798, %v2159
        %v2161 = vpop.f32.mrb[0].mxu0
        %v2162 = vpop.f32.mrb[0].mxu0
        %v2163 = vpop.f32.mrb[0].mxu0
        %2164 = vdwg.mxu0
        %v2166 = vsel %vm2026, %v2011, 0
        %v2169 = vsel %vm2026, %v2018, 0
        %2171 = vmatprep.subr.bf16.mxu0 0
        %2172 = vmatpush1.bf16.xpose.msra.mxu0 %v2169
        %2173 = vmatprep.subr.bf16.mxu0 0
        %2174 = vmatpush1.bf16.xpose.msra.mxu0 0
        %2175 = vmatprep.subr.bf16.mxu0 0
        %2176 = vmatpush1.bf16.xpose.msra.mxu0 0
        %2177 = vmatprep.subr.bf16.mxu0 0
        %2178 = vmatpush1.bf16.xpose.msra.mxu0 0
        %2179 = vmatprep.subr.bf16.mxu0 0
        %2180 = vmatpush1.bf16.xpose.msra.mxu0 0
        %2181 = vmatprep.subr.bf16.mxu0 0
        %2182 = vmatpush1.bf16.xpose.msra.mxu0 0
        %2183 = vmatprep.subr.bf16.mxu0 0
        %2184 = vmatpush1.bf16.xpose.msra.mxu0 0
        %2185 = vmatprep.subr.bf16.mxu0 0
        %2186 = vmatpush1.bf16.xpose.msra.mxu0 0
        %2187 = vmatprep.subr.bf16.mxu0 0
        %2188 = vmatpush1.bf16.xpose.msra.mxu0 0
        %2189 = vmatprep.subr.bf16.mxu0 0
        %2190 = vmatpush1.bf16.xpose.msra.mxu0 0
        %2191 = vmatprep.subr.bf16.mxu0 0
        %2192 = vmatpush1.bf16.xpose.msra.mxu0 0
        %2193 = vmatprep.subr.bf16.mxu0 0
        %2194 = vmatpush1.bf16.xpose.msra.mxu0 0
        %2195 = vmatprep.subr.bf16.mxu0 0
        %2196 = vmatpush1.bf16.xpose.msra.mxu0 0
        %2197 = vmatprep.subr.bf16.mxu0 0
        %2198 = vmatpush1.bf16.xpose.msra.mxu0 0
        %2199 = vmatprep.subr.bf16.mxu0 0
        %2200 = vmatpush1.bf16.xpose.msra.mxu0 0
        %2201 = vmatprep.subr.bf16.mxu0 0
        %2202 = vmatpush1.bf16.xpose.msra.mxu0 0
        %2203 = vmatprep.mubr.bf16.mxu0 0
        %2204 = vmatmul.mubr.bf16.gmra.mrb[0].mxu0 %v2166
        %v2205 = vpop.f32.mrb[0].mxu0
        %v2206 = vadd.f32 %v1798, %v2205
        %v2207 = vpop.f32.mrb[0].mxu0
        %v2208 = vpop.f32.mrb[0].mxu0
        %v2209 = vpop.f32.mrb[0].mxu0
        %2210 = vdwg.mxu0
        %v2211 = vsel %vm2026, %v2068, -inf
        %2212 = vmax.xlane.f32.xlu0 %v2211
        %v2213 = vpop.xlane.xlu0 %2212
        %v2214 = vsel %vm2026, %v2114, -inf
        %2215 = vmax.xlane.f32.xlu0 %v2214
        %v2216 = vpop.xlane.xlu0 %2215
        %v2217 = vsel %vm2026, %v2160, -inf
        %2218 = vmax.xlane.f32.xlu0 %v2217
        %v2219 = vpop.xlane.xlu0 %2218
        %v2220 = vsel %vm2026, %v2206, -inf
        %2221 = vmax.xlane.f32.xlu0 %v2220
        %v2222 = vpop.xlane.xlu0 %2221
        %v2223 = vsub.f32 %v2068, %v2213
        %v2224 = vsub.f32 %v2114, %v2216
        %v2225 = vsub.f32 %v2160, %v2219
        %v2226 = vsub.f32 %v2206, %v2222
        %v2227 = vmul.f32 %v2223, 1.442695
        %v2228 = vpow.pop %v2227
        %v2229 = vmul.f32 %v2224, 1.442695
        %v2230 = vpow.pop %v2229
        %v2231 = vmul.f32 %v2225, 1.442695
        %v2232 = vpow.pop %v2231
        %v2233 = vmul.f32 %v2226, 1.442695
        %v2234 = vpow.pop %v2233
        %v2235 = vsel %vm2026, %v2228, 0.0
        %2236 = vadd.xlane.f32.xlu0 %v2235
        %v2237 = vpop.xlane.xlu0 %2236
        %v2238 = vsel %vm2026, %v2230, 0.0
        %2239 = vadd.xlane.f32.xlu0 %v2238
        %v2240 = vpop.xlane.xlu0 %2239
        %v2241 = vsel %vm2026, %v2232, 0.0
        %2242 = vadd.xlane.f32.xlu0 %v2241
        %v2243 = vpop.xlane.xlu0 %2242
        %v2244 = vsel %vm2026, %v2234, 0.0
        %2245 = vadd.xlane.f32.xlu0 %v2244
        %v2246 = vpop.xlane.xlu0 %2245
        %v2247 = vpack.c.bf16 %v2228, %v2228
        %v2248 = vpack.c.bf16 %v2230, %v2230
        %v2249 = vpack.c.bf16 %v2232, %v2232
        %v2250 = vpack.c.bf16 %v2234, %v2234
        %v2252 = vsel %vm2026, %v2247, 0
        %vm2254 = vcmask 1043456
        %v2256 = vsel %vm2254, %v2004, 0
        %2258 = vmatprep.subr.bf16.mxu0 0
        %2259 = vmatpush1.bf16.msra.mxu0 %v2256
        %2260 = vmatprep.subr.bf16.mxu0 0
        %2261 = vmatpush1.bf16.msra.mxu0 0
        %2262 = vmatprep.subr.bf16.mxu0 0
        %2263 = vmatpush1.bf16.msra.mxu0 0
        %2264 = vmatprep.subr.bf16.mxu0 0
        %2265 = vmatpush1.bf16.msra.mxu0 0
        %2266 = vmatprep.subr.bf16.mxu0 0
        %2267 = vmatpush1.bf16.msra.mxu0 0
        %2268 = vmatprep.subr.bf16.mxu0 0
        %2269 = vmatpush1.bf16.msra.mxu0 0
        %2270 = vmatprep.subr.bf16.mxu0 0
        %2271 = vmatpush1.bf16.msra.mxu0 0
        %2272 = vmatprep.subr.bf16.mxu0 0
        %2273 = vmatpush1.bf16.msra.mxu0 0
        %2274 = vmatprep.subr.bf16.mxu0 0
        %2275 = vmatpush1.bf16.msra.mxu0 0
        %2276 = vmatprep.subr.bf16.mxu0 0
        %2277 = vmatpush1.bf16.msra.mxu0 0
        %2278 = vmatprep.subr.bf16.mxu0 0
        %2279 = vmatpush1.bf16.msra.mxu0 0
        %2280 = vmatprep.subr.bf16.mxu0 0
        %2281 = vmatpush1.bf16.msra.mxu0 0
        %2282 = vmatprep.subr.bf16.mxu0 0
        %2283 = vmatpush1.bf16.msra.mxu0 0
        %2284 = vmatprep.subr.bf16.mxu0 0
        %2285 = vmatpush1.bf16.msra.mxu0 0
        %2286 = vmatprep.subr.bf16.mxu0 0
        %2287 = vmatpush1.bf16.msra.mxu0 0
        %2288 = vmatprep.subr.bf16.mxu0 0
        %2289 = vmatpush1.bf16.msra.mxu0 0
        %2290 = vmatprep.mubr.bf16.mxu0 0
        %2291 = vmatmul.mubr.bf16.gmra.mrb[0].mxu0 %v2252
        %v2292 = vpop.f32.mrb[0].mxu0
        %v2293 = vadd.f32 0.0, %v2292
        %v2294 = vpop.f32.mrb[0].mxu0
        %v2295 = vpop.f32.mrb[0].mxu0
        %v2296 = vpop.f32.mrb[0].mxu0
        %2297 = vdwg.mxu0
        %v2299 = vsel %vm2026, %v2248, 0
        %v2302 = vsel %vm2254, %v2021, 0
        %2304 = vmatprep.subr.bf16.mxu0 0
        %2305 = vmatpush1.bf16.msra.mxu0 %v2302
        %2306 = vmatprep.subr.bf16.mxu0 0
        %2307 = vmatpush1.bf16.msra.mxu0 0
        %2308 = vmatprep.subr.bf16.mxu0 0
        %2309 = vmatpush1.bf16.msra.mxu0 0
        %2310 = vmatprep.subr.bf16.mxu0 0
        %2311 = vmatpush1.bf16.msra.mxu0 0
        %2312 = vmatprep.subr.bf16.mxu0 0
        %2313 = vmatpush1.bf16.msra.mxu0 0
        %2314 = vmatprep.subr.bf16.mxu0 0
        %2315 = vmatpush1.bf16.msra.mxu0 0
        %2316 = vmatprep.subr.bf16.mxu0 0
        %2317 = vmatpush1.bf16.msra.mxu0 0
        %2318 = vmatprep.subr.bf16.mxu0 0
        %2319 = vmatpush1.bf16.msra.mxu0 0
        %2320 = vmatprep.subr.bf16.mxu0 0
        %2321 = vmatpush1.bf16.msra.mxu0 0
        %2322 = vmatprep.subr.bf16.mxu0 0
        %2323 = vmatpush1.bf16.msra.mxu0 0
        %2324 = vmatprep.subr.bf16.mxu0 0
        %2325 = vmatpush1.bf16.msra.mxu0 0
        %2326 = vmatprep.subr.bf16.mxu0 0
        %2327 = vmatpush1.bf16.msra.mxu0 0
        %2328 = vmatprep.subr.bf16.mxu0 0
        %2329 = vmatpush1.bf16.msra.mxu0 0
        %2330 = vmatprep.subr.bf16.mxu0 0
        %2331 = vmatpush1.bf16.msra.mxu0 0
        %2332 = vmatprep.subr.bf16.mxu0 0
        %2333 = vmatpush1.bf16.msra.mxu0 0
        %2334 = vmatprep.subr.bf16.mxu0 0
        %2335 = vmatpush1.bf16.msra.mxu0 0
        %2336 = vmatprep.mubr.bf16.mxu0 0
        %2337 = vmatmul.mubr.bf16.gmra.mrb[0].mxu0 %v2299
        %v2338 = vpop.f32.mrb[0].mxu0
        %v2339 = vadd.f32 0.0, %v2338
        %v2340 = vpop.f32.mrb[0].mxu0
        %v2341 = vpop.f32.mrb[0].mxu0
        %v2342 = vpop.f32.mrb[0].mxu0
        %2343 = vdwg.mxu0
        %v2345 = vsel %vm2026, %v2249, 0
        %v2348 = vsel %vm2254, %v2023, 0
        %2350 = vmatprep.subr.bf16.mxu0 0
        %2351 = vmatpush1.bf16.msra.mxu0 %v2348
        %2352 = vmatprep.subr.bf16.mxu0 0
        %2353 = vmatpush1.bf16.msra.mxu0 0
        %2354 = vmatprep.subr.bf16.mxu0 0
        %2355 = vmatpush1.bf16.msra.mxu0 0
        %2356 = vmatprep.subr.bf16.mxu0 0
        %2357 = vmatpush1.bf16.msra.mxu0 0
        %2358 = vmatprep.subr.bf16.mxu0 0
        %2359 = vmatpush1.bf16.msra.mxu0 0
        %2360 = vmatprep.subr.bf16.mxu0 0
        %2361 = vmatpush1.bf16.msra.mxu0 0
        %2362 = vmatprep.subr.bf16.mxu0 0
        %2363 = vmatpush1.bf16.msra.mxu0 0
        %2364 = vmatprep.subr.bf16.mxu0 0
        %2365 = vmatpush1.bf16.msra.mxu0 0
        %2366 = vmatprep.subr.bf16.mxu0 0
        %2367 = vmatpush1.bf16.msra.mxu0 0
        %2368 = vmatprep.subr.bf16.mxu0 0
        %2369 = vmatpush1.bf16.msra.mxu0 0
        %2370 = vmatprep.subr.bf16.mxu0 0
        %2371 = vmatpush1.bf16.msra.mxu0 0
        %2372 = vmatprep.subr.bf16.mxu0 0
        %2373 = vmatpush1.bf16.msra.mxu0 0
        %2374 = vmatprep.subr.bf16.mxu0 0
        %2375 = vmatpush1.bf16.msra.mxu0 0
        %2376 = vmatprep.subr.bf16.mxu0 0
        %2377 = vmatpush1.bf16.msra.mxu0 0
        %2378 = vmatprep.subr.bf16.mxu0 0
        %2379 = vmatpush1.bf16.msra.mxu0 0
        %2380 = vmatprep.subr.bf16.mxu0 0
        %2381 = vmatpush1.bf16.msra.mxu0 0
        %2382 = vmatprep.mubr.bf16.mxu0 0
        %2383 = vmatmul.mubr.bf16.gmra.mrb[0].mxu0 %v2345
        %v2384 = vpop.f32.mrb[0].mxu0
        %v2385 = vadd.f32 0.0, %v2384
        %v2386 = vpop.f32.mrb[0].mxu0
        %v2387 = vpop.f32.mrb[0].mxu0
        %v2388 = vpop.f32.mrb[0].mxu0
        %2389 = vdwg.mxu0
        %v2391 = vsel %vm2026, %v2250, 0
        %v2394 = vsel %vm2254, %v2025, 0
        %2396 = vmatprep.subr.bf16.mxu0 0
        %2397 = vmatpush1.bf16.msra.mxu0 %v2394
        %2398 = vmatprep.subr.bf16.mxu0 0
        %2399 = vmatpush1.bf16.msra.mxu0 0
        %2400 = vmatprep.subr.bf16.mxu0 0
        %2401 = vmatpush1.bf16.msra.mxu0 0
        %2402 = vmatprep.subr.bf16.mxu0 0
        %2403 = vmatpush1.bf16.msra.mxu0 0
        %2404 = vmatprep.subr.bf16.mxu0 0
        %2405 = vmatpush1.bf16.msra.mxu0 0
        %2406 = vmatprep.subr.bf16.mxu0 0
        %2407 = vmatpush1.bf16.msra.mxu0 0
        %2408 = vmatprep.subr.bf16.mxu0 0
        %2409 = vmatpush1.bf16.msra.mxu0 0
        %2410 = vmatprep.subr.bf16.mxu0 0
        %2411 = vmatpush1.bf16.msra.mxu0 0
        %2412 = vmatprep.subr.bf16.mxu0 0
        %2413 = vmatpush1.bf16.msra.mxu0 0
        %2414 = vmatprep.subr.bf16.mxu0 0
        %2415 = vmatpush1.bf16.msra.mxu0 0
        %2416 = vmatprep.subr.bf16.mxu0 0
        %2417 = vmatpush1.bf16.msra.mxu0 0
        %2418 = vmatprep.subr.bf16.mxu0 0
        %2419 = vmatpush1.bf16.msra.mxu0 0
        %2420 = vmatprep.subr.bf16.mxu0 0
        %2421 = vmatpush1.bf16.msra.mxu0 0
        %2422 = vmatprep.subr.bf16.mxu0 0
        %2423 = vmatpush1.bf16.msra.mxu0 0
        %2424 = vmatprep.subr.bf16.mxu0 0
        %2425 = vmatpush1.bf16.msra.mxu0 0
        %2426 = vmatprep.subr.bf16.mxu0 0
        %2427 = vmatpush1.bf16.msra.mxu0 0
        %2428 = vmatprep.mubr.bf16.mxu0 0
        %2429 = vmatmul.mubr.bf16.gmra.mrb[0].mxu0 %v2391
        %v2430 = vpop.f32.mrb[0].mxu0
        %v2431 = vadd.f32 0.0, %v2430
        %v2432 = vpop.f32.mrb[0].mxu0
        %v2433 = vpop.f32.mrb[0].mxu0
        %v2434 = vpop.f32.mrb[0].mxu0
        %2435 = vdwg.mxu0
        %v2436 = vrcp.pop %v2237
        %v2437 = vrcp.pop %v2240
        %v2438 = vrcp.pop %v2243
        %v2439 = vrcp.pop %v2246
        %v2440 = vmul.f32 %v2293, %v2436
        %v2441 = vmul.f32 %v2339, %v2437
        %v2442 = vmul.f32 %v2385, %v2438
        %v2443 = vmul.f32 %v2431, %v2439
        %2445 = vrot.lane.b32.xlu0 %v2441, 8
        %v2446 = vpop.permute.xlu0 %2445
        %2449 = vrot.lane.b32.xlu0 %v2442, 16
        %v2450 = vpop.permute.xlu0 %2449
        %2453 = vrot.lane.b32.xlu0 %v2443, 24
        %v2454 = vpop.permute.xlu0 %2453
        %v2456 = vsel %vm2026, %v2440, %v2446
        %vm2457 = vcmask 130048
        %v2458 = vsel %vm2457, %v2456, %v2450
        %vm2459 = vcmask 195584
        %v2460 = vsel %vm2459, %v2458, %v2454
        %v2461 = vpack.c.bf16 %v2460, %v2460
        %v2463 = vlaneseq
        %v2464 = vshrl.u32 %v2463, 7
        %v2465 = vsub.s32 0, %v2464
        %v2466 = vrot.slane %v1820, %v2465
        %v2472 = vunpack.c.l.b16 %v1816
        %v2473 = vunpack.c.l.b16 %v1817
        %v2474 = vunpack.c.l.b16 %v1818
        %v2475 = vunpack.c.l.b16 %v1819
        %v2476 = vpack.c.b16 %v2473, %v2472
        %v2477 = vpack.c.b16 %v2475, %v2474
        %v2481 = vsel %vm1842, %v2461, 0
        %2483 = vmatprep.subr.bf16.mxu0 0
        %2484 = vmatpush1.bf16.msra.mxu0 %v2476
        %2485 = vmatprep.subr.bf16.mxu0 0
        %2486 = vmatpush1.bf16.msra.mxu0 %v2477
        %2487 = vmatprep.subr.bf16.mxu0 0
        %2488 = vmatpush1.bf16.msra.mxu0 0
        %2489 = vmatprep.subr.bf16.mxu0 0
        %2490 = vmatpush1.bf16.msra.mxu0 0
        %2491 = vmatprep.subr.bf16.mxu0 0
        %2492 = vmatpush1.bf16.msra.mxu0 0
        %2493 = vmatprep.subr.bf16.mxu0 0
        %2494 = vmatpush1.bf16.msra.mxu0 0
        %2495 = vmatprep.subr.bf16.mxu0 0
        %2496 = vmatpush1.bf16.msra.mxu0 0
        %2497 = vmatprep.subr.bf16.mxu0 0
        %2498 = vmatpush1.bf16.msra.mxu0 0
        %2499 = vmatprep.subr.bf16.mxu0 0
        %2500 = vmatpush1.bf16.msra.mxu0 0
        %2501 = vmatprep.subr.bf16.mxu0 0
        %2502 = vmatpush1.bf16.msra.mxu0 0
        %2503 = vmatprep.subr.bf16.mxu0 0
        %2504 = vmatpush1.bf16.msra.mxu0 0
        %2505 = vmatprep.subr.bf16.mxu0 0
        %2506 = vmatpush1.bf16.msra.mxu0 0
        %2507 = vmatprep.subr.bf16.mxu0 0
        %2508 = vmatpush1.bf16.msra.mxu0 0
        %2509 = vmatprep.subr.bf16.mxu0 0
        %2510 = vmatpush1.bf16.msra.mxu0 0
        %2511 = vmatprep.subr.bf16.mxu0 0
        %2512 = vmatpush1.bf16.msra.mxu0 0
        %2513 = vmatprep.subr.bf16.mxu0 0
        %2514 = vmatpush1.bf16.msra.mxu0 0
        %2515 = vmatprep.mubr.bf16.mxu0 0
        %2516 = vmatmul.mubr.bf16.gmra.mrb[0].mxu0 %v2481
        %v2517 = vpop.f32.mrb[0].mxu0
        %v2518 = vadd.f32 %v2466, %v2517
        %v2519 = vpop.f32.mrb[0].mxu0
        %v2520 = vpop.f32.mrb[0].mxu0
        %v2521 = vpop.f32.mrb[0].mxu0
        %2522 = vdwg.mxu0
        %v2523 = vadd.f32 %v2518, %v1779
        %v2524 = vsel %vm1842, %v2523, 0.0
        %2525 = vadd.xlane.f32.xlu0 %v2524
        %v2526 = vpop.xlane.xlu0 %2525
        %v2527 = vrcp.pop 32.0
        %v2528 = vmul.f32 %v2526, %v2527
        %v2529 = vsub.f32 %v2523, %v2528
        %v2530 = vmul.f32 %v2529, %v2529
        %v2531 = vsel %vm1842, %v2530, 0.0
        %2532 = vadd.xlane.f32.xlu0 %v2531
        %v2533 = vpop.xlane.xlu0 %2532
        %v2534 = vmul.f32 %v2533, %v2527
        %v2535 = vadd.f32 %v2534, 1e-05
        %v2536 = vrsqrt.pop %v2535
        %v2537 = vmul.f32 %v2529, %v2536
        %v2539 = vlaneseq
        %v2540 = vshrl.u32 %v2539, 7
        %v2541 = vsub.s32 0, %v2540
        %v2542 = vrot.slane %v1821, %v2541
        %v2544 = vmul.f32 %v2537, %v2542
        %v2546 = vlaneseq
        %v2547 = vshrl.u32 %v2546, 7
        %v2548 = vsub.s32 0, %v2547
        %v2549 = vrot.slane %v1822, %v2548
        %v2551 = vadd.f32 %v2544, %v2549
        %2553 = vset.pattern.permute.xlu0 0
        %2554 = vperm.xlu0 %2553, %v1784
        %v2555 = vpop.permute.xlu0 %2554
        %v2557 = vmul.f32 %v2551, %v2555
        %v2558 = vld [vmem:[%s1743] sm:$0xf]
        %v2559 = vld [vmem:[%s1743 + $0x4] sm:$0xf]
        %v2560 = vld [vmem:[%s1743 + $0x8] sm:$0xf]
        %v2561 = vld [vmem:[%s1743 + $0xc] sm:$0xf]
        %v2562 = vld [vmem:[%s1446] sm:$0x1]
        %v2563 = vld [vmem:[%s1748] sm:$0xf]
        %v2564 = vld [vmem:[%s1748 + $0x4] sm:$0xf]
        %v2565 = vld [vmem:[%s1748 + $0x8] sm:$0xf]
        %v2566 = vld [vmem:[%s1748 + $0xc] sm:$0xf]
        %v2567 = vld [vmem:[%s1454] sm:$0x1]
        %v2568 = vld [vmem:[%s1463] sm:$0xf]
        %v2569 = vld [vmem:[%s1463 + $0x4] sm:$0xf]
        %v2570 = vld [vmem:[%s1463 + $0x8] sm:$0xf]
        %v2571 = vld [vmem:[%s1463 + $0xc] sm:$0xf]
        %v2572 = vld [vmem:[%s1471] sm:$0x1]
        %v2573 = vld [vmem:[%s1480] sm:$0xf]
        %v2574 = vld [vmem:[%s1480 + $0x4] sm:$0xf]
        %v2575 = vld [vmem:[%s1480 + $0x8] sm:$0xf]
        %v2576 = vld [vmem:[%s1480 + $0xc] sm:$0xf]
        %v2577 = vld [vmem:[%s1488] sm:$0x1]
        %v2578 = vld [vmem:[%s1496] sm:$0x1]
        %v2579 = vld [vmem:[%s1504] sm:$0x1]
        %v2580 = vpack.c.bf16 %v2557, %v2557
        %v2581 = vpack.c.bf16 %v1781, %v1780
        %v2583 = vlaneseq
        %v2584 = vshrl.u32 %v2583, 7
        %v2585 = vsub.s32 0, %v2584
        %v2586 = vrot.slane %v2562, %v2585
        %v2592 = vunpack.c.l.b16 %v2558
        %v2593 = vunpack.c.l.b16 %v2559
        %v2594 = vunpack.c.l.b16 %v2560
        %v2595 = vunpack.c.l.b16 %v2561
        %v2596 = vpack.c.b16 %v2593, %v2592
        %v2597 = vpack.c.b16 %v2595, %v2594
        %v2601 = vsel %vm1842, %v2580, 0
        %2603 = vmatprep.subr.bf16.mxu0 0
        %2604 = vmatpush1.bf16.msra.mxu0 %v2596
        %2605 = vmatprep.subr.bf16.mxu0 0
        %2606 = vmatpush1.bf16.msra.mxu0 %v2597
        %2607 = vmatprep.subr.bf16.mxu0 0
        %2608 = vmatpush1.bf16.msra.mxu0 0
        %2609 = vmatprep.subr.bf16.mxu0 0
        %2610 = vmatpush1.bf16.msra.mxu0 0
        %2611 = vmatprep.subr.bf16.mxu0 0
        %2612 = vmatpush1.bf16.msra.mxu0 0
        %2613 = vmatprep.subr.bf16.mxu0 0
        %2614 = vmatpush1.bf16.msra.mxu0 0
        %2615 = vmatprep.subr.bf16.mxu0 0
        %2616 = vmatpush1.bf16.msra.mxu0 0
        %2617 = vmatprep.subr.bf16.mxu0 0
        %2618 = vmatpush1.bf16.msra.mxu0 0
        %2619 = vmatprep.subr.bf16.mxu0 0
        %2620 = vmatpush1.bf16.msra.mxu0 0
        %2621 = vmatprep.subr.bf16.mxu0 0
        %2622 = vmatpush1.bf16.msra.mxu0 0
        %2623 = vmatprep.subr.bf16.mxu0 0
        %2624 = vmatpush1.bf16.msra.mxu0 0
        %2625 = vmatprep.subr.bf16.mxu0 0
        %2626 = vmatpush1.bf16.msra.mxu0 0
        %2627 = vmatprep.subr.bf16.mxu0 0
        %2628 = vmatpush1.bf16.msra.mxu0 0
        %2629 = vmatprep.subr.bf16.mxu0 0
        %2630 = vmatpush1.bf16.msra.mxu0 0
        %2631 = vmatprep.subr.bf16.mxu0 0
        %2632 = vmatpush1.bf16.msra.mxu0 0
        %2633 = vmatprep.subr.bf16.mxu0 0
        %2634 = vmatpush1.bf16.msra.mxu0 0
        %2635 = vmatprep.mubr.bf16.mxu0 0
        %2636 = vmatmul.mubr.bf16.gmra.mrb[0].mxu0 %v2601
        %v2637 = vpop.f32.mrb[0].mxu0
        %v2638 = vadd.f32 %v2586, %v2637
        %v2639 = vpop.f32.mrb[0].mxu0
        %v2640 = vpop.f32.mrb[0].mxu0
        %v2641 = vpop.f32.mrb[0].mxu0
        %2642 = vdwg.mxu0
        %v2643 = vpack.c.bf16 %v2638, %v2638
        %v2645 = vlaneseq
        %v2646 = vshrl.u32 %v2645, 7
        %v2647 = vsub.s32 0, %v2646
        %v2648 = vrot.slane %v2567, %v2647
        %v2654 = vunpack.c.l.b16 %v2563
        %v2655 = vunpack.c.l.b16 %v2564
        %v2656 = vunpack.c.l.b16 %v2565
        %v2657 = vunpack.c.l.b16 %v2566
        %v2658 = vpack.c.b16 %v2655, %v2654
        %v2659 = vpack.c.b16 %v2657, %v2656
        %v2663 = vsel %vm1842, %v2581, 0
        %2665 = vmatprep.subr.bf16.mxu0 0
        %2666 = vmatpush1.bf16.msra.mxu0 %v2658
        %2667 = vmatprep.subr.bf16.mxu0 0
        %2668 = vmatpush1.bf16.msra.mxu0 %v2659
        %2669 = vmatprep.subr.bf16.mxu0 0
        %2670 = vmatpush1.bf16.msra.mxu0 0
        %2671 = vmatprep.subr.bf16.mxu0 0
        %2672 = vmatpush1.bf16.msra.mxu0 0
        %2673 = vmatprep.subr.bf16.mxu0 0
        %2674 = vmatpush1.bf16.msra.mxu0 0
        %2675 = vmatprep.subr.bf16.mxu0 0
        %2676 = vmatpush1.bf16.msra.mxu0 0
        %2677 = vmatprep.subr.bf16.mxu0 0
        %2678 = vmatpush1.bf16.msra.mxu0 0
        %2679 = vmatprep.subr.bf16.mxu0 0
        %2680 = vmatpush1.bf16.msra.mxu0 0
        %2681 = vmatprep.subr.bf16.mxu0 0
        %2682 = vmatpush1.bf16.msra.mxu0 0
        %2683 = vmatprep.subr.bf16.mxu0 0
        %2684 = vmatpush1.bf16.msra.mxu0 0
        %2685 = vmatprep.subr.bf16.mxu0 0
        %2686 = vmatpush1.bf16.msra.mxu0 0
        %2687 = vmatprep.subr.bf16.mxu0 0
        %2688 = vmatpush1.bf16.msra.mxu0 0
        %2689 = vmatprep.subr.bf16.mxu0 0
        %2690 = vmatpush1.bf16.msra.mxu0 0
        %2691 = vmatprep.subr.bf16.mxu0 0
        %2692 = vmatpush1.bf16.msra.mxu0 0
        %2693 = vmatprep.subr.bf16.mxu0 0
        %2694 = vmatpush1.bf16.msra.mxu0 0
        %2695 = vmatprep.subr.bf16.mxu0 0
        %2696 = vmatpush1.bf16.msra.mxu0 0
        %2697 = vmatprep.mubr.bf16.mxu0 0
        %2698 = vmatmul.mubr.bf16.gmra.mrb[0].mxu0 %v2663
        %v2699 = vpop.f32.mrb[0].mxu0
        %v2700 = vadd.f32 %v2648, %v2699
        %v2701 = vpop.f32.mrb[0].mxu0
        %v2702 = vpop.f32.mrb[0].mxu0
        %v2703 = vadd.f32 %v2648, %v2702
        %v2704 = vpop.f32.mrb[0].mxu0
        %2705 = vdwg.mxu0
        %v2706 = vpack.c.bf16 %v2703, %v2700
        %v2708 = vlaneseq
        %v2709 = vshrl.u32 %v2708, 7
        %v2710 = vsub.s32 0, %v2709
        %v2711 = vrot.slane %v2572, %v2710
        %v2717 = vunpack.c.l.b16 %v2568
        %v2718 = vunpack.c.l.b16 %v2569
        %v2719 = vunpack.c.l.b16 %v2570
        %v2720 = vunpack.c.l.b16 %v2571
        %v2721 = vpack.c.b16 %v2718, %v2717
        %v2722 = vpack.c.b16 %v2720, %v2719
        %2725 = vmatprep.subr.bf16.mxu0 0
        %2726 = vmatpush1.bf16.msra.mxu0 %v2721
        %2727 = vmatprep.subr.bf16.mxu0 0
        %2728 = vmatpush1.bf16.msra.mxu0 %v2722
        %2729 = vmatprep.subr.bf16.mxu0 0
        %2730 = vmatpush1.bf16.msra.mxu0 0
        %2731 = vmatprep.subr.bf16.mxu0 0
        %2732 = vmatpush1.bf16.msra.mxu0 0
        %2733 = vmatprep.subr.bf16.mxu0 0
        %2734 = vmatpush1.bf16.msra.mxu0 0
        %2735 = vmatprep.subr.bf16.mxu0 0
        %2736 = vmatpush1.bf16.msra.mxu0 0
        %2737 = vmatprep.subr.bf16.mxu0 0
        %2738 = vmatpush1.bf16.msra.mxu0 0
        %2739 = vmatprep.subr.bf16.mxu0 0
        %2740 = vmatpush1.bf16.msra.mxu0 0
        %2741 = vmatprep.subr.bf16.mxu0 0
        %2742 = vmatpush1.bf16.msra.mxu0 0
        %2743 = vmatprep.subr.bf16.mxu0 0
        %2744 = vmatpush1.bf16.msra.mxu0 0
        %2745 = vmatprep.subr.bf16.mxu0 0
        %2746 = vmatpush1.bf16.msra.mxu0 0
        %2747 = vmatprep.subr.bf16.mxu0 0
        %2748 = vmatpush1.bf16.msra.mxu0 0
        %2749 = vmatprep.subr.bf16.mxu0 0
        %2750 = vmatpush1.bf16.msra.mxu0 0
        %2751 = vmatprep.subr.bf16.mxu0 0
        %2752 = vmatpush1.bf16.msra.mxu0 0
        %2753 = vmatprep.subr.bf16.mxu0 0
        %2754 = vmatpush1.bf16.msra.mxu0 0
        %2755 = vmatprep.subr.bf16.mxu0 0
        %2756 = vmatpush1.bf16.msra.mxu0 0
        %2757 = vmatprep.mubr.bf16.mxu0 0
        %2758 = vmatmul.mubr.bf16.gmra.mrb[0].mxu0 %v2663
        %v2759 = vpop.f32.mrb[0].mxu0
        %v2760 = vadd.f32 %v2711, %v2759
        %v2761 = vpop.f32.mrb[0].mxu0
        %v2762 = vpop.f32.mrb[0].mxu0
        %v2763 = vadd.f32 %v2711, %v2762
        %v2764 = vpop.f32.mrb[0].mxu0
        %2765 = vdwg.mxu0
        %v2766 = vpack.c.bf16 %v2763, %v2760
        %2768 = vrot.lane.b32.xlu0 %v2643, 120
        %v2769 = vpop.permute.xlu0 %2768
        %2770 = vrot.lane.b32.xlu0 %v2643, 112
        %v2771 = vpop.permute.xlu0 %2770
        %2772 = vrot.lane.b32.xlu0 %v2643, 104
        %v2773 = vpop.permute.xlu0 %2772
        %2775 = vrot.lane.b32.xlu0 %v2706, 120
        %v2776 = vpop.permute.xlu0 %2775
        %2777 = vrot.lane.b32.xlu0 %v2706, 112
        %v2778 = vpop.permute.xlu0 %2777
        %2779 = vrot.lane.b32.xlu0 %v2706, 104
        %v2780 = vpop.permute.xlu0 %2779
        %2782 = vrot.lane.b32.xlu0 %v2766, 120
        %v2783 = vpop.permute.xlu0 %2782
        %2784 = vrot.lane.b32.xlu0 %v2766, 112
        %v2785 = vpop.permute.xlu0 %2784
        %2786 = vrot.lane.b32.xlu0 %v2766, 104
        %v2787 = vpop.permute.xlu0 %2786
        %v2789 = vlaneseq
        %v2790 = vshrl.u32 %v2789, 7
        %v2791 = vsub.s32 0, %v2790
        %v2792 = vrot.slane %v1800, %v2791
        %v2795 = vsel %vm2026, %v2643, 0
        %v2798 = vsel %vm2026, %v2706, 0
        %2800 = vmatprep.subr.bf16.mxu0 0
        %2801 = vmatpush1.bf16.xpose.msra.mxu0 %v2798
        %2802 = vmatprep.subr.bf16.mxu0 0
        %2803 = vmatpush1.bf16.xpose.msra.mxu0 0
        %2804 = vmatprep.subr.bf16.mxu0 0
        %2805 = vmatpush1.bf16.xpose.msra.mxu0 0
        %2806 = vmatprep.subr.bf16.mxu0 0
        %2807 = vmatpush1.bf16.xpose.msra.mxu0 0
        %2808 = vmatprep.subr.bf16.mxu0 0
        %2809 = vmatpush1.bf16.xpose.msra.mxu0 0
        %2810 = vmatprep.subr.bf16.mxu0 0
        %2811 = vmatpush1.bf16.xpose.msra.mxu0 0
        %2812 = vmatprep.subr.bf16.mxu0 0
        %2813 = vmatpush1.bf16.xpose.msra.mxu0 0
        %2814 = vmatprep.subr.bf16.mxu0 0
        %2815 = vmatpush1.bf16.xpose.msra.mxu0 0
        %2816 = vmatprep.subr.bf16.mxu0 0
        %2817 = vmatpush1.bf16.xpose.msra.mxu0 0
        %2818 = vmatprep.subr.bf16.mxu0 0
        %2819 = vmatpush1.bf16.xpose.msra.mxu0 0
        %2820 = vmatprep.subr.bf16.mxu0 0
        %2821 = vmatpush1.bf16.xpose.msra.mxu0 0
        %2822 = vmatprep.subr.bf16.mxu0 0
        %2823 = vmatpush1.bf16.xpose.msra.mxu0 0
        %2824 = vmatprep.subr.bf16.mxu0 0
        %2825 = vmatpush1.bf16.xpose.msra.mxu0 0
        %2826 = vmatprep.subr.bf16.mxu0 0
        %2827 = vmatpush1.bf16.xpose.msra.mxu0 0
        %2828 = vmatprep.subr.bf16.mxu0 0
        %2829 = vmatpush1.bf16.xpose.msra.mxu0 0
        %2830 = vmatprep.subr.bf16.mxu0 0
        %2831 = vmatpush1.bf16.xpose.msra.mxu0 0
        %2832 = vmatprep.mubr.bf16.mxu0 0
        %2833 = vmatmul.mubr.bf16.gmra.mrb[0].mxu0 %v2795
        %v2834 = vpop.f32.mrb[0].mxu0
        %v2835 = vadd.f32 %v2792, %v2834
        %v2836 = vpop.f32.mrb[0].mxu0
        %v2837 = vpop.f32.mrb[0].mxu0
        %v2838 = vpop.f32.mrb[0].mxu0
        %2839 = vdwg.mxu0
        %v2841 = vsel %vm2026, %v2769, 0
        %v2844 = vsel %vm2026, %v2776, 0
        %2846 = vmatprep.subr.bf16.mxu0 0
        %2847 = vmatpush1.bf16.xpose.msra.mxu0 %v2844
        %2848 = vmatprep.subr.bf16.mxu0 0
        %2849 = vmatpush1.bf16.xpose.msra.mxu0 0
        %2850 = vmatprep.subr.bf16.mxu0 0
        %2851 = vmatpush1.bf16.xpose.msra.mxu0 0
        %2852 = vmatprep.subr.bf16.mxu0 0
        %2853 = vmatpush1.bf16.xpose.msra.mxu0 0
        %2854 = vmatprep.subr.bf16.mxu0 0
        %2855 = vmatpush1.bf16.xpose.msra.mxu0 0
        %2856 = vmatprep.subr.bf16.mxu0 0
        %2857 = vmatpush1.bf16.xpose.msra.mxu0 0
        %2858 = vmatprep.subr.bf16.mxu0 0
        %2859 = vmatpush1.bf16.xpose.msra.mxu0 0
        %2860 = vmatprep.subr.bf16.mxu0 0
        %2861 = vmatpush1.bf16.xpose.msra.mxu0 0
        %2862 = vmatprep.subr.bf16.mxu0 0
        %2863 = vmatpush1.bf16.xpose.msra.mxu0 0
        %2864 = vmatprep.subr.bf16.mxu0 0
        %2865 = vmatpush1.bf16.xpose.msra.mxu0 0
        %2866 = vmatprep.subr.bf16.mxu0 0
        %2867 = vmatpush1.bf16.xpose.msra.mxu0 0
        %2868 = vmatprep.subr.bf16.mxu0 0
        %2869 = vmatpush1.bf16.xpose.msra.mxu0 0
        %2870 = vmatprep.subr.bf16.mxu0 0
        %2871 = vmatpush1.bf16.xpose.msra.mxu0 0
        %2872 = vmatprep.subr.bf16.mxu0 0
        %2873 = vmatpush1.bf16.xpose.msra.mxu0 0
        %2874 = vmatprep.subr.bf16.mxu0 0
        %2875 = vmatpush1.bf16.xpose.msra.mxu0 0
        %2876 = vmatprep.subr.bf16.mxu0 0
        %2877 = vmatpush1.bf16.xpose.msra.mxu0 0
        %2878 = vmatprep.mubr.bf16.mxu0 0
        %2879 = vmatmul.mubr.bf16.gmra.mrb[0].mxu0 %v2841
        %v2880 = vpop.f32.mrb[0].mxu0
        %v2881 = vadd.f32 %v2792, %v2880
        %v2882 = vpop.f32.mrb[0].mxu0
        %v2883 = vpop.f32.mrb[0].mxu0
        %v2884 = vpop.f32.mrb[0].mxu0
        %2885 = vdwg.mxu0
        %v2887 = vsel %vm2026, %v2771, 0
        %v2890 = vsel %vm2026, %v2778, 0
        %2892 = vmatprep.subr.bf16.mxu0 0
        %2893 = vmatpush1.bf16.xpose.msra.mxu0 %v2890
        %2894 = vmatprep.subr.bf16.mxu0 0
        %2895 = vmatpush1.bf16.xpose.msra.mxu0 0
        %2896 = vmatprep.subr.bf16.mxu0 0
        %2897 = vmatpush1.bf16.xpose.msra.mxu0 0
        %2898 = vmatprep.subr.bf16.mxu0 0
        %2899 = vmatpush1.bf16.xpose.msra.mxu0 0
        %2900 = vmatprep.subr.bf16.mxu0 0
        %2901 = vmatpush1.bf16.xpose.msra.mxu0 0
        %2902 = vmatprep.subr.bf16.mxu0 0
        %2903 = vmatpush1.bf16.xpose.msra.mxu0 0
        %2904 = vmatprep.subr.bf16.mxu0 0
        %2905 = vmatpush1.bf16.xpose.msra.mxu0 0
        %2906 = vmatprep.subr.bf16.mxu0 0
        %2907 = vmatpush1.bf16.xpose.msra.mxu0 0
        %2908 = vmatprep.subr.bf16.mxu0 0
        %2909 = vmatpush1.bf16.xpose.msra.mxu0 0
        %2910 = vmatprep.subr.bf16.mxu0 0
        %2911 = vmatpush1.bf16.xpose.msra.mxu0 0
        %2912 = vmatprep.subr.bf16.mxu0 0
        %2913 = vmatpush1.bf16.xpose.msra.mxu0 0
        %2914 = vmatprep.subr.bf16.mxu0 0
        %2915 = vmatpush1.bf16.xpose.msra.mxu0 0
        %2916 = vmatprep.subr.bf16.mxu0 0
        %2917 = vmatpush1.bf16.xpose.msra.mxu0 0
        %2918 = vmatprep.subr.bf16.mxu0 0
        %2919 = vmatpush1.bf16.xpose.msra.mxu0 0
        %2920 = vmatprep.subr.bf16.mxu0 0
        %2921 = vmatpush1.bf16.xpose.msra.mxu0 0
        %2922 = vmatprep.subr.bf16.mxu0 0
        %2923 = vmatpush1.bf16.xpose.msra.mxu0 0
        %2924 = vmatprep.mubr.bf16.mxu0 0
        %2925 = vmatmul.mubr.bf16.gmra.mrb[0].mxu0 %v2887
        %v2926 = vpop.f32.mrb[0].mxu0
        %v2927 = vadd.f32 %v2792, %v2926
        %v2928 = vpop.f32.mrb[0].mxu0
        %v2929 = vpop.f32.mrb[0].mxu0
        %v2930 = vpop.f32.mrb[0].mxu0
        %2931 = vdwg.mxu0
        %v2933 = vsel %vm2026, %v2773, 0
        %v2936 = vsel %vm2026, %v2780, 0
        %2938 = vmatprep.subr.bf16.mxu0 0
        %2939 = vmatpush1.bf16.xpose.msra.mxu0 %v2936
        %2940 = vmatprep.subr.bf16.mxu0 0
        %2941 = vmatpush1.bf16.xpose.msra.mxu0 0
        %2942 = vmatprep.subr.bf16.mxu0 0
        %2943 = vmatpush1.bf16.xpose.msra.mxu0 0
        %2944 = vmatprep.subr.bf16.mxu0 0
        %2945 = vmatpush1.bf16.xpose.msra.mxu0 0
        %2946 = vmatprep.subr.bf16.mxu0 0
        %2947 = vmatpush1.bf16.xpose.msra.mxu0 0
        %2948 = vmatprep.subr.bf16.mxu0 0
        %2949 = vmatpush1.bf16.xpose.msra.mxu0 0
        %2950 = vmatprep.subr.bf16.mxu0 0
        %2951 = vmatpush1.bf16.xpose.msra.mxu0 0
        %2952 = vmatprep.subr.bf16.mxu0 0
        %2953 = vmatpush1.bf16.xpose.msra.mxu0 0
        %2954 = vmatprep.subr.bf16.mxu0 0
        %2955 = vmatpush1.bf16.xpose.msra.mxu0 0
        %2956 = vmatprep.subr.bf16.mxu0 0
        %2957 = vmatpush1.bf16.xpose.msra.mxu0 0
        %2958 = vmatprep.subr.bf16.mxu0 0
        %2959 = vmatpush1.bf16.xpose.msra.mxu0 0
        %2960 = vmatprep.subr.bf16.mxu0 0
        %2961 = vmatpush1.bf16.xpose.msra.mxu0 0
        %2962 = vmatprep.subr.bf16.mxu0 0
        %2963 = vmatpush1.bf16.xpose.msra.mxu0 0
        %2964 = vmatprep.subr.bf16.mxu0 0
        %2965 = vmatpush1.bf16.xpose.msra.mxu0 0
        %2966 = vmatprep.subr.bf16.mxu0 0
        %2967 = vmatpush1.bf16.xpose.msra.mxu0 0
        %2968 = vmatprep.subr.bf16.mxu0 0
        %2969 = vmatpush1.bf16.xpose.msra.mxu0 0
        %2970 = vmatprep.mubr.bf16.mxu0 0
        %2971 = vmatmul.mubr.bf16.gmra.mrb[0].mxu0 %v2933
        %v2972 = vpop.f32.mrb[0].mxu0
        %v2973 = vadd.f32 %v2792, %v2972
        %v2974 = vpop.f32.mrb[0].mxu0
        %v2975 = vpop.f32.mrb[0].mxu0
        %v2976 = vpop.f32.mrb[0].mxu0
        %2977 = vdwg.mxu0
        %vm2978 = vcmask 80896
        %v2979 = vsel %vm2978, %v2835, -inf
        %2980 = vmax.xlane.f32.xlu0 %v2979
        %v2981 = vpop.xlane.xlu0 %2980
        %v2982 = vsel %vm2978, %v2881, -inf
        %2983 = vmax.xlane.f32.xlu0 %v2982
        %v2984 = vpop.xlane.xlu0 %2983
        %v2985 = vsel %vm2978, %v2927, -inf
        %2986 = vmax.xlane.f32.xlu0 %v2985
        %v2987 = vpop.xlane.xlu0 %2986
        %v2988 = vsel %vm2978, %v2973, -inf
        %2989 = vmax.xlane.f32.xlu0 %v2988
        %v2990 = vpop.xlane.xlu0 %2989
        %v2991 = vsub.f32 %v2835, %v2981
        %v2992 = vsub.f32 %v2881, %v2984
        %v2993 = vsub.f32 %v2927, %v2987
        %v2994 = vsub.f32 %v2973, %v2990
        %v2995 = vmul.f32 %v2991, 1.442695
        %v2996 = vpow.pop %v2995
        %v2997 = vmul.f32 %v2992, 1.442695
        %v2998 = vpow.pop %v2997
        %v2999 = vmul.f32 %v2993, 1.442695
        %v3000 = vpow.pop %v2999
        %v3001 = vmul.f32 %v2994, 1.442695
        %v3002 = vpow.pop %v3001
        %v3003 = vsel %vm2978, %v2996, 0.0
        %3004 = vadd.xlane.f32.xlu0 %v3003
        %v3005 = vpop.xlane.xlu0 %3004
        %v3006 = vsel %vm2978, %v2998, 0.0
        %3007 = vadd.xlane.f32.xlu0 %v3006
        %v3008 = vpop.xlane.xlu0 %3007
        %v3009 = vsel %vm2978, %v3000, 0.0
        %3010 = vadd.xlane.f32.xlu0 %v3009
        %v3011 = vpop.xlane.xlu0 %3010
        %v3012 = vsel %vm2978, %v3002, 0.0
        %3013 = vadd.xlane.f32.xlu0 %v3012
        %v3014 = vpop.xlane.xlu0 %3013
        %v3015 = vpack.c.bf16 %v2996, %v2996
        %v3016 = vpack.c.bf16 %v2998, %v2998
        %v3017 = vpack.c.bf16 %v3000, %v3000
        %v3018 = vpack.c.bf16 %v3002, %v3002
        %v3020 = vsel %vm2978, %v3015, 0
        %vm3022 = vcmask 1044480
        %v3024 = vsel %vm3022, %v2766, 0
        %3026 = vmatprep.subr.bf16.mxu0 0
        %3027 = vmatpush1.bf16.msra.mxu0 %v3024
        %3028 = vmatprep.subr.bf16.mxu0 0
        %3029 = vmatpush1.bf16.msra.mxu0 0
        %3030 = vmatprep.subr.bf16.mxu0 0
        %3031 = vmatpush1.bf16.msra.mxu0 0
        %3032 = vmatprep.subr.bf16.mxu0 0
        %3033 = vmatpush1.bf16.msra.mxu0 0
        %3034 = vmatprep.subr.bf16.mxu0 0
        %3035 = vmatpush1.bf16.msra.mxu0 0
        %3036 = vmatprep.subr.bf16.mxu0 0
        %3037 = vmatpush1.bf16.msra.mxu0 0
        %3038 = vmatprep.subr.bf16.mxu0 0
        %3039 = vmatpush1.bf16.msra.mxu0 0
        %3040 = vmatprep.subr.bf16.mxu0 0
        %3041 = vmatpush1.bf16.msra.mxu0 0
        %3042 = vmatprep.subr.bf16.mxu0 0
        %3043 = vmatpush1.bf16.msra.mxu0 0
        %3044 = vmatprep.subr.bf16.mxu0 0
        %3045 = vmatpush1.bf16.msra.mxu0 0
        %3046 = vmatprep.subr.bf16.mxu0 0
        %3047 = vmatpush1.bf16.msra.mxu0 0
        %3048 = vmatprep.subr.bf16.mxu0 0
        %3049 = vmatpush1.bf16.msra.mxu0 0
        %3050 = vmatprep.subr.bf16.mxu0 0
        %3051 = vmatpush1.bf16.msra.mxu0 0
        %3052 = vmatprep.subr.bf16.mxu0 0
        %3053 = vmatpush1.bf16.msra.mxu0 0
        %3054 = vmatprep.subr.bf16.mxu0 0
        %3055 = vmatpush1.bf16.msra.mxu0 0
        %3056 = vmatprep.subr.bf16.mxu0 0
        %3057 = vmatpush1.bf16.msra.mxu0 0
        %3058 = vmatprep.mubr.bf16.mxu0 0
        %3059 = vmatmul.mubr.bf16.gmra.mrb[0].mxu0 %v3020
        %v3060 = vpop.f32.mrb[0].mxu0
        %v3061 = vadd.f32 0.0, %v3060
        %v3062 = vpop.f32.mrb[0].mxu0
        %v3063 = vpop.f32.mrb[0].mxu0
        %v3064 = vpop.f32.mrb[0].mxu0
        %3065 = vdwg.mxu0
        %v3067 = vsel %vm2978, %v3016, 0
        %v3070 = vsel %vm3022, %v2783, 0
        %3072 = vmatprep.subr.bf16.mxu0 0
        %3073 = vmatpush1.bf16.msra.mxu0 %v3070
        %3074 = vmatprep.subr.bf16.mxu0 0
        %3075 = vmatpush1.bf16.msra.mxu0 0
        %3076 = vmatprep.subr.bf16.mxu0 0
        %3077 = vmatpush1.bf16.msra.mxu0 0
        %3078 = vmatprep.subr.bf16.mxu0 0
        %3079 = vmatpush1.bf16.msra.mxu0 0
        %3080 = vmatprep.subr.bf16.mxu0 0
        %3081 = vmatpush1.bf16.msra.mxu0 0
        %3082 = vmatprep.subr.bf16.mxu0 0
        %3083 = vmatpush1.bf16.msra.mxu0 0
        %3084 = vmatprep.subr.bf16.mxu0 0
        %3085 = vmatpush1.bf16.msra.mxu0 0
        %3086 = vmatprep.subr.bf16.mxu0 0
        %3087 = vmatpush1.bf16.msra.mxu0 0
        %3088 = vmatprep.subr.bf16.mxu0 0
        %3089 = vmatpush1.bf16.msra.mxu0 0
        %3090 = vmatprep.subr.bf16.mxu0 0
        %3091 = vmatpush1.bf16.msra.mxu0 0
        %3092 = vmatprep.subr.bf16.mxu0 0
        %3093 = vmatpush1.bf16.msra.mxu0 0
        %3094 = vmatprep.subr.bf16.mxu0 0
        %3095 = vmatpush1.bf16.msra.mxu0 0
        %3096 = vmatprep.subr.bf16.mxu0 0
        %3097 = vmatpush1.bf16.msra.mxu0 0
        %3098 = vmatprep.subr.bf16.mxu0 0
        %3099 = vmatpush1.bf16.msra.mxu0 0
        %3100 = vmatprep.subr.bf16.mxu0 0
        %3101 = vmatpush1.bf16.msra.mxu0 0
        %3102 = vmatprep.subr.bf16.mxu0 0
        %3103 = vmatpush1.bf16.msra.mxu0 0
        %3104 = vmatprep.mubr.bf16.mxu0 0
        %3105 = vmatmul.mubr.bf16.gmra.mrb[0].mxu0 %v3067
        %v3106 = vpop.f32.mrb[0].mxu0
        %v3107 = vadd.f32 0.0, %v3106
        %v3108 = vpop.f32.mrb[0].mxu0
        %v3109 = vpop.f32.mrb[0].mxu0
        %v3110 = vpop.f32.mrb[0].mxu0
        %3111 = vdwg.mxu0
        %v3113 = vsel %vm2978, %v3017, 0
        %v3116 = vsel %vm3022, %v2785, 0
        %3118 = vmatprep.subr.bf16.mxu0 0
        %3119 = vmatpush1.bf16.msra.mxu0 %v3116
        %3120 = vmatprep.subr.bf16.mxu0 0
        %3121 = vmatpush1.bf16.msra.mxu0 0
        %3122 = vmatprep.subr.bf16.mxu0 0
        %3123 = vmatpush1.bf16.msra.mxu0 0
        %3124 = vmatprep.subr.bf16.mxu0 0
        %3125 = vmatpush1.bf16.msra.mxu0 0
        %3126 = vmatprep.subr.bf16.mxu0 0
        %3127 = vmatpush1.bf16.msra.mxu0 0
        %3128 = vmatprep.subr.bf16.mxu0 0
        %3129 = vmatpush1.bf16.msra.mxu0 0
        %3130 = vmatprep.subr.bf16.mxu0 0
        %3131 = vmatpush1.bf16.msra.mxu0 0
        %3132 = vmatprep.subr.bf16.mxu0 0
        %3133 = vmatpush1.bf16.msra.mxu0 0
        %3134 = vmatprep.subr.bf16.mxu0 0
        %3135 = vmatpush1.bf16.msra.mxu0 0
        %3136 = vmatprep.subr.bf16.mxu0 0
        %3137 = vmatpush1.bf16.msra.mxu0 0
        %3138 = vmatprep.subr.bf16.mxu0 0
        %3139 = vmatpush1.bf16.msra.mxu0 0
        %3140 = vmatprep.subr.bf16.mxu0 0
        %3141 = vmatpush1.bf16.msra.mxu0 0
        %3142 = vmatprep.subr.bf16.mxu0 0
        %3143 = vmatpush1.bf16.msra.mxu0 0
        %3144 = vmatprep.subr.bf16.mxu0 0
        %3145 = vmatpush1.bf16.msra.mxu0 0
        %3146 = vmatprep.subr.bf16.mxu0 0
        %3147 = vmatpush1.bf16.msra.mxu0 0
        %3148 = vmatprep.subr.bf16.mxu0 0
        %3149 = vmatpush1.bf16.msra.mxu0 0
        %3150 = vmatprep.mubr.bf16.mxu0 0
        %3151 = vmatmul.mubr.bf16.gmra.mrb[0].mxu0 %v3113
        %v3152 = vpop.f32.mrb[0].mxu0
        %v3153 = vadd.f32 0.0, %v3152
        %v3154 = vpop.f32.mrb[0].mxu0
        %v3155 = vpop.f32.mrb[0].mxu0
        %v3156 = vpop.f32.mrb[0].mxu0
        %3157 = vdwg.mxu0
        %v3159 = vsel %vm2978, %v3018, 0
        %v3162 = vsel %vm3022, %v2787, 0
        %3164 = vmatprep.subr.bf16.mxu0 0
        %3165 = vmatpush1.bf16.msra.mxu0 %v3162
        %3166 = vmatprep.subr.bf16.mxu0 0
        %3167 = vmatpush1.bf16.msra.mxu0 0
        %3168 = vmatprep.subr.bf16.mxu0 0
        %3169 = vmatpush1.bf16.msra.mxu0 0
        %3170 = vmatprep.subr.bf16.mxu0 0
        %3171 = vmatpush1.bf16.msra.mxu0 0
        %3172 = vmatprep.subr.bf16.mxu0 0
        %3173 = vmatpush1.bf16.msra.mxu0 0
        %3174 = vmatprep.subr.bf16.mxu0 0
        %3175 = vmatpush1.bf16.msra.mxu0 0
        %3176 = vmatprep.subr.bf16.mxu0 0
        %3177 = vmatpush1.bf16.msra.mxu0 0
        %3178 = vmatprep.subr.bf16.mxu0 0
        %3179 = vmatpush1.bf16.msra.mxu0 0
        %3180 = vmatprep.subr.bf16.mxu0 0
        %3181 = vmatpush1.bf16.msra.mxu0 0
        %3182 = vmatprep.subr.bf16.mxu0 0
        %3183 = vmatpush1.bf16.msra.mxu0 0
        %3184 = vmatprep.subr.bf16.mxu0 0
        %3185 = vmatpush1.bf16.msra.mxu0 0
        %3186 = vmatprep.subr.bf16.mxu0 0
        %3187 = vmatpush1.bf16.msra.mxu0 0
        %3188 = vmatprep.subr.bf16.mxu0 0
        %3189 = vmatpush1.bf16.msra.mxu0 0
        %3190 = vmatprep.subr.bf16.mxu0 0
        %3191 = vmatpush1.bf16.msra.mxu0 0
        %3192 = vmatprep.subr.bf16.mxu0 0
        %3193 = vmatpush1.bf16.msra.mxu0 0
        %3194 = vmatprep.subr.bf16.mxu0 0
        %3195 = vmatpush1.bf16.msra.mxu0 0
        %3196 = vmatprep.mubr.bf16.mxu0 0
        %3197 = vmatmul.mubr.bf16.gmra.mrb[0].mxu0 %v3159
        %v3198 = vpop.f32.mrb[0].mxu0
        %v3199 = vadd.f32 0.0, %v3198
        %v3200 = vpop.f32.mrb[0].mxu0
        %v3201 = vpop.f32.mrb[0].mxu0
        %v3202 = vpop.f32.mrb[0].mxu0
        %3203 = vdwg.mxu0
        %v3204 = vrcp.pop %v3005
        %v3205 = vrcp.pop %v3008
        %v3206 = vrcp.pop %v3011
        %v3207 = vrcp.pop %v3014
        %v3208 = vmul.f32 %v3061, %v3204
        %v3209 = vmul.f32 %v3107, %v3205
        %v3210 = vmul.f32 %v3153, %v3206
        %v3211 = vmul.f32 %v3199, %v3207
        %3213 = vrot.lane.b32.xlu0 %v3209, 8
        %v3214 = vpop.permute.xlu0 %3213
        %3217 = vrot.lane.b32.xlu0 %v3210, 16
        %v3218 = vpop.permute.xlu0 %3217
        %3221 = vrot.lane.b32.xlu0 %v3211, 24
        %v3222 = vpop.permute.xlu0 %3221
        %v3224 = vsel %vm2026, %v3208, %v3214
        %v3225 = vsel %vm2457, %v3224, %v3218
        %v3226 = vsel %vm2459, %v3225, %v3222
        %v3227 = vpack.c.bf16 %v3226, %v3226
        %v3229 = vlaneseq
        %v3230 = vshrl.u32 %v3229, 7
        %v3231 = vsub.s32 0, %v3230
        %v3232 = vrot.slane %v2577, %v3231
        %v3238 = vunpack.c.l.b16 %v2573
        %v3239 = vunpack.c.l.b16 %v2574
        %v3240 = vunpack.c.l.b16 %v2575
        %v3241 = vunpack.c.l.b16 %v2576
        %v3242 = vpack.c.b16 %v3239, %v3238
        %v3243 = vpack.c.b16 %v3241, %v3240
        %v3247 = vsel %vm1842, %v3227, 0
        %3249 = vmatprep.subr.bf16.mxu0 0
        %3250 = vmatpush1.bf16.msra.mxu0 %v3242
        %3251 = vmatprep.subr.bf16.mxu0 0
        %3252 = vmatpush1.bf16.msra.mxu0 %v3243
        %3253 = vmatprep.subr.bf16.mxu0 0
        %3254 = vmatpush1.bf16.msra.mxu0 0
        %3255 = vmatprep.subr.bf16.mxu0 0
        %3256 = vmatpush1.bf16.msra.mxu0 0
        %3257 = vmatprep.subr.bf16.mxu0 0
        %3258 = vmatpush1.bf16.msra.mxu0 0
        %3259 = vmatprep.subr.bf16.mxu0 0
        %3260 = vmatpush1.bf16.msra.mxu0 0
        %3261 = vmatprep.subr.bf16.mxu0 0
        %3262 = vmatpush1.bf16.msra.mxu0 0
        %3263 = vmatprep.subr.bf16.mxu0 0
        %3264 = vmatpush1.bf16.msra.mxu0 0
        %3265 = vmatprep.subr.bf16.mxu0 0
        %3266 = vmatpush1.bf16.msra.mxu0 0
        %3267 = vmatprep.subr.bf16.mxu0 0
        %3268 = vmatpush1.bf16.msra.mxu0 0
        %3269 = vmatprep.subr.bf16.mxu0 0
        %3270 = vmatpush1.bf16.msra.mxu0 0
        %3271 = vmatprep.subr.bf16.mxu0 0
        %3272 = vmatpush1.bf16.msra.mxu0 0
        %3273 = vmatprep.subr.bf16.mxu0 0
        %3274 = vmatpush1.bf16.msra.mxu0 0
        %3275 = vmatprep.subr.bf16.mxu0 0
        %3276 = vmatpush1.bf16.msra.mxu0 0
        %3277 = vmatprep.subr.bf16.mxu0 0
        %3278 = vmatpush1.bf16.msra.mxu0 0
        %3279 = vmatprep.subr.bf16.mxu0 0
        %3280 = vmatpush1.bf16.msra.mxu0 0
        %3281 = vmatprep.mubr.bf16.mxu0 0
        %3282 = vmatmul.mubr.bf16.gmra.mrb[0].mxu0 %v3247
        %v3283 = vpop.f32.mrb[0].mxu0
        %v3284 = vadd.f32 %v3232, %v3283
        %v3285 = vpop.f32.mrb[0].mxu0
        %v3286 = vpop.f32.mrb[0].mxu0
        %v3287 = vpop.f32.mrb[0].mxu0
        %3288 = vdwg.mxu0
        %v3289 = vadd.f32 %v3284, %v2557
        %v3290 = vsel %vm1842, %v3289, 0.0
        %3291 = vadd.xlane.f32.xlu0 %v3290
        %v3292 = vpop.xlane.xlu0 %3291
        %v3293 = vmul.f32 %v3292, %v2527
        %v3294 = vsub.f32 %v3289, %v3293
        %v3295 = vmul.f32 %v3294, %v3294
        %v3296 = vsel %vm1842, %v3295, 0.0
        %3297 = vadd.xlane.f32.xlu0 %v3296
        %v3298 = vpop.xlane.xlu0 %3297
        %v3299 = vmul.f32 %v3298, %v2527
        %v3300 = vadd.f32 %v3299, 1e-05
        %v3301 = vrsqrt.pop %v3300
        %v3302 = vmul.f32 %v3294, %v3301
        %v3304 = vlaneseq
        %v3305 = vshrl.u32 %v3304, 7
        %v3306 = vsub.s32 0, %v3305
        %v3307 = vrot.slane %v2578, %v3306
        %v3309 = vmul.f32 %v3302, %v3307
        %v3311 = vlaneseq
        %v3312 = vshrl.u32 %v3311, 7
        %v3313 = vsub.s32 0, %v3312
        %v3314 = vrot.slane %v2579, %v3313
        %v3316 = vadd.f32 %v3309, %v3314
        %v3317 = vmul.f32 %v3316, %v2555
        %v3318 = vld [vmem:[%s1753] sm:$0xf]
        %v3319 = vld [vmem:[%s1753 + $0x4] sm:$0xf]
        %v3320 = vld [vmem:[%s1753 + $0x8] sm:$0xf]
        %v3321 = vld [vmem:[%s1753 + $0xc] sm:$0xf]
        %v3322 = vld [vmem:[%s1756] sm:$0x1]
        %v3323 = vld [vmem:[%s1761] sm:$0xf]
        %v3324 = vld [vmem:[%s1761 + $0x4] sm:$0xf]
        %v3325 = vld [vmem:[%s1761 + $0x8] sm:$0xf]
        %v3326 = vld [vmem:[%s1761 + $0xc] sm:$0xf]
        %v3327 = vld [vmem:[%s1761 + $0x10] sm:$0xf]
        %v3328 = vld [vmem:[%s1761 + $0x14] sm:$0xf]
        %v3329 = vld [vmem:[%s1761 + $0x18] sm:$0xf]
        %v3330 = vld [vmem:[%s1761 + $0x1c] sm:$0xf]
        %v3331 = vld [vmem:[%s1764] sm:$0x1]
        %v3332 = vld [vmem:[%s1767] sm:$0x1]
        %v3333 = vld [vmem:[%s1770] sm:$0x1]
        %v3334 = vpack.c.bf16 %v3317, %v3317
        %v3336 = vlaneseq
        %v3337 = vshrl.u32 %v3336, 7
        %v3338 = vsub.s32 0, %v3337
        %v3339 = vrot.slane %v3322, %v3338
        %v3345 = vunpack.c.l.b16 %v3318
        %v3346 = vunpack.c.l.b16 %v3319
        %v3347 = vunpack.c.l.b16 %v3320
        %v3348 = vunpack.c.l.b16 %v3321
        %v3349 = vpack.c.b16 %v3346, %v3345
        %v3350 = vpack.c.b16 %v3348, %v3347
        %v3354 = vsel %vm1842, %v3334, 0
        %3356 = vmatprep.subr.bf16.mxu0 0
        %3357 = vmatpush1.bf16.msra.mxu0 %v3349
        %3358 = vmatprep.subr.bf16.mxu0 0
        %3359 = vmatpush1.bf16.msra.mxu0 %v3350
        %3360 = vmatprep.subr.bf16.mxu0 0
        %3361 = vmatpush1.bf16.msra.mxu0 0
        %3362 = vmatprep.subr.bf16.mxu0 0
        %3363 = vmatpush1.bf16.msra.mxu0 0
        %3364 = vmatprep.subr.bf16.mxu0 0
        %3365 = vmatpush1.bf16.msra.mxu0 0
        %3366 = vmatprep.subr.bf16.mxu0 0
        %3367 = vmatpush1.bf16.msra.mxu0 0
        %3368 = vmatprep.subr.bf16.mxu0 0
        %3369 = vmatpush1.bf16.msra.mxu0 0
        %3370 = vmatprep.subr.bf16.mxu0 0
        %3371 = vmatpush1.bf16.msra.mxu0 0
        %3372 = vmatprep.subr.bf16.mxu0 0
        %3373 = vmatpush1.bf16.msra.mxu0 0
        %3374 = vmatprep.subr.bf16.mxu0 0
        %3375 = vmatpush1.bf16.msra.mxu0 0
        %3376 = vmatprep.subr.bf16.mxu0 0
        %3377 = vmatpush1.bf16.msra.mxu0 0
        %3378 = vmatprep.subr.bf16.mxu0 0
        %3379 = vmatpush1.bf16.msra.mxu0 0
        %3380 = vmatprep.subr.bf16.mxu0 0
        %3381 = vmatpush1.bf16.msra.mxu0 0
        %3382 = vmatprep.subr.bf16.mxu0 0
        %3383 = vmatpush1.bf16.msra.mxu0 0
        %3384 = vmatprep.subr.bf16.mxu0 0
        %3385 = vmatpush1.bf16.msra.mxu0 0
        %3386 = vmatprep.subr.bf16.mxu0 0
        %3387 = vmatpush1.bf16.msra.mxu0 0
        %3388 = vmatprep.mubr.bf16.mxu0 0
        %3389 = vmatmul.mubr.bf16.gmra.mrb[0].mxu0 %v3354
        %v3390 = vpop.f32.mrb[0].mxu0
        %v3391 = vadd.f32 %v3339, %v3390
        %v3392 = vpop.f32.mrb[0].mxu0
        %v3393 = vpop.f32.mrb[0].mxu0
        %v3394 = vpop.f32.mrb[0].mxu0
        %3395 = vdwg.mxu0
        %v3396 = vmax.f32 %v3391, 0.0
        %v3397 = vpack.c.bf16 %v3396, %v3396
        %v3399 = vlaneseq
        %v3400 = vshrl.u32 %v3399, 7
        %v3401 = vsub.s32 0, %v3400
        %v3402 = vrot.slane %v3331, %v3401
        %v3412 = vunpack.c.l.b16 %v3323
        %v3413 = vunpack.c.l.b16 %v3324
        %v3414 = vunpack.c.l.b16 %v3325
        %v3415 = vunpack.c.l.b16 %v3326
        %v3416 = vunpack.c.l.b16 %v3327
        %v3417 = vunpack.c.l.b16 %v3328
        %v3418 = vunpack.c.l.b16 %v3329
        %v3419 = vunpack.c.l.b16 %v3330
        %v3420 = vpack.c.b16 %v3413, %v3412
        %v3421 = vpack.c.b16 %v3415, %v3414
        %v3422 = vpack.c.b16 %v3417, %v3416
        %v3423 = vpack.c.b16 %v3419, %v3418
        %vm3428 = vcmask 523264
        %v3430 = vsel %vm3428, %v3397, 0
        %3432 = vmatprep.subr.bf16.mxu0 0
        %3433 = vmatpush1.bf16.msra.mxu0 %v3420
        %3434 = vmatprep.subr.bf16.mxu0 0
        %3435 = vmatpush1.bf16.msra.mxu0 %v3421
        %3436 = vmatprep.subr.bf16.mxu0 0
        %3437 = vmatpush1.bf16.msra.mxu0 %v3422
        %3438 = vmatprep.subr.bf16.mxu0 0
        %3439 = vmatpush1.bf16.msra.mxu0 %v3423
        %3440 = vmatprep.subr.bf16.mxu0 0
        %3441 = vmatpush1.bf16.msra.mxu0 0
        %3442 = vmatprep.subr.bf16.mxu0 0
        %3443 = vmatpush1.bf16.msra.mxu0 0
        %3444 = vmatprep.subr.bf16.mxu0 0
        %3445 = vmatpush1.bf16.msra.mxu0 0
        %3446 = vmatprep.subr.bf16.mxu0 0
        %3447 = vmatpush1.bf16.msra.mxu0 0
        %3448 = vmatprep.subr.bf16.mxu0 0
        %3449 = vmatpush1.bf16.msra.mxu0 0
        %3450 = vmatprep.subr.bf16.mxu0 0
        %3451 = vmatpush1.bf16.msra.mxu0 0
        %3452 = vmatprep.subr.bf16.mxu0 0
        %3453 = vmatpush1.bf16.msra.mxu0 0
        %3454 = vmatprep.subr.bf16.mxu0 0
        %3455 = vmatpush1.bf16.msra.mxu0 0
        %3456 = vmatprep.subr.bf16.mxu0 0
        %3457 = vmatpush1.bf16.msra.mxu0 0
        %3458 = vmatprep.subr.bf16.mxu0 0
        %3459 = vmatpush1.bf16.msra.mxu0 0
        %3460 = vmatprep.subr.bf16.mxu0 0
        %3461 = vmatpush1.bf16.msra.mxu0 0
        %3462 = vmatprep.subr.bf16.mxu0 0
        %3463 = vmatpush1.bf16.msra.mxu0 0
        %3464 = vmatprep.mubr.bf16.mxu0 0
        %3465 = vmatmul.mubr.bf16.gmra.mrb[0].mxu0 %v3430
        %v3466 = vpop.f32.mrb[0].mxu0
        %v3467 = vadd.f32 %v3402, %v3466
        %v3468 = vpop.f32.mrb[0].mxu0
        %v3469 = vpop.f32.mrb[0].mxu0
        %v3470 = vpop.f32.mrb[0].mxu0
        %3471 = vdwg.mxu0
        %v3472 = vadd.f32 %v3467, %v3317
        %v3473 = vsel %vm1842, %v3472, 0.0
        %3474 = vadd.xlane.f32.xlu0 %v3473
        %v3475 = vpop.xlane.xlu0 %3474
        %v3476 = vmul.f32 %v3475, %v2527
        %v3477 = vsub.f32 %v3472, %v3476
        %v3478 = vmul.f32 %v3477, %v3477
        %v3479 = vsel %vm1842, %v3478, 0.0
        %3480 = vadd.xlane.f32.xlu0 %v3479
        %v3481 = vpop.xlane.xlu0 %3480
        %v3482 = vmul.f32 %v3481, %v2527
        %v3483 = vadd.f32 %v3482, 1e-05
        %v3484 = vrsqrt.pop %v3483
        %v3485 = vmul.f32 %v3477, %v3484
        %v3487 = vlaneseq
        %v3488 = vshrl.u32 %v3487, 7
        %v3489 = vsub.s32 0, %v3488
        %v3490 = vrot.slane %v3332, %v3489
        %v3492 = vmul.f32 %v3485, %v3490
        %v3494 = vlaneseq
        %v3495 = vshrl.u32 %v3494, 7
        %v3496 = vsub.s32 0, %v3495
        %v3497 = vrot.slane %v3333, %v3496
        %v3499 = vadd.f32 %v3492, %v3497
        %v3500 = vmul.f32 %v3499, %v2555
        %3501 = vst.msk [vmem:[#allocation2] sm:$0xff] %vm1842, %v3500
        %p3502 = scmp.eq.s32.totalorder %s109, 1
        // Predicated region
        $region217: #{tpu_custom_call.1} parent=143 // pred_check
          %p3503 = pneg %p3502
        $region218: #{tpu_custom_call.1} parent=143 // pred_check_branch
          %3505 = sbr.rel (%p3503) target = $region220
        $region219: #{tpu_custom_call.1} parent=143 // pred_region
          %3506 = vst.msk [vmem:[%s1709] sm:$0xff] %vm1842, %v3500
        $region220: #{tpu_custom_call.1} parent=143 // pred_fallthru
          _
        %s3507 = sand.u32 %s930, 1
        %s3508 = scalar_lea.sflag [#allocation5], %s3507
        %s3509 = sand.u32 %s930, 1
        %s3510 = smul.addr %s3509, 8
        %s3511 = scalar_lea.vmem [#allocation30], %s3510
        // Predicated region
        $region221: #{tpu_custom_call.1} parent=143 // pred_check
          %p3512 = pneg %p940
        $region222: #{tpu_custom_call.1} parent=143 // pred_check_branch
          %3514 = sbr.rel (%p3512) target = $region224
        $region223: #{tpu_custom_call.1} parent=143 // pred_region
          %s3516 = ssub.s32 128, 128
          %3517 = vsyncadd %s3508, %s3516
          %s3518 = smul.addr %s108, 128
          %s3519 = scalar_lea.hbm %s63, %s3518
          %s3521 = sshll.u32 %s3511, 4
          %s3522 = int_to_ptr.vmem [resolvable:$true] %s3521
          %3524 = dma.vmem_to_hbm [thread:$0]  %s3522, 128, %s3519, %s3508
        $region224: #{tpu_custom_call.1} parent=143 // pred_fallthru
          _
      $region144: #{tpu_custom_call.1} parent=5 // pred_fallthru
        _
      %p3525 = scmp.le.s32.totalorder 2, %s99
      // Predicated region
      $region225: #{tpu_custom_call.1} parent=5 // pred_check
        %p3526 = pneg %p3525
      $region226: #{tpu_custom_call.1} parent=5 // pred_check_branch
        %3528 = sbr.rel (%p3526) target = $region228
      $region227: #{tpu_custom_call.1} parent=5 // pred_region
        %s3529 = ssub.s32 %s99, 2
        // Predicated region
        $region229: #{tpu_custom_call.1} parent=227 // pred_check
          %p3530 = pneg %p946
        $region230: #{tpu_custom_call.1} parent=227 // pred_check_branch
          %3532 = sbr.rel (%p3530) target = $region232
        $region231: #{tpu_custom_call.1} parent=227 // pred_region
          %s3533 = sand.u32 %s931, 1
          %s3534 = scalar_lea.sflag [#allocation5], %s3533
          %s3535 = sand.u32 %s931, 1
          %s3536 = smul.addr %s3535, 8
          %s3537 = scalar_lea.vmem [#allocation30], %s3536
          %3538 = dma.done %s3534, 128
        $region232: #{tpu_custom_call.1} parent=227 // pred_fallthru
          _
      $region228: #{tpu_custom_call.1} parent=5 // pred_fallthru
        _
    $region6: #{tpu_custom_call.1} parent=1 // loop_footer
      %s103 = sadd.s32 1, %s99
    $region7: #{tpu_custom_call.1} parent=1 // loop_footer_branch
      %98 = sbr.rel target = $region3
    $region8: #{tpu_custom_call.1} parent=1 // loop_exit
      _
    %3539 = vsyncpa [#allocation4], 1
    %s3540 = scalar_lea.sflag [#allocation4], 1
    %3541 = vsyncpa %s3540, 1
    %3542 = vsyncpa [#allocation7], 1
    %s3543 = scalar_lea.sflag [#allocation7], 1
    %3544 = vsyncpa %s3543, 1
    %3545 = vsyncpa [#allocation10], 1
    %s3546 = scalar_lea.sflag [#allocation10], 1
    %3547 = vsyncpa %s3546, 1
    %3548 = vsyncpa [#allocation13], 1
    %s3549 = scalar_lea.sflag [#allocation13], 1
    %3550 = vsyncpa %s3549, 1
    %3551 = vsyncpa [#allocation16], 1
    %s3552 = scalar_lea.sflag [#allocation16], 1
    %3553 = vsyncpa %s3552, 1
    %3554 = vsyncpa [#allocation19], 1
    %s3555 = scalar_lea.sflag [#allocation19], 1
    %3556 = vsyncpa %s3555, 1
    %3557 = vsyncpa [#allocation22], 1
    %s3558 = scalar_lea.sflag [#allocation22], 1
    %3559 = vsyncpa %s3558, 1
    %3560 = vsyncpa [#allocation25], 1
    %s3561 = scalar_lea.sflag [#allocation25], 1
    %3562 = vsyncpa %s3561, 1
    %3563 = vsyncpa [#allocation28], 1
    %s3564 = scalar_lea.sflag [#allocation28], 1
    %3565 = vsyncpa %s3564, 1
    %3566 = vsyncpa [#allocation5], 1
    %s3567 = scalar_lea.sflag [#allocation5], 1
    %3568 = vsyncpa %s3567, 1

</llo_original>
